<compile_context>
chip_gen: v7x
topology: tpu7x:2x2x1
jax: 0.10.0
libtpu: 0.0.40
codegen_flags: <defaults>
</compile_context>

<pallas_src>
import jax
import jax.numpy as jnp
from jax import lax
from jax.experimental import pallas as pl
from jax.experimental.pallas import tpu as pltpu


def conv_block_nested_kernel(x_ref, w1b_ref, w2b_ref, b1_ref, s1_ref, t1_ref,
                             s2_ref, t2_ref, wd1_ref, bd1_ref, wd2_ref, bd2_ref,
                             o_ref, s1_scr, s2_scr, id_scr):
    Bb, H, _ = x_ref.shape
    Hp = H + 2
    M = Bb * Hp - 2                  # matmul rows (incl. 2 junk rows per image boundary)
    WCin = s1_scr.shape[1]
    WCm = s2_scr.shape[1]

    zin = jnp.zeros((1, WCin), s1_scr.dtype)
    zmid = jnp.zeros((1, WCm), s2_scr.dtype)

    # Stage the raw f32 input into the batch-folded, vertically padded bf16
    # scratch and zero the border rows of both padded scratches.  Bb is a
    # compile-time block size, so this Python loop unrolls with static offsets.
    for b in range(Bb):
        r0 = b * Hp
        s1_scr[r0:r0 + 1, :] = zin
        s1_scr[r0 + 1:r0 + 1 + H, :] = x_ref[b].astype(s1_scr.dtype)
        s1_scr[r0 + H + 1:r0 + H + 2, :] = zin
        s2_scr[r0:r0 + 1, :] = zmid
        s2_scr[r0 + H + 1:r0 + H + 2, :] = zmid

    # ---- conv1: 3 banded matmuls over all Bb folded images at once ----
    acc1 = jnp.dot(s1_scr[0:M, :], w1b_ref[0], preferred_element_type=jnp.float32)
    acc1 = acc1 + jnp.dot(s1_scr[1:M + 1, :], w1b_ref[1],
                          preferred_element_type=jnp.float32)
    acc1 = acc1 + jnp.dot(s1_scr[2:M + 2, :], w1b_ref[2],
                          preferred_element_type=jnp.float32)
    acc1 = acc1 + b1_ref[...]                    # (1, W*Cmid) broadcast over rows

    # identity = conv1 + b1 (pre-BN), pinned in VMEM scratch so its live range
    # doesn't span the conv2 matmuls in registers.
    id_scr[...] = acc1

    # ---- bn1 (folded eval-mode scale/shift) + ReLU ----
    h = jnp.maximum(acc1 * s1_ref[...] + t1_ref[...], 0.0)
    for b in range(Bb):
        r0 = b * Hp
        s2_scr[r0 + 1:r0 + 1 + H, :] = h[r0:r0 + H, :].astype(s2_scr.dtype)

    # ---- conv2: 3 banded matmuls ----
    acc2 = jnp.dot(s2_scr[0:M, :], w2b_ref[0], preferred_element_type=jnp.float32)
    acc2 = acc2 + jnp.dot(s2_scr[1:M + 1, :], w2b_ref[1],
                          preferred_element_type=jnp.float32)
    acc2 = acc2 + jnp.dot(s2_scr[2:M + 2, :], w2b_ref[2],
                          preferred_element_type=jnp.float32)

    # ---- bn2 (folded; conv2 bias already folded into the shift) ----
    z = acc2 * s2_ref[...] + t2_ref[...]

    # ---- per-image SE gate + residual + final ReLU ----
    # The SE path is tiny and sits on the serial epilogue, so it stays off the
    # MXU: column sum (XLU), broadcast multiply + lane reduce for the squeeze,
    # broadcast multiply + sublane reduce for the excite.  1/(H*W) is folded
    # into wd1 in the wrapper.
    for b in range(Bb):
        r0 = b * Hp
        z_b = z[r0:r0 + H, :]                                    # valid rows only
        colsum = jnp.sum(z_b, axis=0, keepdims=True)             # (1, W*Cout)
        a = jnp.maximum(
            jnp.sum(colsum * wd1_ref[...], axis=1, keepdims=True) + bd1_ref[...],
            0.0)                                                 # (Cr, 1)
        g = jax.nn.sigmoid(
            jnp.sum(a * wd2_ref[...], axis=0, keepdims=True) + bd2_ref[...])
                                                                 # (1, W*Cout)
        o_ref[b] = jnp.maximum(z_b * g + id_scr[r0:r0 + H, :],
                               0.0).astype(o_ref.dtype)


def _banded_conv_weights(w_hwio, width):
    """Fold the kx taps + horizontal SAME zero-padding of a 3x3 conv into
    3 banded matrices (one per ky) of shape (W*Cin, W*Cout), so that
      out[y, xo*Cout:(xo+1)*Cout] = sum_ky rows_ky[y, :] @ B[ky]
    where rows_ky are the vertically padded, lane-flattened input rows."""
    _, _, cin, cout = w_hwio.shape
    xin = jnp.arange(width)[:, None]
    xout = jnp.arange(width)[None, :]
    kx = xin - xout + 1                               # (W, W)
    valid = (kx >= 0) & (kx <= 2)
    kx_c = jnp.clip(kx, 0, 2)
    bands = []
    for ky in range(3):
        b = w_hwio[ky][kx_c]                          # (W, W, Cin, Cout)
        b = jnp.where(valid[:, :, None, None], b, 0.0)
        b = jnp.transpose(b, (0, 2, 1, 3)).reshape(width * cin, width * cout)
        bands.append(b)
    return jnp.stack(bands, axis=0)                   # (3, W*Cin, W*Cout)


def _pick_batch_block(n, h):
    """Largest divisor of n whose folded row count targets ~256 MXU rows."""
    want = max(1, 256 // (h + 2))
    best = 1
    for b in range(1, n + 1):
        if n % b == 0 and b <= want:
            best = b
    return best


def conv_block_nested(x_nhwc, p, block_n=None):
    N, H, W, Cin = x_nhwc.shape
    Cmid = p["w1"].shape[3]
    Cout = p["w2"].shape[3]
    Cr = p["wd1"].shape[1]
    assert Cmid == Cout, "residual add requires mid_ch == out_ch (as in SNUNet)"

    Bb = _pick_batch_block(N, H) if block_n is None else block_n
    assert N % Bb == 0
    Hp = H + 2
    Mrows = Bb * Hp

    # Raw, unpadded f32 input; (N, H, W, Cin) -> (N, H, W*Cin) is a free
    # trailing-dim merge.  Padding + bf16 cast happen in-kernel (no extra
    # whole-input HBM round trip in XLA).
    x2d = x_nhwc.reshape(N, H, W * Cin)

    w1b = _banded_conv_weights(p["w1"], W).astype(jnp.bfloat16)
    w2b = _banded_conv_weights(p["w2"], W).astype(jnp.bfloat16)

    # Per-channel vectors tiled to lane-dense (., W*C) rows.
    b1_t = jnp.tile(p["b1"], (1, W))
    s1_t = jnp.tile(p["s1"], (1, W))
    t1_t = jnp.tile(p["t1"], (1, W))
    s2_t = jnp.tile(p["s2"], (1, W))
    # conv2 bias folded into the bn2 shift:  t2' = b2*s2 + t2.
    t2_t = jnp.tile(p["b2"] * p["s2"] + p["t2"], (1, W))

    # SE 1x1 convs laid out for the VPU path: wd1^T tiled over x (1/(H*W)
    # folded in) so one lane-reduce gives the squeeze; wd2/bd2 tiled so the
    # gate comes out lane-dense.
    wd1r = jnp.tile(p["wd1"].T, (1, W)) * (1.0 / (H * W))   # (Cr, W*Cout)
    bd1c = p["bd1"].T                                       # (Cr, 1)
    wd2_t = jnp.tile(p["wd2"], (1, W))                      # (Cr, W*Cout)
    bd2_t = jnp.tile(p["bd2"], (1, W))                      # (1, W*Cout)

    # VMEM budget (conservative: constants counted as if double-buffered).
    vmem_bytes = (
        2 * Bb * H * W * Cin * 4             # input block (f32, double-buffered)
        + 2 * Bb * H * W * Cout * 2          # output block (bf16, double-buffered)
        + 2 * 3 * W * Cin * W * Cmid * 2     # conv1 band weights (bf16)
        + 2 * 3 * W * Cmid * W * Cout * 2    # conv2 band weights (bf16)
        + Mrows * W * Cin * 2                # padded input scratch (bf16)
        + Mrows * W * Cmid * 2               # padded mid-activation scratch (bf16)
        + (Mrows - 2) * W * Cout * 4         # identity scratch (f32)
        + 4 * Mrows * W * Cout * 4           # acc / h / z value live ranges
    )
    try:
        vmem_cap = int(pltpu.get_tpu_info().vmem_capacity_bytes)
    except Exception:
        vmem_cap = 64 << 20                  # v7x lower bound (safe everywhere)
    vmem_limit = int(max(min(vmem_bytes + (4 << 20),
                             vmem_cap - (8 << 20),     # leave compiler headroom
                             100 << 20),
                         16 << 20))

    def run(single_buffer_consts):
        def const_spec(shape):
            index_map = lambda i: (0,) * len(shape)
            if single_buffer_consts:
                # Grid-invariant operands: no need for double buffers.
                return pl.BlockSpec(shape, index_map,
                                    pipeline_mode=pl.Buffered(1))
            return pl.BlockSpec(shape, index_map)

        in_specs = [
            pl.BlockSpec((Bb, H, W * Cin), lambda i: (i, 0, 0)),
            const_spec((3, W * Cin, W * Cmid)),
            const_spec((3, W * Cmid, W * Cout)),
            const_spec((1, W * Cmid)), const_spec((1, W * Cmid)),
            const_spec((1, W * Cmid)),
            const_spec((1, W * Cout)), const_spec((1, W * Cout)),
            const_spec((Cr, W * Cout)), const_spec((Cr, 1)),
            const_spec((Cr, W * Cout)), const_spec((1, W * Cout)),
        ]

        out2d = pl.pallas_call(
            conv_block_nested_kernel,
            out_shape=jax.ShapeDtypeStruct((N, H, W * Cout), jnp.bfloat16),
            grid_spec=pltpu.PrefetchScalarGridSpec(
                num_scalar_prefetch=0,
                grid=(N // Bb,),
                in_specs=in_specs,
                out_specs=pl.BlockSpec((Bb, H, W * Cout), lambda i: (i, 0, 0)),
                scratch_shapes=[
                    pltpu.VMEM((Mrows, W * Cin), jnp.bfloat16),     # padded input
                    pltpu.VMEM((Mrows, W * Cmid), jnp.bfloat16),    # padded conv1 act
                    pltpu.VMEM((Mrows - 2, W * Cout), jnp.float32), # identity
                ],
            ),
            compiler_params=pltpu.CompilerParams(
                dimension_semantics=("parallel",),
                vmem_limit_bytes=vmem_limit,
            ),
        )(x2d, w1b, w2b, b1_t, s1_t, t1_t, s2_t, t2_t, wd1r, bd1c, wd2_t, bd2_t)
        return jax.block_until_ready(out2d)

    try:
        out2d = run(True)
    except Exception:
        # Fallback for jax versions whose TPU pallas_call lowering does not
        # accept pipeline_mode=pl.Buffered(1) on grid-invariant operands.
        out2d = run(False)

    # Free reshape back to NHWC (pure trailing-dim split, no data movement).
    return out2d.reshape(N, H, W, Cout)


def make_params(key, in_ch, mid_ch, out_ch, reduction=4, eps=1e-5):
    ks = jax.random.split(key, 12)
    cr = out_ch // reduction

    w1 = 0.1 * jax.random.normal(ks[0], (3, 3, in_ch, mid_ch), jnp.float32)
    b1 = 0.05 * jax.random.normal(ks[1], (1, mid_ch), jnp.float32)
    w2 = 0.1 * jax.random.normal(ks[2], (3, 3, mid_ch, out_ch), jnp.float32)
    b2 = 0.05 * jax.random.normal(ks[3], (1, out_ch), jnp.float32)

    # BatchNorm (eval mode): fold gamma/beta/running stats into scale/shift.
    def bn_fold(kg, kb, km, kv, c):
        gamma = 1.0 + 0.1 * jax.random.normal(kg, (1, c), jnp.float32)
        beta = 0.1 * jax.random.normal(kb, (1, c), jnp.float32)
        mean = 0.1 * jax.random.normal(km, (1, c), jnp.float32)
        var = 1.0 + 0.1 * jnp.abs(jax.random.normal(kv, (1, c), jnp.float32))
        s = gamma / jnp.sqrt(var + eps)
        t = beta - mean * s
        return s, t

    s1, t1 = bn_fold(ks[4], ks[5], ks[6], ks[7], mid_ch)
    s2, t2 = bn_fold(ks[8], ks[9], ks[10], ks[11], out_ch)

    ks2 = jax.random.split(jax.random.fold_in(key, 7), 4)
    wd1 = 0.3 * jax.random.normal(ks2[0], (out_ch, cr), jnp.float32)
    bd1 = 0.05 * jax.random.normal(ks2[1], (1, cr), jnp.float32)
    wd2 = 0.3 * jax.random.normal(ks2[2], (cr, out_ch), jnp.float32)
    bd2 = 0.05 * jax.random.normal(ks2[3], (1, out_ch), jnp.float32)

    return dict(w1=w1, b1=b1, s1=s1, t1=t1, w2=w2, b2=b2, s2=s2, t2=t2,
                wd1=wd1, bd1=bd1, wd2=wd2, bd2=bd2)


def ref_forward(x_nhwc, p):
    dn = ("NHWC", "HWIO", "NHWC")
    c1 = lax.conv_general_dilated(x_nhwc, p["w1"], (1, 1), "SAME",
                                  dimension_numbers=dn) + p["b1"][None, None]
    identity = c1
    h = jnp.maximum(c1 * p["s1"][None, None] + p["t1"][None, None], 0.0)
    c2 = lax.conv_general_dilated(h, p["w2"], (1, 1), "SAME",
                                  dimension_numbers=dn) + p["b2"][None, None]
    z = c2 * p["s2"][None, None] + p["t2"][None, None]
    pooled = jnp.mean(z, axis=(1, 2))                    # (N, Cout)
    a = jnp.maximum(pooled @ p["wd1"] + p["bd1"], 0.0)
    g = jax.nn.sigmoid(a @ p["wd2"] + p["bd2"])
    return jnp.maximum(z * g[:, None, None, :] + identity, 0.0)


if __name__ == "__main__":
    N, in_ch, mid_ch, out_ch, H, W = 2, 4, 8, 8, 16, 16

    key = jax.random.PRNGKey(0)
    kx, kp = jax.random.split(key)
    # The PyTorch module takes NCHW; we use NHWC inside. Build NCHW then transpose.
    x_nchw = jax.random.normal(kx, (N, in_ch, H, W), jnp.float32)
    x_nhwc = jnp.transpose(x_nchw, (0, 2, 3, 1))

    params = make_params(kp, in_ch, mid_ch, out_ch, reduction=4)

    out = jax.block_until_ready(conv_block_nested(x_nhwc, params))
    ref = jax.block_until_ready(ref_forward(x_nhwc, params))

    out_f32 = out.astype(jnp.float32)
    # Tolerance: conv operands go through the MXU in bf16 (f32 accumulation)
    # and the final result is stored in bf16.
    if not jnp.allclose(out_f32, ref, atol=6e-2, rtol=6e-2):
        err = float(jnp.max(jnp.abs(out_f32 - ref)))
        raise AssertionError(
            f"Pallas kernel does not match reference (max abs err {err:.4f})")

    print("KERNEL_OK")
</pallas_src>

<mosaic_0001>
module attributes {stable_mosaic.version = 11 : i64} {
  func.func @conv_block_nested_kernel(%arg0: i32, %arg1: memref<2x16x64xf32, #tpu.memory_space<vmem>>, %arg2: memref<3x64x128xbf16, #tpu.memory_space<vmem>>, %arg3: memref<3x128x128xbf16, #tpu.memory_space<vmem>>, %arg4: memref<1x128xf32, #tpu.memory_space<vmem>>, %arg5: memref<1x128xf32, #tpu.memory_space<vmem>>, %arg6: memref<1x128xf32, #tpu.memory_space<vmem>>, %arg7: memref<1x128xf32, #tpu.memory_space<vmem>>, %arg8: memref<1x128xf32, #tpu.memory_space<vmem>>, %arg9: memref<2x128xf32, #tpu.memory_space<vmem>>, %arg10: memref<2x1xf32, #tpu.memory_space<vmem>>, %arg11: memref<2x128xf32, #tpu.memory_space<vmem>>, %arg12: memref<1x128xf32, #tpu.memory_space<vmem>>, %arg13: memref<2x16x128xbf16, #tpu.memory_space<vmem>>, %arg14: memref<36x64xbf16, #tpu.memory_space<vmem>>, %arg15: memref<36x128xbf16, #tpu.memory_space<vmem>>, %arg16: memref<34x128xf32, #tpu.memory_space<vmem>>) attributes {dimension_semantics = [#tpu.dimension_semantics<parallel>], iteration_bounds = array<i64: 1>, scalar_prefetch = 0 : i64, scratch_operands = 3 : i64, tpu.core_type = #tpu.core_type<tc>, window_params = [{transform_indices = @transform_0, window_bounds = array<i64: 2, 16, 64>}, {pipeline_mode = #tpu.pipeline_mode<synchronous>, transform_indices = @transform_1, window_bounds = array<i64: 3, 64, 128>}, {pipeline_mode = #tpu.pipeline_mode<synchronous>, transform_indices = @transform_2, window_bounds = array<i64: 3, 128, 128>}, {pipeline_mode = #tpu.pipeline_mode<synchronous>, transform_indices = @transform_3, window_bounds = array<i64: 1, 128>}, {pipeline_mode = #tpu.pipeline_mode<synchronous>, transform_indices = @transform_4, window_bounds = array<i64: 1, 128>}, {pipeline_mode = #tpu.pipeline_mode<synchronous>, transform_indices = @transform_5, window_bounds = array<i64: 1, 128>}, {pipeline_mode = #tpu.pipeline_mode<synchronous>, transform_indices = @transform_6, window_bounds = array<i64: 1, 128>}, {pipeline_mode = #tpu.pipeline_mode<synchronous>, transform_indices = @transform_7, window_bounds = array<i64: 1, 128>}, {pipeline_mode = #tpu.pipeline_mode<synchronous>, transform_indices = @transform_8, window_bounds = array<i64: 2, 128>}, {pipeline_mode = #tpu.pipeline_mode<synchronous>, transform_indices = @transform_9, window_bounds = array<i64: 2, 1>}, {pipeline_mode = #tpu.pipeline_mode<synchronous>, transform_indices = @transform_10, window_bounds = array<i64: 2, 128>}, {pipeline_mode = #tpu.pipeline_mode<synchronous>, transform_indices = @transform_11, window_bounds = array<i64: 1, 128>}, {transform_indices = @transform_12, window_bounds = array<i64: 2, 16, 128>}]} {
    %cst = arith.constant 0.000000e+00 : bf16
    %0 = vector.broadcast %cst : bf16 to vector<1x64xbf16>
    %cst_0 = arith.constant 0.000000e+00 : bf16
    %1 = vector.broadcast %cst_0 : bf16 to vector<1x128xbf16>
    %c0 = arith.constant 0 : index
    %c0_1 = arith.constant 0 : index
    %2 = vector.load %arg14[%c0, %c0_1] : memref<36x64xbf16, #tpu.memory_space<vmem>>, vector<1x64xbf16>
    tpu.vector_store %arg14[%c0, %c0_1], %0 {strides = array<i32>} : memref<36x64xbf16, #tpu.memory_space<vmem>>, vector<1x64xbf16>,
    %c0_2 = arith.constant 0 : index
    %c0_3 = arith.constant 0 : index
    %c0_4 = arith.constant 0 : index
    %3 = vector.load %arg1[%c0_2, %c0_3, %c0_4] : memref<2x16x64xf32, #tpu.memory_space<vmem>>, vector<1x16x64xf32>
    %4 = vector.shape_cast %3 : vector<1x16x64xf32> to vector<16x64xf32>
    %5 = arith.truncf %4 : vector<16x64xf32> to vector<16x64xbf16>
    %c1 = arith.constant 1 : index
    %c0_5 = arith.constant 0 : index
    %6 = vector.load %arg14[%c1, %c0_5] : memref<36x64xbf16, #tpu.memory_space<vmem>>, vector<16x64xbf16>
    tpu.vector_store %arg14[%c1, %c0_5], %5 {strides = array<i32>} : memref<36x64xbf16, #tpu.memory_space<vmem>>, vector<16x64xbf16>,
    %c17 = arith.constant 17 : index
    %c0_6 = arith.constant 0 : index
    %7 = vector.load %arg14[%c17, %c0_6] : memref<36x64xbf16, #tpu.memory_space<vmem>>, vector<1x64xbf16>
    tpu.vector_store %arg14[%c17, %c0_6], %0 {strides = array<i32>} : memref<36x64xbf16, #tpu.memory_space<vmem>>, vector<1x64xbf16>,
    %c0_7 = arith.constant 0 : index
    %c0_8 = arith.constant 0 : index
    %8 = vector.load %arg15[%c0_7, %c0_8] : memref<36x128xbf16, #tpu.memory_space<vmem>>, vector<1x128xbf16>
    tpu.vector_store %arg15[%c0_7, %c0_8], %1 {strides = array<i32>} : memref<36x128xbf16, #tpu.memory_space<vmem>>, vector<1x128xbf16>,
    %c17_9 = arith.constant 17 : index
    %c0_10 = arith.constant 0 : index
    %9 = vector.load %arg15[%c17_9, %c0_10] : memref<36x128xbf16, #tpu.memory_space<vmem>>, vector<1x128xbf16>
    tpu.vector_store %arg15[%c17_9, %c0_10], %1 {strides = array<i32>} : memref<36x128xbf16, #tpu.memory_space<vmem>>, vector<1x128xbf16>,
    %c18 = arith.constant 18 : index
    %c0_11 = arith.constant 0 : index
    %10 = vector.load %arg14[%c18, %c0_11] : memref<36x64xbf16, #tpu.memory_space<vmem>>, vector<1x64xbf16>
    tpu.vector_store %arg14[%c18, %c0_11], %0 {strides = array<i32>} : memref<36x64xbf16, #tpu.memory_space<vmem>>, vector<1x64xbf16>,
    %c1_12 = arith.constant 1 : index
    %c0_13 = arith.constant 0 : index
    %c0_14 = arith.constant 0 : index
    %11 = vector.load %arg1[%c1_12, %c0_13, %c0_14] : memref<2x16x64xf32, #tpu.memory_space<vmem>>, vector<1x16x64xf32>
    %12 = vector.shape_cast %11 : vector<1x16x64xf32> to vector<16x64xf32>
    %13 = arith.truncf %12 : vector<16x64xf32> to vector<16x64xbf16>
    %c19 = arith.constant 19 : index
    %c0_15 = arith.constant 0 : index
    %14 = vector.load %arg14[%c19, %c0_15] : memref<36x64xbf16, #tpu.memory_space<vmem>>, vector<16x64xbf16>
    tpu.vector_store %arg14[%c19, %c0_15], %13 {strides = array<i32>} : memref<36x64xbf16, #tpu.memory_space<vmem>>, vector<16x64xbf16>,
    %c35 = arith.constant 35 : index
    %c0_16 = arith.constant 0 : index
    %15 = vector.load %arg14[%c35, %c0_16] : memref<36x64xbf16, #tpu.memory_space<vmem>>, vector<1x64xbf16>
    tpu.vector_store %arg14[%c35, %c0_16], %0 {strides = array<i32>} : memref<36x64xbf16, #tpu.memory_space<vmem>>, vector<1x64xbf16>,
    %c18_17 = arith.constant 18 : index
    %c0_18 = arith.constant 0 : index
    %16 = vector.load %arg15[%c18_17, %c0_18] : memref<36x128xbf16, #tpu.memory_space<vmem>>, vector<1x128xbf16>
    tpu.vector_store %arg15[%c18_17, %c0_18], %1 {strides = array<i32>} : memref<36x128xbf16, #tpu.memory_space<vmem>>, vector<1x128xbf16>,
    %c35_19 = arith.constant 35 : index
    %c0_20 = arith.constant 0 : index
    %17 = vector.load %arg15[%c35_19, %c0_20] : memref<36x128xbf16, #tpu.memory_space<vmem>>, vector<1x128xbf16>
    tpu.vector_store %arg15[%c35_19, %c0_20], %1 {strides = array<i32>} : memref<36x128xbf16, #tpu.memory_space<vmem>>, vector<1x128xbf16>,
    %c0_21 = arith.constant 0 : index
    %c0_22 = arith.constant 0 : index
    %18 = vector.load %arg14[%c0_21, %c0_22] : memref<36x64xbf16, #tpu.memory_space<vmem>>, vector<34x64xbf16>
    %c0_23 = arith.constant 0 : index
    %c0_24 = arith.constant 0 : index
    %c0_25 = arith.constant 0 : index
    %19 = vector.load %arg2[%c0_23, %c0_24, %c0_25] : memref<3x64x128xbf16, #tpu.memory_space<vmem>>, vector<1x64x128xbf16>
    %20 = vector.shape_cast %19 : vector<1x64x128xbf16> to vector<64x128xbf16>
    %cst_26 = arith.constant dense<0.000000e+00> : vector<34x128xf32>
    %21 = tpu.matmul %18, %20, %cst_26 {dimension_numbers = #tpu.dot_dimension_numbers<[1], [0], [0], [1], [0, 0, 1, 1], [], []>} : vector<34x64xbf16>, vector<64x128xbf16>, vector<34x128xf32> -> vector<34x128xf32>
    %c1_27 = arith.constant 1 : index
    %c0_28 = arith.constant 0 : index
    %22 = vector.load %arg14[%c1_27, %c0_28] : memref<36x64xbf16, #tpu.memory_space<vmem>>, vector<34x64xbf16>
    %c1_29 = arith.constant 1 : index
    %c0_30 = arith.constant 0 : index
    %c0_31 = arith.constant 0 : index
    %23 = vector.load %arg2[%c1_29, %c0_30, %c0_31] : memref<3x64x128xbf16, #tpu.memory_space<vmem>>, vector<1x64x128xbf16>
    %24 = vector.shape_cast %23 : vector<1x64x128xbf16> to vector<64x128xbf16>
    %cst_32 = arith.constant dense<0.000000e+00> : vector<34x128xf32>
    %25 = tpu.matmul %22, %24, %cst_32 {dimension_numbers = #tpu.dot_dimension_numbers<[1], [0], [0], [1], [0, 0, 1, 1], [], []>} : vector<34x64xbf16>, vector<64x128xbf16>, vector<34x128xf32> -> vector<34x128xf32>
    %26 = arith.addf %21, %25 : vector<34x128xf32>
    %c2 = arith.constant 2 : index
    %c0_33 = arith.constant 0 : index
    %27 = vector.load %arg14[%c2, %c0_33] : memref<36x64xbf16, #tpu.memory_space<vmem>>, vector<34x64xbf16>
    %c2_34 = arith.constant 2 : index
    %c0_35 = arith.constant 0 : index
    %c0_36 = arith.constant 0 : index
    %28 = vector.load %arg2[%c2_34, %c0_35, %c0_36] : memref<3x64x128xbf16, #tpu.memory_space<vmem>>, vector<1x64x128xbf16>
    %29 = vector.shape_cast %28 : vector<1x64x128xbf16> to vector<64x128xbf16>
    %cst_37 = arith.constant dense<0.000000e+00> : vector<34x128xf32>
    %30 = tpu.matmul %27, %29, %cst_37 {dimension_numbers = #tpu.dot_dimension_numbers<[1], [0], [0], [1], [0, 0, 1, 1], [], []>} : vector<34x64xbf16>, vector<64x128xbf16>, vector<34x128xf32> -> vector<34x128xf32>
    %31 = arith.addf %26, %30 : vector<34x128xf32>
    %c0_38 = arith.constant 0 : index
    %c0_39 = arith.constant 0 : index
    %32 = vector.load %arg4[%c0_38, %c0_39] : memref<1x128xf32, #tpu.memory_space<vmem>>, vector<1x128xf32>
    %33 = vector.broadcast %32 : vector<1x128xf32> to vector<34x128xf32>
    %34 = arith.addf %31, %33 : vector<34x128xf32>
    %c0_40 = arith.constant 0 : index
    %c0_41 = arith.constant 0 : index
    %35 = vector.load %arg16[%c0_40, %c0_41] : memref<34x128xf32, #tpu.memory_space<vmem>>, vector<34x128xf32>
    tpu.vector_store %arg16[%c0_40, %c0_41], %34 {strides = array<i32>} : memref<34x128xf32, #tpu.memory_space<vmem>>, vector<34x128xf32>,
    %c0_42 = arith.constant 0 : index
    %c0_43 = arith.constant 0 : index
    %36 = vector.load %arg5[%c0_42, %c0_43] : memref<1x128xf32, #tpu.memory_space<vmem>>, vector<1x128xf32>
    %37 = vector.broadcast %36 : vector<1x128xf32> to vector<34x128xf32>
    %38 = arith.mulf %34, %37 : vector<34x128xf32>
    %c0_44 = arith.constant 0 : index
    %c0_45 = arith.constant 0 : index
    %39 = vector.load %arg6[%c0_44, %c0_45] : memref<1x128xf32, #tpu.memory_space<vmem>>, vector<1x128xf32>
    %40 = vector.broadcast %39 : vector<1x128xf32> to vector<34x128xf32>
    %41 = arith.addf %38, %40 : vector<34x128xf32>
    %cst_46 = arith.constant 0.000000e+00 : f32
    %42 = vector.broadcast %cst_46 : f32 to vector<34x128xf32>
    %43 = arith.maximumf %41, %42 : vector<34x128xf32>
    %44 = vector.extract_strided_slice %43 {offsets = [0, 0], sizes = [16, 128], strides = [1, 1]} : vector<34x128xf32> to vector<16x128xf32>
    %45 = arith.truncf %44 : vector<16x128xf32> to vector<16x128xbf16>
    %c1_47 = arith.constant 1 : index
    %c0_48 = arith.constant 0 : index
    %46 = vector.load %arg15[%c1_47, %c0_48] : memref<36x128xbf16, #tpu.memory_space<vmem>>, vector<16x128xbf16>
    tpu.vector_store %arg15[%c1_47, %c0_48], %45 {strides = array<i32>} : memref<36x128xbf16, #tpu.memory_space<vmem>>, vector<16x128xbf16>,
    %47 = vector.extract_strided_slice %43 {offsets = [18, 0], sizes = [16, 128], strides = [1, 1]} : vector<34x128xf32> to vector<16x128xf32>
    %48 = arith.truncf %47 : vector<16x128xf32> to vector<16x128xbf16>
    %c19_49 = arith.constant 19 : index
    %c0_50 = arith.constant 0 : index
    %49 = vector.load %arg15[%c19_49, %c0_50] : memref<36x128xbf16, #tpu.memory_space<vmem>>, vector<16x128xbf16>
    tpu.vector_store %arg15[%c19_49, %c0_50], %48 {strides = array<i32>} : memref<36x128xbf16, #tpu.memory_space<vmem>>, vector<16x128xbf16>,
    %c0_51 = arith.constant 0 : index
    %c0_52 = arith.constant 0 : index
    %50 = vector.load %arg15[%c0_51, %c0_52] : memref<36x128xbf16, #tpu.memory_space<vmem>>, vector<34x128xbf16>
    %c0_53 = arith.constant 0 : index
    %c0_54 = arith.constant 0 : index
    %c0_55 = arith.constant 0 : index
    %51 = vector.load %arg3[%c0_53, %c0_54, %c0_55] : memref<3x128x128xbf16, #tpu.memory_space<vmem>>, vector<1x128x128xbf16>
    %52 = vector.shape_cast %51 : vector<1x128x128xbf16> to vector<128x128xbf16>
    %cst_56 = arith.constant dense<0.000000e+00> : vector<34x128xf32>
    %53 = tpu.matmul %50, %52, %cst_56 {dimension_numbers = #tpu.dot_dimension_numbers<[1], [0], [0], [1], [0, 0, 1, 1], [], []>} : vector<34x128xbf16>, vector<128x128xbf16>, vector<34x128xf32> -> vector<34x128xf32>
    %c1_57 = arith.constant 1 : index
    %c0_58 = arith.constant 0 : index
    %54 = vector.load %arg15[%c1_57, %c0_58] : memref<36x128xbf16, #tpu.memory_space<vmem>>, vector<34x128xbf16>
    %c1_59 = arith.constant 1 : index
    %c0_60 = arith.constant 0 : index
    %c0_61 = arith.constant 0 : index
    %55 = vector.load %arg3[%c1_59, %c0_60, %c0_61] : memref<3x128x128xbf16, #tpu.memory_space<vmem>>, vector<1x128x128xbf16>
    %56 = vector.shape_cast %55 : vector<1x128x128xbf16> to vector<128x128xbf16>
    %cst_62 = arith.constant dense<0.000000e+00> : vector<34x128xf32>
    %57 = tpu.matmul %54, %56, %cst_62 {dimension_numbers = #tpu.dot_dimension_numbers<[1], [0], [0], [1], [0, 0, 1, 1], [], []>} : vector<34x128xbf16>, vector<128x128xbf16>, vector<34x128xf32> -> vector<34x128xf32>
    %58 = arith.addf %53, %57 : vector<34x128xf32>
    %c2_63 = arith.constant 2 : index
    %c0_64 = arith.constant 0 : index
    %59 = vector.load %arg15[%c2_63, %c0_64] : memref<36x128xbf16, #tpu.memory_space<vmem>>, vector<34x128xbf16>
    %c2_65 = arith.constant 2 : index
    %c0_66 = arith.constant 0 : index
    %c0_67 = arith.constant 0 : index
    %60 = vector.load %arg3[%c2_65, %c0_66, %c0_67] : memref<3x128x128xbf16, #tpu.memory_space<vmem>>, vector<1x128x128xbf16>
    %61 = vector.shape_cast %60 : vector<1x128x128xbf16> to vector<128x128xbf16>
    %cst_68 = arith.constant dense<0.000000e+00> : vector<34x128xf32>
    %62 = tpu.matmul %59, %61, %cst_68 {dimension_numbers = #tpu.dot_dimension_numbers<[1], [0], [0], [1], [0, 0, 1, 1], [], []>} : vector<34x128xbf16>, vector<128x128xbf16>, vector<34x128xf32> -> vector<34x128xf32>
    %63 = arith.addf %58, %62 : vector<34x128xf32>
    %c0_69 = arith.constant 0 : index
    %c0_70 = arith.constant 0 : index
    %64 = vector.load %arg7[%c0_69, %c0_70] : memref<1x128xf32, #tpu.memory_space<vmem>>, vector<1x128xf32>
    %65 = vector.broadcast %64 : vector<1x128xf32> to vector<34x128xf32>
    %66 = arith.mulf %63, %65 : vector<34x128xf32>
    %c0_71 = arith.constant 0 : index
    %c0_72 = arith.constant 0 : index
    %67 = vector.load %arg8[%c0_71, %c0_72] : memref<1x128xf32, #tpu.memory_space<vmem>>, vector<1x128xf32>
    %68 = vector.broadcast %67 : vector<1x128xf32> to vector<34x128xf32>
    %69 = arith.addf %66, %68 : vector<34x128xf32>
    %70 = vector.extract_strided_slice %69 {offsets = [0, 0], sizes = [16, 128], strides = [1, 1]} : vector<34x128xf32> to vector<16x128xf32>
    %cst_73 = arith.constant dense<0.000000e+00> : vector<128xf32>
    %71 = vector.multi_reduction <add>, %70, %cst_73 [0] : vector<16x128xf32> to vector<128xf32>
    %72 = vector.shape_cast %71 : vector<128xf32> to vector<1x128xf32>
    %c0_74 = arith.constant 0 : index
    %c0_75 = arith.constant 0 : index
    %73 = vector.load %arg9[%c0_74, %c0_75] : memref<2x128xf32, #tpu.memory_space<vmem>>, vector<2x128xf32>
    %74 = vector.broadcast %72 : vector<1x128xf32> to vector<2x128xf32>
    %75 = arith.mulf %74, %73 : vector<2x128xf32>
    %cst_76 = arith.constant dense<0.000000e+00> : vector<2xf32>
    %76 = vector.multi_reduction <add>, %75, %cst_76 [1] : vector<2x128xf32> to vector<2xf32>
    %77 = vector.shape_cast %76 : vector<2xf32> to vector<2x1xf32>
    %c0_77 = arith.constant 0 : index
    %c0_78 = arith.constant 0 : index
    %78 = vector.load %arg10[%c0_77, %c0_78] : memref<2x1xf32, #tpu.memory_space<vmem>>, vector<2x1xf32>
    %79 = arith.addf %77, %78 : vector<2x1xf32>
    %cst_79 = arith.constant 0.000000e+00 : f32
    %80 = vector.broadcast %cst_79 : f32 to vector<2x1xf32>
    %81 = arith.maximumf %79, %80 : vector<2x1xf32>
    %c0_80 = arith.constant 0 : index
    %c0_81 = arith.constant 0 : index
    %82 = vector.load %arg11[%c0_80, %c0_81] : memref<2x128xf32, #tpu.memory_space<vmem>>, vector<2x128xf32>
    %83 = vector.broadcast %81 : vector<2x1xf32> to vector<2x128xf32>
    %84 = arith.mulf %83, %82 : vector<2x128xf32>
    %cst_82 = arith.constant dense<0.000000e+00> : vector<128xf32>
    %85 = vector.multi_reduction <add>, %84, %cst_82 [0] : vector<2x128xf32> to vector<128xf32>
    %86 = vector.shape_cast %85 : vector<128xf32> to vector<1x128xf32>
    %c0_83 = arith.constant 0 : index
    %c0_84 = arith.constant 0 : index
    %87 = vector.load %arg12[%c0_83, %c0_84] : memref<1x128xf32, #tpu.memory_space<vmem>>, vector<1x128xf32>
    %88 = arith.addf %86, %87 : vector<1x128xf32>
    %89 = arith.negf %88 : vector<1x128xf32>
    %90 = math.exp %89 : vector<1x128xf32>
    %cst_85 = arith.constant 1.000000e+00 : f32
    %91 = vector.broadcast %cst_85 : f32 to vector<1x128xf32>
    %92 = arith.addf %91, %90 : vector<1x128xf32>
    %93 = arith.divf %91, %92 : vector<1x128xf32>
    %94 = vector.broadcast %93 : vector<1x128xf32> to vector<16x128xf32>
    %95 = arith.mulf %70, %94 : vector<16x128xf32>
    %c0_86 = arith.constant 0 : index
    %c0_87 = arith.constant 0 : index
    %96 = vector.load %arg16[%c0_86, %c0_87] : memref<34x128xf32, #tpu.memory_space<vmem>>, vector<16x128xf32>
    %97 = arith.addf %95, %96 : vector<16x128xf32>
    %cst_88 = arith.constant 0.000000e+00 : f32
    %98 = vector.broadcast %cst_88 : f32 to vector<16x128xf32>
    %99 = arith.maximumf %97, %98 : vector<16x128xf32>
    %100 = arith.truncf %99 : vector<16x128xf32> to vector<16x128xbf16>
    %c0_89 = arith.constant 0 : index
    %c0_90 = arith.constant 0 : index
    %c0_91 = arith.constant 0 : index
    %101 = vector.load %arg13[%c0_89, %c0_90, %c0_91] : memref<2x16x128xbf16, #tpu.memory_space<vmem>>, vector<1x16x128xbf16>
    %102 = vector.shape_cast %101 : vector<1x16x128xbf16> to vector<16x128xbf16>
    %103 = vector.shape_cast %100 : vector<16x128xbf16> to vector<1x16x128xbf16>
    tpu.vector_store %arg13[%c0_89, %c0_90, %c0_91], %103 {strides = array<i32>} : memref<2x16x128xbf16, #tpu.memory_space<vmem>>, vector<1x16x128xbf16>,
    %104 = vector.extract_strided_slice %69 {offsets = [18, 0], sizes = [16, 128], strides = [1, 1]} : vector<34x128xf32> to vector<16x128xf32>
    %cst_92 = arith.constant dense<0.000000e+00> : vector<128xf32>
    %105 = vector.multi_reduction <add>, %104, %cst_92 [0] : vector<16x128xf32> to vector<128xf32>
    %106 = vector.shape_cast %105 : vector<128xf32> to vector<1x128xf32>
    %c0_93 = arith.constant 0 : index
    %c0_94 = arith.constant 0 : index
    %107 = vector.load %arg9[%c0_93, %c0_94] : memref<2x128xf32, #tpu.memory_space<vmem>>, vector<2x128xf32>
    %108 = vector.broadcast %106 : vector<1x128xf32> to vector<2x128xf32>
    %109 = arith.mulf %108, %107 : vector<2x128xf32>
    %cst_95 = arith.constant dense<0.000000e+00> : vector<2xf32>
    %110 = vector.multi_reduction <add>, %109, %cst_95 [1] : vector<2x128xf32> to vector<2xf32>
    %111 = vector.shape_cast %110 : vector<2xf32> to vector<2x1xf32>
    %c0_96 = arith.constant 0 : index
    %c0_97 = arith.constant 0 : index
    %112 = vector.load %arg10[%c0_96, %c0_97] : memref<2x1xf32, #tpu.memory_space<vmem>>, vector<2x1xf32>
    %113 = arith.addf %111, %112 : vector<2x1xf32>
    %cst_98 = arith.constant 0.000000e+00 : f32
    %114 = vector.broadcast %cst_98 : f32 to vector<2x1xf32>
    %115 = arith.maximumf %113, %114 : vector<2x1xf32>
    %c0_99 = arith.constant 0 : index
    %c0_100 = arith.constant 0 : index
    %116 = vector.load %arg11[%c0_99, %c0_100] : memref<2x128xf32, #tpu.memory_space<vmem>>, vector<2x128xf32>
    %117 = vector.broadcast %115 : vector<2x1xf32> to vector<2x128xf32>
    %118 = arith.mulf %117, %116 : vector<2x128xf32>
    %cst_101 = arith.constant dense<0.000000e+00> : vector<128xf32>
    %119 = vector.multi_reduction <add>, %118, %cst_101 [0] : vector<2x128xf32> to vector<128xf32>
    %120 = vector.shape_cast %119 : vector<128xf32> to vector<1x128xf32>
    %c0_102 = arith.constant 0 : index
    %c0_103 = arith.constant 0 : index
    %121 = vector.load %arg12[%c0_102, %c0_103] : memref<1x128xf32, #tpu.memory_space<vmem>>, vector<1x128xf32>
    %122 = arith.addf %120, %121 : vector<1x128xf32>
    %123 = arith.negf %122 : vector<1x128xf32>
    %124 = math.exp %123 : vector<1x128xf32>
    %cst_104 = arith.constant 1.000000e+00 : f32
    %125 = vector.broadcast %cst_104 : f32 to vector<1x128xf32>
    %126 = arith.addf %125, %124 : vector<1x128xf32>
    %127 = arith.divf %125, %126 : vector<1x128xf32>
    %128 = vector.broadcast %127 : vector<1x128xf32> to vector<16x128xf32>
    %129 = arith.mulf %104, %128 : vector<16x128xf32>
    %c18_105 = arith.constant 18 : index
    %c0_106 = arith.constant 0 : index
    %130 = vector.load %arg16[%c18_105, %c0_106] : memref<34x128xf32, #tpu.memory_space<vmem>>, vector<16x128xf32>
    %131 = arith.addf %129, %130 : vector<16x128xf32>
    %cst_107 = arith.constant 0.000000e+00 : f32
    %132 = vector.broadcast %cst_107 : f32 to vector<16x128xf32>
    %133 = arith.maximumf %131, %132 : vector<16x128xf32>
    %134 = arith.truncf %133 : vector<16x128xf32> to vector<16x128xbf16>
    %c1_108 = arith.constant 1 : index
    %c0_109 = arith.constant 0 : index
    %c0_110 = arith.constant 0 : index
    %135 = vector.load %arg13[%c1_108, %c0_109, %c0_110] : memref<2x16x128xbf16, #tpu.memory_space<vmem>>, vector<1x16x128xbf16>
    %136 = vector.shape_cast %135 : vector<1x16x128xbf16> to vector<16x128xbf16>
    %137 = vector.shape_cast %134 : vector<16x128xbf16> to vector<1x16x128xbf16>
    tpu.vector_store %arg13[%c1_108, %c0_109, %c0_110], %137 {strides = array<i32>} : memref<2x16x128xbf16, #tpu.memory_space<vmem>>, vector<1x16x128xbf16>,
    return
  }
  func.func @transform_0(%arg0: i32) -> (i32, i32, i32) {
    %c0_i32 = arith.constant 0 : i32
    %c0_i32_0 = arith.constant 0 : i32
    %c0_i32_1 = arith.constant 0 : i32
    return %arg0, %c0_i32, %c0_i32_0 : i32, i32, i32
  }
  func.func @transform_1(%arg0: i32) -> (i32, i32, i32) {
    %c0_i32 = arith.constant 0 : i32
    %c0_i32_0 = arith.constant 0 : i32
    %c0_i32_1 = arith.constant 0 : i32
    %c0_i32_2 = arith.constant 0 : i32
    return %c0_i32, %c0_i32_0, %c0_i32_1 : i32, i32, i32
  }
  func.func @transform_2(%arg0: i32) -> (i32, i32, i32) {
    %c0_i32 = arith.constant 0 : i32
    %c0_i32_0 = arith.constant 0 : i32
    %c0_i32_1 = arith.constant 0 : i32
    %c0_i32_2 = arith.constant 0 : i32
    return %c0_i32, %c0_i32_0, %c0_i32_1 : i32, i32, i32
  }
  func.func @transform_3(%arg0: i32) -> (i32, i32) {
    %c0_i32 = arith.constant 0 : i32
    %c0_i32_0 = arith.constant 0 : i32
    %c0_i32_1 = arith.constant 0 : i32
    return %c0_i32, %c0_i32_0 : i32, i32
  }
  func.func @transform_4(%arg0: i32) -> (i32, i32) {
    %c0_i32 = arith.constant 0 : i32
    %c0_i32_0 = arith.constant 0 : i32
    %c0_i32_1 = arith.constant 0 : i32
    return %c0_i32, %c0_i32_0 : i32, i32
  }
  func.func @transform_5(%arg0: i32) -> (i32, i32) {
    %c0_i32 = arith.constant 0 : i32
    %c0_i32_0 = arith.constant 0 : i32
    %c0_i32_1 = arith.constant 0 : i32
    return %c0_i32, %c0_i32_0 : i32, i32
  }
  func.func @transform_6(%arg0: i32) -> (i32, i32) {
    %c0_i32 = arith.constant 0 : i32
    %c0_i32_0 = arith.constant 0 : i32
    %c0_i32_1 = arith.constant 0 : i32
    return %c0_i32, %c0_i32_0 : i32, i32
  }
  func.func @transform_7(%arg0: i32) -> (i32, i32) {
    %c0_i32 = arith.constant 0 : i32
    %c0_i32_0 = arith.constant 0 : i32
    %c0_i32_1 = arith.constant 0 : i32
    return %c0_i32, %c0_i32_0 : i32, i32
  }
  func.func @transform_8(%arg0: i32) -> (i32, i32) {
    %c0_i32 = arith.constant 0 : i32
    %c0_i32_0 = arith.constant 0 : i32
    %c0_i32_1 = arith.constant 0 : i32
    return %c0_i32, %c0_i32_0 : i32, i32
  }
  func.func @transform_9(%arg0: i32) -> (i32, i32) {
    %c0_i32 = arith.constant 0 : i32
    %c0_i32_0 = arith.constant 0 : i32
    %c0_i32_1 = arith.constant 0 : i32
    return %c0_i32, %c0_i32_0 : i32, i32
  }
  func.func @transform_10(%arg0: i32) -> (i32, i32) {
    %c0_i32 = arith.constant 0 : i32
    %c0_i32_0 = arith.constant 0 : i32
    %c0_i32_1 = arith.constant 0 : i32
    return %c0_i32, %c0_i32_0 : i32, i32
  }
  func.func @transform_11(%arg0: i32) -> (i32, i32) {
    %c0_i32 = arith.constant 0 : i32
    %c0_i32_0 = arith.constant 0 : i32
    %c0_i32_1 = arith.constant 0 : i32
    return %c0_i32, %c0_i32_0 : i32, i32
  }
  func.func @transform_12(%arg0: i32) -> (i32, i32, i32) {
    %c0_i32 = arith.constant 0 : i32
    %c0_i32_0 = arith.constant 0 : i32
    %c0_i32_1 = arith.constant 0 : i32
    return %arg0, %c0_i32, %c0_i32_0 : i32, i32, i32
  }
}

module attributes {stable_mosaic.version = 11 : i64} {
  func.func @conv_block_nested_kernel(%arg0: i32, %arg1: memref<2x16x64xf32, #tpu.memory_space<vmem>>, %arg2: memref<3x64x128xbf16, #tpu.memory_space<vmem>>, %arg3: memref<3x128x128xbf16, #tpu.memory_space<vmem>>, %arg4: memref<1x128xf32, #tpu.memory_space<vmem>>, %arg5: memref<1x128xf32, #tpu.memory_space<vmem>>, %arg6: memref<1x128xf32, #tpu.memory_space<vmem>>, %arg7: memref<1x128xf32, #tpu.memory_space<vmem>>, %arg8: memref<1x128xf32, #tpu.memory_space<vmem>>, %arg9: memref<2x128xf32, #tpu.memory_space<vmem>>, %arg10: memref<2x1xf32, #tpu.memory_space<vmem>>, %arg11: memref<2x128xf32, #tpu.memory_space<vmem>>, %arg12: memref<1x128xf32, #tpu.memory_space<vmem>>, %arg13: memref<2x16x128xbf16, #tpu.memory_space<vmem>>, %arg14: memref<36x64xbf16, #tpu.memory_space<vmem>>, %arg15: memref<36x128xbf16, #tpu.memory_space<vmem>>, %arg16: memref<34x128xf32, #tpu.memory_space<vmem>>) attributes {dimension_semantics = [#tpu.dimension_semantics<parallel>], iteration_bounds = array<i64: 1>, scalar_prefetch = 0 : i64, scratch_operands = 3 : i64, tpu.core_type = #tpu.core_type<tc>, window_params = [{transform_indices = @transform_0, window_bounds = array<i64: 2, 16, 64>}, {pipeline_mode = #tpu.pipeline_mode<synchronous>, transform_indices = @transform_1, window_bounds = array<i64: 3, 64, 128>}, {pipeline_mode = #tpu.pipeline_mode<synchronous>, transform_indices = @transform_2, window_bounds = array<i64: 3, 128, 128>}, {pipeline_mode = #tpu.pipeline_mode<synchronous>, transform_indices = @transform_3, window_bounds = array<i64: 1, 128>}, {pipeline_mode = #tpu.pipeline_mode<synchronous>, transform_indices = @transform_4, window_bounds = array<i64: 1, 128>}, {pipeline_mode = #tpu.pipeline_mode<synchronous>, transform_indices = @transform_5, window_bounds = array<i64: 1, 128>}, {pipeline_mode = #tpu.pipeline_mode<synchronous>, transform_indices = @transform_6, window_bounds = array<i64: 1, 128>}, {pipeline_mode = #tpu.pipeline_mode<synchronous>, transform_indices = @transform_7, window_bounds = array<i64: 1, 128>}, {pipeline_mode = #tpu.pipeline_mode<synchronous>, transform_indices = @transform_8, window_bounds = array<i64: 2, 128>}, {pipeline_mode = #tpu.pipeline_mode<synchronous>, transform_indices = @transform_9, window_bounds = array<i64: 2, 1>}, {pipeline_mode = #tpu.pipeline_mode<synchronous>, transform_indices = @transform_10, window_bounds = array<i64: 2, 128>}, {pipeline_mode = #tpu.pipeline_mode<synchronous>, transform_indices = @transform_11, window_bounds = array<i64: 1, 128>}, {transform_indices = @transform_12, window_bounds = array<i64: 2, 16, 128>}]} {
    %cst = arith.constant 0.000000e+00 : bf16
    %0 = vector.broadcast %cst : bf16 to vector<1x64xbf16>
    %cst_0 = arith.constant 0.000000e+00 : bf16
    %1 = vector.broadcast %cst_0 : bf16 to vector<1x128xbf16>
    %c0 = arith.constant 0 : index
    %c0_1 = arith.constant 0 : index
    %2 = vector.load %arg14[%c0, %c0_1] : memref<36x64xbf16, #tpu.memory_space<vmem>>, vector<1x64xbf16>
    tpu.vector_store %arg14[%c0, %c0_1], %0 {strides = array<i32>} : memref<36x64xbf16, #tpu.memory_space<vmem>>, vector<1x64xbf16>,
    %c0_2 = arith.constant 0 : index
    %c0_3 = arith.constant 0 : index
    %c0_4 = arith.constant 0 : index
    %3 = vector.load %arg1[%c0_2, %c0_3, %c0_4] : memref<2x16x64xf32, #tpu.memory_space<vmem>>, vector<1x16x64xf32>
    %4 = vector.shape_cast %3 : vector<1x16x64xf32> to vector<16x64xf32>
    %5 = arith.truncf %4 : vector<16x64xf32> to vector<16x64xbf16>
    %c1 = arith.constant 1 : index
    %c0_5 = arith.constant 0 : index
    %6 = vector.load %arg14[%c1, %c0_5] : memref<36x64xbf16, #tpu.memory_space<vmem>>, vector<16x64xbf16>
    tpu.vector_store %arg14[%c1, %c0_5], %5 {strides = array<i32>} : memref<36x64xbf16, #tpu.memory_space<vmem>>, vector<16x64xbf16>,
    %c17 = arith.constant 17 : index
    %c0_6 = arith.constant 0 : index
    %7 = vector.load %arg14[%c17, %c0_6] : memref<36x64xbf16, #tpu.memory_space<vmem>>, vector<1x64xbf16>
    tpu.vector_store %arg14[%c17, %c0_6], %0 {strides = array<i32>} : memref<36x64xbf16, #tpu.memory_space<vmem>>, vector<1x64xbf16>,
    %c0_7 = arith.constant 0 : index
    %c0_8 = arith.constant 0 : index
    %8 = vector.load %arg15[%c0_7, %c0_8] : memref<36x128xbf16, #tpu.memory_space<vmem>>, vector<1x128xbf16>
    tpu.vector_store %arg15[%c0_7, %c0_8], %1 {strides = array<i32>} : memref<36x128xbf16, #tpu.memory_space<vmem>>, vector<1x128xbf16>,
    %c17_9 = arith.constant 17 : index
    %c0_10 = arith.constant 0 : index
    %9 = vector.load %arg15[%c17_9, %c0_10] : memref<36x128xbf16, #tpu.memory_space<vmem>>, vector<1x128xbf16>
    tpu.vector_store %arg15[%c17_9, %c0_10], %1 {strides = array<i32>} : memref<36x128xbf16, #tpu.memory_space<vmem>>, vector<1x128xbf16>,
    %c18 = arith.constant 18 : index
    %c0_11 = arith.constant 0 : index
    %10 = vector.load %arg14[%c18, %c0_11] : memref<36x64xbf16, #tpu.memory_space<vmem>>, vector<1x64xbf16>
    tpu.vector_store %arg14[%c18, %c0_11], %0 {strides = array<i32>} : memref<36x64xbf16, #tpu.memory_space<vmem>>, vector<1x64xbf16>,
    %c1_12 = arith.constant 1 : index
    %c0_13 = arith.constant 0 : index
    %c0_14 = arith.constant 0 : index
    %11 = vector.load %arg1[%c1_12, %c0_13, %c0_14] : memref<2x16x64xf32, #tpu.memory_space<vmem>>, vector<1x16x64xf32>
    %12 = vector.shape_cast %11 : vector<1x16x64xf32> to vector<16x64xf32>
    %13 = arith.truncf %12 : vector<16x64xf32> to vector<16x64xbf16>
    %c19 = arith.constant 19 : index
    %c0_15 = arith.constant 0 : index
    %14 = vector.load %arg14[%c19, %c0_15] : memref<36x64xbf16, #tpu.memory_space<vmem>>, vector<16x64xbf16>
    tpu.vector_store %arg14[%c19, %c0_15], %13 {strides = array<i32>} : memref<36x64xbf16, #tpu.memory_space<vmem>>, vector<16x64xbf16>,
    %c35 = arith.constant 35 : index
    %c0_16 = arith.constant 0 : index
    %15 = vector.load %arg14[%c35, %c0_16] : memref<36x64xbf16, #tpu.memory_space<vmem>>, vector<1x64xbf16>
    tpu.vector_store %arg14[%c35, %c0_16], %0 {strides = array<i32>} : memref<36x64xbf16, #tpu.memory_space<vmem>>, vector<1x64xbf16>,
    %c18_17 = arith.constant 18 : index
    %c0_18 = arith.constant 0 : index
    %16 = vector.load %arg15[%c18_17, %c0_18] : memref<36x128xbf16, #tpu.memory_space<vmem>>, vector<1x128xbf16>
    tpu.vector_store %arg15[%c18_17, %c0_18], %1 {strides = array<i32>} : memref<36x128xbf16, #tpu.memory_space<vmem>>, vector<1x128xbf16>,
    %c35_19 = arith.constant 35 : index
    %c0_20 = arith.constant 0 : index
    %17 = vector.load %arg15[%c35_19, %c0_20] : memref<36x128xbf16, #tpu.memory_space<vmem>>, vector<1x128xbf16>
    tpu.vector_store %arg15[%c35_19, %c0_20], %1 {strides = array<i32>} : memref<36x128xbf16, #tpu.memory_space<vmem>>, vector<1x128xbf16>,
    %c0_21 = arith.constant 0 : index
    %c0_22 = arith.constant 0 : index
    %18 = vector.load %arg14[%c0_21, %c0_22] : memref<36x64xbf16, #tpu.memory_space<vmem>>, vector<34x64xbf16>
    %c0_23 = arith.constant 0 : index
    %c0_24 = arith.constant 0 : index
    %c0_25 = arith.constant 0 : index
    %19 = vector.load %arg2[%c0_23, %c0_24, %c0_25] : memref<3x64x128xbf16, #tpu.memory_space<vmem>>, vector<1x64x128xbf16>
    %20 = vector.shape_cast %19 : vector<1x64x128xbf16> to vector<64x128xbf16>
    %cst_26 = arith.constant dense<0.000000e+00> : vector<34x128xf32>
    %21 = tpu.matmul %18, %20, %cst_26 {dimension_numbers = #tpu.dot_dimension_numbers<[1], [0], [0], [1], [0, 0, 1, 1], [], []>} : vector<34x64xbf16>, vector<64x128xbf16>, vector<34x128xf32> -> vector<34x128xf32>
    %c1_27 = arith.constant 1 : index
    %c0_28 = arith.constant 0 : index
    %22 = vector.load %arg14[%c1_27, %c0_28] : memref<36x64xbf16, #tpu.memory_space<vmem>>, vector<34x64xbf16>
    %c1_29 = arith.constant 1 : index
    %c0_30 = arith.constant 0 : index
    %c0_31 = arith.constant 0 : index
    %23 = vector.load %arg2[%c1_29, %c0_30, %c0_31] : memref<3x64x128xbf16, #tpu.memory_space<vmem>>, vector<1x64x128xbf16>
    %24 = vector.shape_cast %23 : vector<1x64x128xbf16> to vector<64x128xbf16>
    %cst_32 = arith.constant dense<0.000000e+00> : vector<34x128xf32>
    %25 = tpu.matmul %22, %24, %cst_32 {dimension_numbers = #tpu.dot_dimension_numbers<[1], [0], [0], [1], [0, 0, 1, 1], [], []>} : vector<34x64xbf16>, vector<64x128xbf16>, vector<34x128xf32> -> vector<34x128xf32>
    %26 = arith.addf %21, %25 : vector<34x128xf32>
    %c2 = arith.constant 2 : index
    %c0_33 = arith.constant 0 : index
    %27 = vector.load %arg14[%c2, %c0_33] : memref<36x64xbf16, #tpu.memory_space<vmem>>, vector<34x64xbf16>
    %c2_34 = arith.constant 2 : index
    %c0_35 = arith.constant 0 : index
    %c0_36 = arith.constant 0 : index
    %28 = vector.load %arg2[%c2_34, %c0_35, %c0_36] : memref<3x64x128xbf16, #tpu.memory_space<vmem>>, vector<1x64x128xbf16>
    %29 = vector.shape_cast %28 : vector<1x64x128xbf16> to vector<64x128xbf16>
    %cst_37 = arith.constant dense<0.000000e+00> : vector<34x128xf32>
    %30 = tpu.matmul %27, %29, %cst_37 {dimension_numbers = #tpu.dot_dimension_numbers<[1], [0], [0], [1], [0, 0, 1, 1], [], []>} : vector<34x64xbf16>, vector<64x128xbf16>, vector<34x128xf32> -> vector<34x128xf32>
    %31 = arith.addf %26, %30 : vector<34x128xf32>
    %c0_38 = arith.constant 0 : index
    %c0_39 = arith.constant 0 : index
    %32 = vector.load %arg4[%c0_38, %c0_39] : memref<1x128xf32, #tpu.memory_space<vmem>>, vector<1x128xf32>
    %33 = vector.broadcast %32 : vector<1x128xf32> to vector<34x128xf32>
    %34 = arith.addf %31, %33 : vector<34x128xf32>
    %c0_40 = arith.constant 0 : index
    %c0_41 = arith.constant 0 : index
    %35 = vector.load %arg16[%c0_40, %c0_41] : memref<34x128xf32, #tpu.memory_space<vmem>>, vector<34x128xf32>
    tpu.vector_store %arg16[%c0_40, %c0_41], %34 {strides = array<i32>} : memref<34x128xf32, #tpu.memory_space<vmem>>, vector<34x128xf32>,
    %c0_42 = arith.constant 0 : index
    %c0_43 = arith.constant 0 : index
    %36 = vector.load %arg5[%c0_42, %c0_43] : memref<1x128xf32, #tpu.memory_space<vmem>>, vector<1x128xf32>
    %37 = vector.broadcast %36 : vector<1x128xf32> to vector<34x128xf32>
    %38 = arith.mulf %34, %37 : vector<34x128xf32>
    %c0_44 = arith.constant 0 : index
    %c0_45 = arith.constant 0 : index
    %39 = vector.load %arg6[%c0_44, %c0_45] : memref<1x128xf32, #tpu.memory_space<vmem>>, vector<1x128xf32>
    %40 = vector.broadcast %39 : vector<1x128xf32> to vector<34x128xf32>
    %41 = arith.addf %38, %40 : vector<34x128xf32>
    %cst_46 = arith.constant 0.000000e+00 : f32
    %42 = vector.broadcast %cst_46 : f32 to vector<34x128xf32>
    %43 = arith.maximumf %41, %42 : vector<34x128xf32>
    %44 = vector.extract_strided_slice %43 {offsets = [0, 0], sizes = [16, 128], strides = [1, 1]} : vector<34x128xf32> to vector<16x128xf32>
    %45 = arith.truncf %44 : vector<16x128xf32> to vector<16x128xbf16>
    %c1_47 = arith.constant 1 : index
    %c0_48 = arith.constant 0 : index
    %46 = vector.load %arg15[%c1_47, %c0_48] : memref<36x128xbf16, #tpu.memory_space<vmem>>, vector<16x128xbf16>
    tpu.vector_store %arg15[%c1_47, %c0_48], %45 {strides = array<i32>} : memref<36x128xbf16, #tpu.memory_space<vmem>>, vector<16x128xbf16>,
    %47 = vector.extract_strided_slice %43 {offsets = [18, 0], sizes = [16, 128], strides = [1, 1]} : vector<34x128xf32> to vector<16x128xf32>
    %48 = arith.truncf %47 : vector<16x128xf32> to vector<16x128xbf16>
    %c19_49 = arith.constant 19 : index
    %c0_50 = arith.constant 0 : index
    %49 = vector.load %arg15[%c19_49, %c0_50] : memref<36x128xbf16, #tpu.memory_space<vmem>>, vector<16x128xbf16>
    tpu.vector_store %arg15[%c19_49, %c0_50], %48 {strides = array<i32>} : memref<36x128xbf16, #tpu.memory_space<vmem>>, vector<16x128xbf16>,
    %c0_51 = arith.constant 0 : index
    %c0_52 = arith.constant 0 : index
    %50 = vector.load %arg15[%c0_51, %c0_52] : memref<36x128xbf16, #tpu.memory_space<vmem>>, vector<34x128xbf16>
    %c0_53 = arith.constant 0 : index
    %c0_54 = arith.constant 0 : index
    %c0_55 = arith.constant 0 : index
    %51 = vector.load %arg3[%c0_53, %c0_54, %c0_55] : memref<3x128x128xbf16, #tpu.memory_space<vmem>>, vector<1x128x128xbf16>
    %52 = vector.shape_cast %51 : vector<1x128x128xbf16> to vector<128x128xbf16>
    %cst_56 = arith.constant dense<0.000000e+00> : vector<34x128xf32>
    %53 = tpu.matmul %50, %52, %cst_56 {dimension_numbers = #tpu.dot_dimension_numbers<[1], [0], [0], [1], [0, 0, 1, 1], [], []>} : vector<34x128xbf16>, vector<128x128xbf16>, vector<34x128xf32> -> vector<34x128xf32>
    %c1_57 = arith.constant 1 : index
    %c0_58 = arith.constant 0 : index
    %54 = vector.load %arg15[%c1_57, %c0_58] : memref<36x128xbf16, #tpu.memory_space<vmem>>, vector<34x128xbf16>
    %c1_59 = arith.constant 1 : index
    %c0_60 = arith.constant 0 : index
    %c0_61 = arith.constant 0 : index
    %55 = vector.load %arg3[%c1_59, %c0_60, %c0_61] : memref<3x128x128xbf16, #tpu.memory_space<vmem>>, vector<1x128x128xbf16>
    %56 = vector.shape_cast %55 : vector<1x128x128xbf16> to vector<128x128xbf16>
    %cst_62 = arith.constant dense<0.000000e+00> : vector<34x128xf32>
    %57 = tpu.matmul %54, %56, %cst_62 {dimension_numbers = #tpu.dot_dimension_numbers<[1], [0], [0], [1], [0, 0, 1, 1], [], []>} : vector<34x128xbf16>, vector<128x128xbf16>, vector<34x128xf32> -> vector<34x128xf32>
    %58 = arith.addf %53, %57 : vector<34x128xf32>
    %c2_63 = arith.constant 2 : index
    %c0_64 = arith.constant 0 : index
    %59 = vector.load %arg15[%c2_63, %c0_64] : memref<36x128xbf16, #tpu.memory_space<vmem>>, vector<34x128xbf16>
    %c2_65 = arith.constant 2 : index
    %c0_66 = arith.constant 0 : index
    %c0_67 = arith.constant 0 : index
    %60 = vector.load %arg3[%c2_65, %c0_66, %c0_67] : memref<3x128x128xbf16, #tpu.memory_space<vmem>>, vector<1x128x128xbf16>
    %61 = vector.shape_cast %60 : vector<1x128x128xbf16> to vector<128x128xbf16>
    %cst_68 = arith.constant dense<0.000000e+00> : vector<34x128xf32>
    %62 = tpu.matmul %59, %61, %cst_68 {dimension_numbers = #tpu.dot_dimension_numbers<[1], [0], [0], [1], [0, 0, 1, 1], [], []>} : vector<34x128xbf16>, vector<128x128xbf16>, vector<34x128xf32> -> vector<34x128xf32>
    %63 = arith.addf %58, %62 : vector<34x128xf32>
    %c0_69 = arith.constant 0 : index
    %c0_70 = arith.constant 0 : index
    %64 = vector.load %arg7[%c0_69, %c0_70] : memref<1x128xf32, #tpu.memory_space<vmem>>, vector<1x128xf32>
    %65 = vector.broadcast %64 : vector<1x128xf32> to vector<34x128xf32>
    %66 = arith.mulf %63, %65 : vector<34x128xf32>
    %c0_71 = arith.constant 0 : index
    %c0_72 = arith.constant 0 : index
    %67 = vector.load %arg8[%c0_71, %c0_72] : memref<1x128xf32, #tpu.memory_space<vmem>>, vector<1x128xf32>
    %68 = vector.broadcast %67 : vector<1x128xf32> to vector<34x128xf32>
    %69 = arith.addf %66, %68 : vector<34x128xf32>
    %70 = vector.extract_strided_slice %69 {offsets = [0, 0], sizes = [16, 128], strides = [1, 1]} : vector<34x128xf32> to vector<16x128xf32>
    %cst_73 = arith.constant dense<0.000000e+00> : vector<128xf32>
    %71 = vector.multi_reduction <add>, %70, %cst_73 [0] : vector<16x128xf32> to vector<128xf32>
    %72 = vector.shape_cast %71 : vector<128xf32> to vector<1x128xf32>
    %c0_74 = arith.constant 0 : index
    %c0_75 = arith.constant 0 : index
    %73 = vector.load %arg9[%c0_74, %c0_75] : memref<2x128xf32, #tpu.memory_space<vmem>>, vector<2x128xf32>
    %74 = vector.broadcast %72 : vector<1x128xf32> to vector<2x128xf32>
    %75 = arith.mulf %74, %73 : vector<2x128xf32>
    %cst_76 = arith.constant dense<0.000000e+00> : vector<2xf32>
    %76 = vector.multi_reduction <add>, %75, %cst_76 [1] : vector<2x128xf32> to vector<2xf32>
    %77 = vector.shape_cast %76 : vector<2xf32> to vector<2x1xf32>
    %c0_77 = arith.constant 0 : index
    %c0_78 = arith.constant 0 : index
    %78 = vector.load %arg10[%c0_77, %c0_78] : memref<2x1xf32, #tpu.memory_space<vmem>>, vector<2x1xf32>
    %79 = arith.addf %77, %78 : vector<2x1xf32>
    %cst_79 = arith.constant 0.000000e+00 : f32
    %80 = vector.broadcast %cst_79 : f32 to vector<2x1xf32>
    %81 = arith.maximumf %79, %80 : vector<2x1xf32>
    %c0_80 = arith.constant 0 : index
    %c0_81 = arith.constant 0 : index
    %82 = vector.load %arg11[%c0_80, %c0_81] : memref<2x128xf32, #tpu.memory_space<vmem>>, vector<2x128xf32>
    %83 = vector.broadcast %81 : vector<2x1xf32> to vector<2x128xf32>
    %84 = arith.mulf %83, %82 : vector<2x128xf32>
    %cst_82 = arith.constant dense<0.000000e+00> : vector<128xf32>
    %85 = vector.multi_reduction <add>, %84, %cst_82 [0] : vector<2x128xf32> to vector<128xf32>
    %86 = vector.shape_cast %85 : vector<128xf32> to vector<1x128xf32>
    %c0_83 = arith.constant 0 : index
    %c0_84 = arith.constant 0 : index
    %87 = vector.load %arg12[%c0_83, %c0_84] : memref<1x128xf32, #tpu.memory_space<vmem>>, vector<1x128xf32>
    %88 = arith.addf %86, %87 : vector<1x128xf32>
    %89 = arith.negf %88 : vector<1x128xf32>
    %90 = math.exp %89 : vector<1x128xf32>
    %cst_85 = arith.constant 1.000000e+00 : f32
    %91 = vector.broadcast %cst_85 : f32 to vector<1x128xf32>
    %92 = arith.addf %91, %90 : vector<1x128xf32>
    %93 = arith.divf %91, %92 : vector<1x128xf32>
    %94 = vector.broadcast %93 : vector<1x128xf32> to vector<16x128xf32>
    %95 = arith.mulf %70, %94 : vector<16x128xf32>
    %c0_86 = arith.constant 0 : index
    %c0_87 = arith.constant 0 : index
    %96 = vector.load %arg16[%c0_86, %c0_87] : memref<34x128xf32, #tpu.memory_space<vmem>>, vector<16x128xf32>
    %97 = arith.addf %95, %96 : vector<16x128xf32>
    %cst_88 = arith.constant 0.000000e+00 : f32
    %98 = vector.broadcast %cst_88 : f32 to vector<16x128xf32>
    %99 = arith.maximumf %97, %98 : vector<16x128xf32>
    %100 = arith.truncf %99 : vector<16x128xf32> to vector<16x128xbf16>
    %c0_89 = arith.constant 0 : index
    %c0_90 = arith.constant 0 : index
    %c0_91 = arith.constant 0 : index
    %101 = vector.load %arg13[%c0_89, %c0_90, %c0_91] : memref<2x16x128xbf16, #tpu.memory_space<vmem>>, vector<1x16x128xbf16>
    %102 = vector.shape_cast %101 : vector<1x16x128xbf16> to vector<16x128xbf16>
    %103 = vector.shape_cast %100 : vector<16x128xbf16> to vector<1x16x128xbf16>
    tpu.vector_store %arg13[%c0_89, %c0_90, %c0_91], %103 {strides = array<i32>} : memref<2x16x128xbf16, #tpu.memory_space<vmem>>, vector<1x16x128xbf16>,
    %104 = vector.extract_strided_slice %69 {offsets = [18, 0], sizes = [16, 128], strides = [1, 1]} : vector<34x128xf32> to vector<16x128xf32>
    %cst_92 = arith.constant dense<0.000000e+00> : vector<128xf32>
    %105 = vector.multi_reduction <add>, %104, %cst_92 [0] : vector<16x128xf32> to vector<128xf32>
    %106 = vector.shape_cast %105 : vector<128xf32> to vector<1x128xf32>
    %c0_93 = arith.constant 0 : index
    %c0_94 = arith.constant 0 : index
    %107 = vector.load %arg9[%c0_93, %c0_94] : memref<2x128xf32, #tpu.memory_space<vmem>>, vector<2x128xf32>
    %108 = vector.broadcast %106 : vector<1x128xf32> to vector<2x128xf32>
    %109 = arith.mulf %108, %107 : vector<2x128xf32>
    %cst_95 = arith.constant dense<0.000000e+00> : vector<2xf32>
    %110 = vector.multi_reduction <add>, %109, %cst_95 [1] : vector<2x128xf32> to vector<2xf32>
    %111 = vector.shape_cast %110 : vector<2xf32> to vector<2x1xf32>
    %c0_96 = arith.constant 0 : index
    %c0_97 = arith.constant 0 : index
    %112 = vector.load %arg10[%c0_96, %c0_97] : memref<2x1xf32, #tpu.memory_space<vmem>>, vector<2x1xf32>
    %113 = arith.addf %111, %112 : vector<2x1xf32>
    %cst_98 = arith.constant 0.000000e+00 : f32
    %114 = vector.broadcast %cst_98 : f32 to vector<2x1xf32>
    %115 = arith.maximumf %113, %114 : vector<2x1xf32>
    %c0_99 = arith.constant 0 : index
    %c0_100 = arith.constant 0 : index
    %116 = vector.load %arg11[%c0_99, %c0_100] : memref<2x128xf32, #tpu.memory_space<vmem>>, vector<2x128xf32>
    %117 = vector.broadcast %115 : vector<2x1xf32> to vector<2x128xf32>
    %118 = arith.mulf %117, %116 : vector<2x128xf32>
    %cst_101 = arith.constant dense<0.000000e+00> : vector<128xf32>
    %119 = vector.multi_reduction <add>, %118, %cst_101 [0] : vector<2x128xf32> to vector<128xf32>
    %120 = vector.shape_cast %119 : vector<128xf32> to vector<1x128xf32>
    %c0_102 = arith.constant 0 : index
    %c0_103 = arith.constant 0 : index
    %121 = vector.load %arg12[%c0_102, %c0_103] : memref<1x128xf32, #tpu.memory_space<vmem>>, vector<1x128xf32>
    %122 = arith.addf %120, %121 : vector<1x128xf32>
    %123 = arith.negf %122 : vector<1x128xf32>
    %124 = math.exp %123 : vector<1x128xf32>
    %cst_104 = arith.constant 1.000000e+00 : f32
    %125 = vector.broadcast %cst_104 : f32 to vector<1x128xf32>
    %126 = arith.addf %125, %124 : vector<1x128xf32>
    %127 = arith.divf %125, %126 : vector<1x128xf32>
    %128 = vector.broadcast %127 : vector<1x128xf32> to vector<16x128xf32>
    %129 = arith.mulf %104, %128 : vector<16x128xf32>
    %c18_105 = arith.constant 18 : index
    %c0_106 = arith.constant 0 : index
    %130 = vector.load %arg16[%c18_105, %c0_106] : memref<34x128xf32, #tpu.memory_space<vmem>>, vector<16x128xf32>
    %131 = arith.addf %129, %130 : vector<16x128xf32>
    %cst_107 = arith.constant 0.000000e+00 : f32
    %132 = vector.broadcast %cst_107 : f32 to vector<16x128xf32>
    %133 = arith.maximumf %131, %132 : vector<16x128xf32>
    %134 = arith.truncf %133 : vector<16x128xf32> to vector<16x128xbf16>
    %c1_108 = arith.constant 1 : index
    %c0_109 = arith.constant 0 : index
    %c0_110 = arith.constant 0 : index
    %135 = vector.load %arg13[%c1_108, %c0_109, %c0_110] : memref<2x16x128xbf16, #tpu.memory_space<vmem>>, vector<1x16x128xbf16>
    %136 = vector.shape_cast %135 : vector<1x16x128xbf16> to vector<16x128xbf16>
    %137 = vector.shape_cast %134 : vector<16x128xbf16> to vector<1x16x128xbf16>
    tpu.vector_store %arg13[%c1_108, %c0_109, %c0_110], %137 {strides = array<i32>} : memref<2x16x128xbf16, #tpu.memory_space<vmem>>, vector<1x16x128xbf16>,
    return
  }
  func.func @transform_0(%arg0: i32) -> (i32, i32, i32) {
    %c0_i32 = arith.constant 0 : i32
    %c0_i32_0 = arith.constant 0 : i32
    %c0_i32_1 = arith.constant 0 : i32
    return %arg0, %c0_i32, %c0_i32_0 : i32, i32, i32
  }
  func.func @transform_1(%arg0: i32) -> (i32, i32, i32) {
    %c0_i32 = arith.constant 0 : i32
    %c0_i32_0 = arith.constant 0 : i32
    %c0_i32_1 = arith.constant 0 : i32
    %c0_i32_2 = arith.constant 0 : i32
    return %c0_i32, %c0_i32_0, %c0_i32_1 : i32, i32, i32
  }
  func.func @transform_2(%arg0: i32) -> (i32, i32, i32) {
    %c0_i32 = arith.constant 0 : i32
    %c0_i32_0 = arith.constant 0 : i32
    %c0_i32_1 = arith.constant 0 : i32
    %c0_i32_2 = arith.constant 0 : i32
    return %c0_i32, %c0_i32_0, %c0_i32_1 : i32, i32, i32
  }
  func.func @transform_3(%arg0: i32) -> (i32, i32) {
    %c0_i32 = arith.constant 0 : i32
    %c0_i32_0 = arith.constant 0 : i32
    %c0_i32_1 = arith.constant 0 : i32
    return %c0_i32, %c0_i32_0 : i32, i32
  }
  func.func @transform_4(%arg0: i32) -> (i32, i32) {
    %c0_i32 = arith.constant 0 : i32
    %c0_i32_0 = arith.constant 0 : i32
    %c0_i32_1 = arith.constant 0 : i32
    return %c0_i32, %c0_i32_0 : i32, i32
  }
  func.func @transform_5(%arg0: i32) -> (i32, i32) {
    %c0_i32 = arith.constant 0 : i32
    %c0_i32_0 = arith.constant 0 : i32
    %c0_i32_1 = arith.constant 0 : i32
    return %c0_i32, %c0_i32_0 : i32, i32
  }
  func.func @transform_6(%arg0: i32) -> (i32, i32) {
    %c0_i32 = arith.constant 0 : i32
    %c0_i32_0 = arith.constant 0 : i32
    %c0_i32_1 = arith.constant 0 : i32
    return %c0_i32, %c0_i32_0 : i32, i32
  }
  func.func @transform_7(%arg0: i32) -> (i32, i32) {
    %c0_i32 = arith.constant 0 : i32
    %c0_i32_0 = arith.constant 0 : i32
    %c0_i32_1 = arith.constant 0 : i32
    return %c0_i32, %c0_i32_0 : i32, i32
  }
  func.func @transform_8(%arg0: i32) -> (i32, i32) {
    %c0_i32 = arith.constant 0 : i32
    %c0_i32_0 = arith.constant 0 : i32
    %c0_i32_1 = arith.constant 0 : i32
    return %c0_i32, %c0_i32_0 : i32, i32
  }
  func.func @transform_9(%arg0: i32) -> (i32, i32) {
    %c0_i32 = arith.constant 0 : i32
    %c0_i32_0 = arith.constant 0 : i32
    %c0_i32_1 = arith.constant 0 : i32
    return %c0_i32, %c0_i32_0 : i32, i32
  }
  func.func @transform_10(%arg0: i32) -> (i32, i32) {
    %c0_i32 = arith.constant 0 : i32
    %c0_i32_0 = arith.constant 0 : i32
    %c0_i32_1 = arith.constant 0 : i32
    return %c0_i32, %c0_i32_0 : i32, i32
  }
  func.func @transform_11(%arg0: i32) -> (i32, i32) {
    %c0_i32 = arith.constant 0 : i32
    %c0_i32_0 = arith.constant 0 : i32
    %c0_i32_1 = arith.constant 0 : i32
    return %c0_i32, %c0_i32_0 : i32, i32
  }
  func.func @transform_12(%arg0: i32) -> (i32, i32, i32) {
    %c0_i32 = arith.constant 0 : i32
    %c0_i32_0 = arith.constant 0 : i32
    %c0_i32_1 = arith.constant 0 : i32
    return %arg0, %c0_i32, %c0_i32_0 : i32, i32, i32
  }
}

</mosaic_0001>

<llo_original>
// kernel: tpu_custom_call.1
$region0: #{tpu_custom_call.1}
  #allocation0 [shape = 'u32[]', space=smem, size = 0x4, offset = 0x4, fixed_abs, tag = 'smem constant byte address 0x4 - core index']
  #allocation1 [shape = 'u32[144,128]{1,0:T(1,128)}', space=vmem, size = 0x12000, scoped, tag = 'internal scratch']
  #allocation2 [shape = 'bf16[36,64]{1,0:T(8,128)(2,1)}', space=vmem, size = 0x2800, scoped, tag = 'scratch operand']
  #allocation3 [shape = 'bf16[36,128]{1,0:T(8,128)(2,1)}', space=vmem, size = 0x2800, scoped, tag = 'scratch operand']
  #allocation4 [shape = 'f32[34,128]{1,0:T(8,128)}', space=vmem, size = 0x5000, scoped, tag = 'scratch operand']
  %s0 = inlined_call_operand.hbm [shape: f32[2,16,64], index: 0, kind: input, shape index: {}]
  %s1 = inlined_call_operand.hbm [shape: bf16[3,64,128], index: 1, kind: input, shape index: {}]
  %s2 = inlined_call_operand.hbm [shape: bf16[3,128,128], index: 2, kind: input, shape index: {}]
  %s3 = inlined_call_operand.vmem [shape: f32[1,128], index: 3, kind: input, shape index: {}]
  %s4 = inlined_call_operand.vmem [shape: f32[1,128], index: 4, kind: input, shape index: {}]
  %s5 = inlined_call_operand.vmem [shape: f32[1,128], index: 5, kind: input, shape index: {}]
  %s6 = inlined_call_operand.vmem [shape: f32[1,128], index: 6, kind: input, shape index: {}]
  %s7 = inlined_call_operand.vmem [shape: f32[1,128], index: 7, kind: input, shape index: {}]
  %s8 = inlined_call_operand.vmem [shape: f32[2,128], index: 8, kind: input, shape index: {}]
  %s9 = inlined_call_operand.vmem [shape: f32[2,1], index: 9, kind: input, shape index: {}]
  %s10 = inlined_call_operand.vmem [shape: f32[2,128], index: 10, kind: input, shape index: {}]
  %s11 = inlined_call_operand.vmem [shape: f32[1,128], index: 11, kind: input, shape index: {}]
  %s12 = inlined_call_operand.hbm [shape: bf16[2,16,128], index: 12, kind: output, shape index: {}]
  %s13 = sld [smem:[#allocation0]]
  $region70: #{tpu_custom_call.1} parent=0
    _
  %s15 = ssub.s32 1, %s13
  %s16 = scalar_select 0, %s15, %s13
  $region1: #{tpu_custom_call.1} parent=0
    #allocation5 [shape = 'u8[16384]{0}', space=vmem, size = 0x4000, scoped, tag = 'input window, operand 0, single buffered']
    #allocation6 [shape = 's32[1]{0}', space=sflag, size = 0x4, scoped, tag = 'scoped memory for tpu_custom_call.1']
    #allocation7 [shape = 's32[1]{0}', space=sflag, size = 0x4, scoped, tag = 'scoped memory for tpu_custom_call.1']
    #allocation8 [shape = 'u8[49152]{0}', space=vmem, size = 0xc000, scoped, tag = 'input window, operand 1, single buffered']
    #allocation9 [shape = 's32[1]{0}', space=sflag, size = 0x4, scoped, tag = 'scoped memory for tpu_custom_call.1']
    #allocation10 [shape = 'u8[98304]{0}', space=vmem, size = 0x18000, scoped, tag = 'input window, operand 2, single buffered']
    #allocation11 [shape = 'u8[8192]{0}', space=vmem, size = 0x2000, scoped, tag = 'output window, operand 0, single buffered']
    %17 = vsyncpa [#allocation6], 0
    %18 = vsyncpa [#allocation9], 0
    %19 = vsyncpa [#allocation7], 0
    // Predicated region
    $region2: #{tpu_custom_call.1} parent=1 // pred_check
      _
    $region3: #{tpu_custom_call.1} parent=1 // pred_check_branch
      %21 = sbr.rel (0) target = $region5
    $region4: #{tpu_custom_call.1} parent=1 // pred_region
      %s23 = ssub.s32 512, 512
      %24 = vsyncadd [#allocation6], %s23
      %s25 = sshll.u32 [#allocation5], 4
      %s26 = int_to_ptr.vmem [resolvable:$true] %s25
      %31 = dma.hbm_to_vmem [thread:$0]  %s0, 512, %s26, [#allocation6], 128, 128, 8
    $region5: #{tpu_custom_call.1} parent=1 // pred_fallthru
      _
    // Predicated region
    $region6: #{tpu_custom_call.1} parent=1 // pred_check
      _
    $region7: #{tpu_custom_call.1} parent=1 // pred_check_branch
      %33 = sbr.rel (0) target = $region9
    $region8: #{tpu_custom_call.1} parent=1 // pred_region
      %s35 = ssub.s32 1536, 1536
      %36 = vsyncadd [#allocation9], %s35
      %s37 = sshll.u32 [#allocation8], 4
      %s38 = int_to_ptr.vmem [resolvable:$true] %s37
      %43 = dma.hbm_to_vmem [thread:$0]  %s1, 1536, %s38, [#allocation9], 64, 64, 4
    $region9: #{tpu_custom_call.1} parent=1 // pred_fallthru
      _
    // Predicated region
    $region10: #{tpu_custom_call.1} parent=1 // pred_check
      _
    $region11: #{tpu_custom_call.1} parent=1 // pred_check_branch
      %45 = sbr.rel (0) target = $region13
    $region12: #{tpu_custom_call.1} parent=1 // pred_region
      %s47 = ssub.s32 3072, 3072
      %48 = vsyncadd [#allocation9], %s47
      %s49 = sshll.u32 [#allocation10], 4
      %s50 = int_to_ptr.vmem [resolvable:$true] %s49
      %55 = dma.hbm_to_vmem [thread:$0]  %s2, 3072, %s50, [#allocation9], 64, 64, 4
    $region13: #{tpu_custom_call.1} parent=1 // pred_fallthru
      _
    // Predicated region
    $region14: #{tpu_custom_call.1} parent=1 // pred_check
      _
    $region15: #{tpu_custom_call.1} parent=1 // pred_check_branch
      %57 = sbr.rel (0) target = $region17
    $region16: #{tpu_custom_call.1} parent=1 // pred_region
      _
    $region17: #{tpu_custom_call.1} parent=1 // pred_fallthru
      _
    // Predicated region
    $region18: #{tpu_custom_call.1} parent=1 // pred_check
      _
    $region19: #{tpu_custom_call.1} parent=1 // pred_check_branch
      %59 = sbr.rel (0) target = $region21
    $region20: #{tpu_custom_call.1} parent=1 // pred_region
      _
    $region21: #{tpu_custom_call.1} parent=1 // pred_fallthru
      _
    // Predicated region
    $region22: #{tpu_custom_call.1} parent=1 // pred_check
      _
    $region23: #{tpu_custom_call.1} parent=1 // pred_check_branch
      %61 = sbr.rel (0) target = $region25
    $region24: #{tpu_custom_call.1} parent=1 // pred_region
      _
    $region25: #{tpu_custom_call.1} parent=1 // pred_fallthru
      _
    // Predicated region
    $region26: #{tpu_custom_call.1} parent=1 // pred_check
      _
    $region27: #{tpu_custom_call.1} parent=1 // pred_check_branch
      %63 = sbr.rel (0) target = $region29
    $region28: #{tpu_custom_call.1} parent=1 // pred_region
      _
    $region29: #{tpu_custom_call.1} parent=1 // pred_fallthru
      _
    // Predicated region
    $region30: #{tpu_custom_call.1} parent=1 // pred_check
      _
    $region31: #{tpu_custom_call.1} parent=1 // pred_check_branch
      %65 = sbr.rel (0) target = $region33
    $region32: #{tpu_custom_call.1} parent=1 // pred_region
      _
    $region33: #{tpu_custom_call.1} parent=1 // pred_fallthru
      _
    // Predicated region
    $region34: #{tpu_custom_call.1} parent=1 // pred_check
      _
    $region35: #{tpu_custom_call.1} parent=1 // pred_check_branch
      %67 = sbr.rel (0) target = $region37
    $region36: #{tpu_custom_call.1} parent=1 // pred_region
      _
    $region37: #{tpu_custom_call.1} parent=1 // pred_fallthru
      _
    // Predicated region
    $region38: #{tpu_custom_call.1} parent=1 // pred_check
      _
    $region39: #{tpu_custom_call.1} parent=1 // pred_check_branch
      %69 = sbr.rel (0) target = $region41
    $region40: #{tpu_custom_call.1} parent=1 // pred_region
      _
    $region41: #{tpu_custom_call.1} parent=1 // pred_fallthru
      _
    // Predicated region
    $region42: #{tpu_custom_call.1} parent=1 // pred_check
      _
    $region43: #{tpu_custom_call.1} parent=1 // pred_check_branch
      %71 = sbr.rel (0) target = $region45
    $region44: #{tpu_custom_call.1} parent=1 // pred_region
      _
    $region45: #{tpu_custom_call.1} parent=1 // pred_fallthru
      _
    // Predicated region
    $region46: #{tpu_custom_call.1} parent=1 // pred_check
      _
    $region47: #{tpu_custom_call.1} parent=1 // pred_check_branch
      %73 = sbr.rel (0) target = $region49
    $region48: #{tpu_custom_call.1} parent=1 // pred_region
      _
    $region49: #{tpu_custom_call.1} parent=1 // pred_fallthru
      _
    // Predicated region
    $region50: #{tpu_custom_call.1} parent=1 // pred_check
      _
    $region51: #{tpu_custom_call.1} parent=1 // pred_check_branch
      %75 = sbr.rel (0) target = $region53
    $region52: #{tpu_custom_call.1} parent=1 // pred_region
      %76 = dma.done [#allocation6], 512
    $region53: #{tpu_custom_call.1} parent=1 // pred_fallthru
      _
    // Predicated region
    $region54: #{tpu_custom_call.1} parent=1 // pred_check
      _
    $region55: #{tpu_custom_call.1} parent=1 // pred_check_branch
      %78 = sbr.rel (0) target = $region57
    $region56: #{tpu_custom_call.1} parent=1 // pred_region
      %79 = dma.done [#allocation9], 1536
    $region57: #{tpu_custom_call.1} parent=1 // pred_fallthru
      _
    // Predicated region
    $region58: #{tpu_custom_call.1} parent=1 // pred_check
      _
    $region59: #{tpu_custom_call.1} parent=1 // pred_check_branch
      %81 = sbr.rel (0) target = $region61
    $region60: #{tpu_custom_call.1} parent=1 // pred_region
      %82 = dma.done [#allocation9], 3072
    $region61: #{tpu_custom_call.1} parent=1 // pred_fallthru
      _
    %vm84 = vcmask 516096
    %vm85 = vsmask.f32 256
    %vm86 = vmand %vm84, %vm85
    %v87 = vld [vmem:[#allocation2] sm:$0x1]
    %v88 = vsel %vm86, 0, %v87
    %89 = vst [vmem:[#allocation2] sm:$0x1] %v88
    %v90 = vld [vmem:[#allocation5] sm:$0xff]
    %v91 = vld [vmem:[#allocation5 + $0x8] sm:$0xff]
    %v92 = vpack.c.bf16 %v91, %v90
    %v94 = vunpack.c.l.b16 %v92
    %v95 = vunpack.c.h.b16 %v92
    %v96 = vpack.c.b16 %v94, %v94
    %v97 = vpack.c.b16 %v95, %v95
    %vm98 = vsmask.f32 4368
    %vm99 = vmor %vm85, %vm98
    %v101 = vshrl.u32 %v96, 16
    %v103 = vrot.slane %v101, 7
    %v104 = vshll.u32 %v96, 16
    %v106 = vor.u32 %v103, %v104
    %v107 = vrot.slane %v103, 4
    %v109 = vshrl.u32 %v97, 16
    %v111 = vrot.slane %v109, 7
    %v112 = vshll.u32 %v97, 16
    %v114 = vor.u32 %v111, %v112
    %v115 = vsel %vm99, %v107, %v114
    %v116 = vrot.slane %v111, 4
    %vm120 = vcmask 519168
    %vm121 = vsmask.f32 7938
    %vm122 = vmand %vm120, %vm121
    %v123 = vld [vmem:[#allocation2] sm:$0xf]
    %v124 = vsel %vm122, %v106, %v123
    %125 = vst [vmem:[#allocation2] sm:$0xf] %v124
    %vm126 = vcmask 519168
    %127 = vst.msk [vmem:[#allocation2 + $0x4] sm:$0xf] %vm126, %v115
    %v128 = vld [vmem:[#allocation2 + $0x8] sm:$0x1]
    %v129 = vsel %vm86, %v116, %v128
    %130 = vst [vmem:[#allocation2 + $0x8] sm:$0x1] %v129
    %vm131 = vmand %vm84, %vm121
    %v132 = vld [vmem:[#allocation2 + $0x8] sm:$0x1]
    %v133 = vsel %vm131, 0, %v132
    %134 = vst [vmem:[#allocation2 + $0x8] sm:$0x1] %v133
    %vm135 = vcmask 1040384
    %vm136 = vmand %vm135, %vm85
    %v137 = vld [vmem:[#allocation3] sm:$0x1]
    %v138 = vsel %vm136, 0, %v137
    %139 = vst [vmem:[#allocation3] sm:$0x1] %v138
    %vm140 = vmand %vm135, %vm121
    %v141 = vld [vmem:[#allocation3 + $0x8] sm:$0x1]
    %v142 = vsel %vm140, 0, %v141
    %143 = vst [vmem:[#allocation3 + $0x8] sm:$0x1] %v142
    %vm144 = vcmask 517121
    %vm145 = vsmask.f32 1280
    %vm146 = vmand %vm144, %vm145
    %v147 = vld [vmem:[#allocation2 + $0x8] sm:$0x2]
    %v148 = vsel %vm146, 0, %v147
    %149 = vst [vmem:[#allocation2 + $0x8] sm:$0x2] %v148
    %s150 = scalar_lea.vmem [#allocation5], 16
    %v151 = vld [vmem:[%s150] sm:$0xff]
    %v152 = vld [vmem:[%s150 + $0x8] sm:$0xff]
    %v153 = vpack.c.bf16 %v152, %v151
    %v155 = vunpack.c.l.b16 %v153
    %v156 = vunpack.c.h.b16 %v153
    %v157 = vpack.c.b16 %v155, %v155
    %v158 = vpack.c.b16 %v156, %v156
    %vm159 = vsmask.f32 5392
    %vm160 = vmor %vm145, %vm159
    %v162 = vshrl.u32 %v157, 16
    %v164 = vrot.slane %v162, 6
    %v165 = vshll.u32 %v157, 16
    %v167 = vrot.slane %v165, 7
    %v168 = vor.u32 %v164, %v167
    %v169 = vrot.slane %v168, 4
    %v171 = vshrl.u32 %v158, 16
    %v173 = vrot.slane %v171, 6
    %v174 = vshll.u32 %v158, 16
    %v176 = vrot.slane %v174, 7
    %v177 = vor.u32 %v173, %v176
    %v178 = vsel %vm160, %v169, %v177
    %v179 = vrot.slane %v177, 4
    %vm183 = vcmask 519169
    %vm184 = vsmask.f32 7942
    %vm185 = vmand %vm183, %vm184
    %v186 = vld [vmem:[#allocation2 + $0x8] sm:$0xe]
    %v187 = vsel %vm185, %v168, %v186
    %188 = vst [vmem:[#allocation2 + $0x8] sm:$0xe] %v187
    %189 = vst.msk [vmem:[#allocation2 + $0xc] sm:$0xf] %vm126, %v178
    %vm190 = vcmask 517120
    %vm191 = vmand %vm190, %vm145
    %v192 = vld [vmem:[#allocation2 + $0x10] sm:$0x3]
    %v193 = vsel %vm191, %v179, %v192
    %194 = vst [vmem:[#allocation2 + $0x10] sm:$0x3] %v193
    %vm195 = vmand %vm144, %vm184
    %v196 = vld [vmem:[#allocation2 + $0x10] sm:$0x2]
    %v197 = vsel %vm195, 0, %v196
    %198 = vst [vmem:[#allocation2 + $0x10] sm:$0x2] %v197
    %vm199 = vcmask 1041409
    %vm200 = vmand %vm199, %vm145
    %v201 = vld [vmem:[#allocation3 + $0x8] sm:$0x2]
    %v202 = vsel %vm200, 0, %v201
    %203 = vst [vmem:[#allocation3 + $0x8] sm:$0x2] %v202
    %vm204 = vmand %vm199, %vm184
    %v205 = vld [vmem:[#allocation3 + $0x10] sm:$0x2]
    %v206 = vsel %vm204, 0, %v205
    %207 = vst [vmem:[#allocation3 + $0x10] sm:$0x2] %v206
    %v208 = vld [vmem:[#allocation2] sm:$0xf]
    %v209 = vld [vmem:[#allocation2 + $0x4] sm:$0xf]
    %v210 = vld [vmem:[#allocation2 + $0x8] sm:$0xf]
    %v211 = vld [vmem:[#allocation2 + $0xc] sm:$0xf]
    %v212 = vld [vmem:[#allocation2 + $0x10] sm:$0x1]
    %v213 = vld [vmem:[#allocation8] sm:$0xf]
    %v214 = vld [vmem:[#allocation8 + $0x4] sm:$0xf]
    %v215 = vld [vmem:[#allocation8 + $0x8] sm:$0xf]
    %v216 = vld [vmem:[#allocation8 + $0xc] sm:$0xf]
    %v217 = vld [vmem:[#allocation8 + $0x10] sm:$0xf]
    %v218 = vld [vmem:[#allocation8 + $0x14] sm:$0xf]
    %v219 = vld [vmem:[#allocation8 + $0x18] sm:$0xf]
    %v220 = vld [vmem:[#allocation8 + $0x1c] sm:$0xf]
    %v221 = vld [vmem:[#allocation2 + $0x10] sm:$0x3]
    %s222 = scalar_lea.vmem [#allocation8], 32
    %v223 = vld [vmem:[%s222] sm:$0xf]
    %v224 = vld [vmem:[%s222 + $0x4] sm:$0xf]
    %v225 = vld [vmem:[%s222 + $0x8] sm:$0xf]
    %v226 = vld [vmem:[%s222 + $0xc] sm:$0xf]
    %v227 = vld [vmem:[%s222 + $0x10] sm:$0xf]
    %v228 = vld [vmem:[%s222 + $0x14] sm:$0xf]
    %v229 = vld [vmem:[%s222 + $0x18] sm:$0xf]
    %v230 = vld [vmem:[%s222 + $0x1c] sm:$0xf]
    %v236 = vunpack.c.l.b16 %v208
    %v237 = vunpack.c.l.b16 %v209
    %v238 = vunpack.c.l.b16 %v210
    %v239 = vunpack.c.l.b16 %v211
    %v240 = vunpack.c.l.b16 %v221
    %v241 = vpack.c.b16 %v237, %v236
    %v242 = vpack.c.b16 %v239, %v238
    %v243 = vpack.c.b16 %v240, %v240
    %vm244 = vsmask.f32 7424
    %v246 = vshrl.u32 %v241, 16
    %v248 = vshll.u32 %v241, 16
    %v250 = vrot.slane %v248, 1
    %v251 = vor.u32 %v246, %v250
    %v253 = vshll.u32 %v242, 16
    %v255 = vrot.slane %v253, 1
    %v256 = vsel %vm244, %v251, %v255
    %v257 = vshrl.u32 %v242, 16
    %v259 = vor.u32 %v257, %v255
    %v261 = vshll.u32 %v243, 16
    %v263 = vrot.slane %v261, 1
    %v264 = vsel %vm244, %v259, %v263
    %v265 = vshrl.u32 %v243, 16
    %v267 = vor.u32 %v265, %v263
    %v276 = vunpack.c.l.b16 %v223
    %v277 = vunpack.c.l.b16 %v224
    %v278 = vunpack.c.l.b16 %v225
    %v279 = vunpack.c.l.b16 %v226
    %v280 = vunpack.c.l.b16 %v227
    %v281 = vunpack.c.l.b16 %v228
    %v282 = vunpack.c.l.b16 %v229
    %v283 = vunpack.c.l.b16 %v230
    %v284 = vpack.c.b16 %v277, %v276
    %v285 = vpack.c.b16 %v279, %v278
    %v286 = vpack.c.b16 %v281, %v280
    %v287 = vpack.c.b16 %v283, %v282
    %vm292 = vcmask 523264
    %v294 = vsel %vm292, %v256, 0
    %v297 = vsel %vm292, %v264, 0
    %v300 = vsel %vm292, %v267, 0
    %302 = vmatprep.subr.bf16.mxu0 0
    %303 = vmatpush1.bf16.msra.mxu0 %v284
    %304 = vmatprep.subr.bf16.mxu0 0
    %305 = vmatpush1.bf16.msra.mxu0 %v285
    %306 = vmatprep.subr.bf16.mxu0 0
    %307 = vmatpush1.bf16.msra.mxu0 %v286
    %308 = vmatprep.subr.bf16.mxu0 0
    %309 = vmatpush1.bf16.msra.mxu0 %v287
    %310 = vmatprep.subr.bf16.mxu0 0
    %311 = vmatpush1.bf16.msra.mxu0 0
    %312 = vmatprep.subr.bf16.mxu0 0
    %313 = vmatpush1.bf16.msra.mxu0 0
    %314 = vmatprep.subr.bf16.mxu0 0
    %315 = vmatpush1.bf16.msra.mxu0 0
    %316 = vmatprep.subr.bf16.mxu0 0
    %317 = vmatpush1.bf16.msra.mxu0 0
    %318 = vmatprep.subr.bf16.mxu0 0
    %319 = vmatpush1.bf16.msra.mxu0 0
    %320 = vmatprep.subr.bf16.mxu0 0
    %321 = vmatpush1.bf16.msra.mxu0 0
    %322 = vmatprep.subr.bf16.mxu0 0
    %323 = vmatpush1.bf16.msra.mxu0 0
    %324 = vmatprep.subr.bf16.mxu0 0
    %325 = vmatpush1.bf16.msra.mxu0 0
    %326 = vmatprep.subr.bf16.mxu0 0
    %327 = vmatpush1.bf16.msra.mxu0 0
    %328 = vmatprep.subr.bf16.mxu0 0
    %329 = vmatpush1.bf16.msra.mxu0 0
    %330 = vmatprep.subr.bf16.mxu0 0
    %331 = vmatpush1.bf16.msra.mxu0 0
    %332 = vmatprep.subr.bf16.mxu0 0
    %333 = vmatpush1.bf16.msra.mxu0 0
    %334 = vmatprep.mubr.bf16.mxu0 0
    %335 = vmatmul.mubr.bf16.gmra.mrb[0].mxu0 %v294
    %v336 = vpop.f32.mrb[0].mxu0
    %v337 = vadd.f32 0.0, %v336
    %v338 = vpop.f32.mrb[0].mxu0
    %v339 = vpop.f32.mrb[0].mxu0
    %v340 = vadd.f32 0.0, %v339
    %v341 = vpop.f32.mrb[0].mxu0
    %342 = vmatprep.mubr.bf16.mxu0 0
    %343 = vmatmul.mubr.bf16.gmra.mrb[0].mxu0 %v297
    %v344 = vpop.f32.mrb[0].mxu0
    %v345 = vadd.f32 0.0, %v344
    %v346 = vpop.f32.mrb[0].mxu0
    %v347 = vpop.f32.mrb[0].mxu0
    %v348 = vadd.f32 0.0, %v347
    %v349 = vpop.f32.mrb[0].mxu0
    %350 = vmatprep.mubr.bf16.mxu0 0
    %351 = vmatmul.mubr.bf16.gmra.mrb[0].mxu0 %v300
    %v352 = vpop.f32.mrb[0].mxu0
    %v353 = vadd.f32 0.0, %v352
    %v354 = vpop.f32.mrb[0].mxu0
    %v355 = vpop.f32.mrb[0].mxu0
    %v356 = vpop.f32.mrb[0].mxu0
    %357 = vdwg.mxu0
    %v359 = vunpack.c.l.b16 %v212
    %v360 = vpack.c.b16 %v359, %v359
    %v369 = vunpack.c.l.b16 %v213
    %v370 = vunpack.c.l.b16 %v214
    %v371 = vunpack.c.l.b16 %v215
    %v372 = vunpack.c.l.b16 %v216
    %v373 = vunpack.c.l.b16 %v217
    %v374 = vunpack.c.l.b16 %v218
    %v375 = vunpack.c.l.b16 %v219
    %v376 = vunpack.c.l.b16 %v220
    %v377 = vpack.c.b16 %v370, %v369
    %v378 = vpack.c.b16 %v372, %v371
    %v379 = vpack.c.b16 %v374, %v373
    %v380 = vpack.c.b16 %v376, %v375
    %v385 = vsel %vm292, %v241, 0
    %v387 = vsel %vm292, %v242, 0
    %v390 = vsel %vm292, %v360, 0
    %392 = vmatprep.subr.bf16.mxu0 0
    %393 = vmatpush1.bf16.msra.mxu0 %v377
    %394 = vmatprep.subr.bf16.mxu0 0
    %395 = vmatpush1.bf16.msra.mxu0 %v378
    %396 = vmatprep.subr.bf16.mxu0 0
    %397 = vmatpush1.bf16.msra.mxu0 %v379
    %398 = vmatprep.subr.bf16.mxu0 0
    %399 = vmatpush1.bf16.msra.mxu0 %v380
    %400 = vmatprep.subr.bf16.mxu0 0
    %401 = vmatpush1.bf16.msra.mxu0 0
    %402 = vmatprep.subr.bf16.mxu0 0
    %403 = vmatpush1.bf16.msra.mxu0 0
    %404 = vmatprep.subr.bf16.mxu0 0
    %405 = vmatpush1.bf16.msra.mxu0 0
    %406 = vmatprep.subr.bf16.mxu0 0
    %407 = vmatpush1.bf16.msra.mxu0 0
    %408 = vmatprep.subr.bf16.mxu0 0
    %409 = vmatpush1.bf16.msra.mxu0 0
    %410 = vmatprep.subr.bf16.mxu0 0
    %411 = vmatpush1.bf16.msra.mxu0 0
    %412 = vmatprep.subr.bf16.mxu0 0
    %413 = vmatpush1.bf16.msra.mxu0 0
    %414 = vmatprep.subr.bf16.mxu0 0
    %415 = vmatpush1.bf16.msra.mxu0 0
    %416 = vmatprep.subr.bf16.mxu0 0
    %417 = vmatpush1.bf16.msra.mxu0 0
    %418 = vmatprep.subr.bf16.mxu0 0
    %419 = vmatpush1.bf16.msra.mxu0 0
    %420 = vmatprep.subr.bf16.mxu0 0
    %421 = vmatpush1.bf16.msra.mxu0 0
    %422 = vmatprep.subr.bf16.mxu0 0
    %423 = vmatpush1.bf16.msra.mxu0 0
    %424 = vmatprep.mubr.bf16.mxu0 0
    %425 = vmatmul.mubr.bf16.gmra.mrb[0].mxu0 %v385
    %v426 = vpop.f32.mrb[0].mxu0
    %v427 = vadd.f32 %v337, %v426
    %v428 = vpop.f32.mrb[0].mxu0
    %v429 = vpop.f32.mrb[0].mxu0
    %v430 = vadd.f32 %v340, %v429
    %v431 = vpop.f32.mrb[0].mxu0
    %432 = vmatprep.mubr.bf16.mxu0 0
    %433 = vmatmul.mubr.bf16.gmra.mrb[0].mxu0 %v387
    %v434 = vpop.f32.mrb[0].mxu0
    %v435 = vadd.f32 %v345, %v434
    %v436 = vpop.f32.mrb[0].mxu0
    %v437 = vpop.f32.mrb[0].mxu0
    %v438 = vadd.f32 %v348, %v437
    %v439 = vpop.f32.mrb[0].mxu0
    %440 = vmatprep.mubr.bf16.mxu0 0
    %441 = vmatmul.mubr.bf16.gmra.mrb[0].mxu0 %v390
    %v442 = vpop.f32.mrb[0].mxu0
    %v443 = vadd.f32 %v353, %v442
    %v444 = vpop.f32.mrb[0].mxu0
    %v445 = vpop.f32.mrb[0].mxu0
    %v446 = vpop.f32.mrb[0].mxu0
    %447 = vdwg.mxu0
    %v448 = vld [vmem:[#allocation2] sm:$0xe]
    %s449 = scalar_lea.vmem [#allocation8], 64
    %v450 = vld [vmem:[%s449] sm:$0xf]
    %v451 = vld [vmem:[%s449 + $0x4] sm:$0xf]
    %v452 = vld [vmem:[%s449 + $0x8] sm:$0xf]
    %v453 = vld [vmem:[%s449 + $0xc] sm:$0xf]
    %v454 = vld [vmem:[%s449 + $0x10] sm:$0xf]
    %v455 = vld [vmem:[%s449 + $0x14] sm:$0xf]
    %v456 = vld [vmem:[%s449 + $0x18] sm:$0xf]
    %v457 = vld [vmem:[%s449 + $0x1c] sm:$0xf]
    %v459 = vunpack.c.l.b16 %v448
    %v460 = vpack.c.b16 %v237, %v459
    %vm461 = vcmask 1046528
    %v462 = vrot.slane %v460, 1
    %v463 = vrot.slane %v242, 1
    %v464 = vsel %vm461, %v462, %v463
    %v465 = vrot.slane %v243, 1
    %v466 = vsel %vm461, %v463, %v465
    %v475 = vunpack.c.l.b16 %v450
    %v476 = vunpack.c.l.b16 %v451
    %v477 = vunpack.c.l.b16 %v452
    %v478 = vunpack.c.l.b16 %v453
    %v479 = vunpack.c.l.b16 %v454
    %v480 = vunpack.c.l.b16 %v455
    %v481 = vunpack.c.l.b16 %v456
    %v482 = vunpack.c.l.b16 %v457
    %v483 = vpack.c.b16 %v476, %v475
    %v484 = vpack.c.b16 %v478, %v477
    %v485 = vpack.c.b16 %v480, %v479
    %v486 = vpack.c.b16 %v482, %v481
    %v492 = vsel %vm292, %v464, 0
    %v495 = vsel %vm292, %v466, 0
    %v498 = vsel %vm292, %v465, 0
    %500 = vmatprep.subr.bf16.mxu0 0
    %501 = vmatpush1.bf16.msra.mxu0 %v483
    %502 = vmatprep.subr.bf16.mxu0 0
    %503 = vmatpush1.bf16.msra.mxu0 %v484
    %504 = vmatprep.subr.bf16.mxu0 0
    %505 = vmatpush1.bf16.msra.mxu0 %v485
    %506 = vmatprep.subr.bf16.mxu0 0
    %507 = vmatpush1.bf16.msra.mxu0 %v486
    %508 = vmatprep.subr.bf16.mxu0 0
    %509 = vmatpush1.bf16.msra.mxu0 0
    %510 = vmatprep.subr.bf16.mxu0 0
    %511 = vmatpush1.bf16.msra.mxu0 0
    %512 = vmatprep.subr.bf16.mxu0 0
    %513 = vmatpush1.bf16.msra.mxu0 0
    %514 = vmatprep.subr.bf16.mxu0 0
    %515 = vmatpush1.bf16.msra.mxu0 0
    %516 = vmatprep.subr.bf16.mxu0 0
    %517 = vmatpush1.bf16.msra.mxu0 0
    %518 = vmatprep.subr.bf16.mxu0 0
    %519 = vmatpush1.bf16.msra.mxu0 0
    %520 = vmatprep.subr.bf16.mxu0 0
    %521 = vmatpush1.bf16.msra.mxu0 0
    %522 = vmatprep.subr.bf16.mxu0 0
    %523 = vmatpush1.bf16.msra.mxu0 0
    %524 = vmatprep.subr.bf16.mxu0 0
    %525 = vmatpush1.bf16.msra.mxu0 0
    %526 = vmatprep.subr.bf16.mxu0 0
    %527 = vmatpush1.bf16.msra.mxu0 0
    %528 = vmatprep.subr.bf16.mxu0 0
    %529 = vmatpush1.bf16.msra.mxu0 0
    %530 = vmatprep.subr.bf16.mxu0 0
    %531 = vmatpush1.bf16.msra.mxu0 0
    %532 = vmatprep.mubr.bf16.mxu0 0
    %533 = vmatmul.mubr.bf16.gmra.mrb[0].mxu0 %v492
    %v534 = vpop.f32.mrb[0].mxu0
    %v535 = vadd.f32 0.0, %v534
    %v536 = vpop.f32.mrb[0].mxu0
    %v537 = vpop.f32.mrb[0].mxu0
    %v538 = vadd.f32 0.0, %v537
    %v539 = vpop.f32.mrb[0].mxu0
    %540 = vmatprep.mubr.bf16.mxu0 0
    %541 = vmatmul.mubr.bf16.gmra.mrb[0].mxu0 %v495
    %v542 = vpop.f32.mrb[0].mxu0
    %v543 = vadd.f32 0.0, %v542
    %v544 = vpop.f32.mrb[0].mxu0
    %v545 = vpop.f32.mrb[0].mxu0
    %v546 = vadd.f32 0.0, %v545
    %v547 = vpop.f32.mrb[0].mxu0
    %548 = vmatprep.mubr.bf16.mxu0 0
    %549 = vmatmul.mubr.bf16.gmra.mrb[0].mxu0 %v498
    %v550 = vpop.f32.mrb[0].mxu0
    %v551 = vadd.f32 0.0, %v550
    %v552 = vpop.f32.mrb[0].mxu0
    %v553 = vpop.f32.mrb[0].mxu0
    %v554 = vpop.f32.mrb[0].mxu0
    %555 = vdwg.mxu0
    %v556 = vadd.f32 %v427, %v535
    %v557 = vadd.f32 %v430, %v538
    %v558 = vadd.f32 %v435, %v543
    %v559 = vadd.f32 %v438, %v546
    %v560 = vadd.f32 %v443, %v551
    %v561 = vld [vmem:[%s3] sm:$0x1]
    %v563 = vlaneseq
    %v564 = vshrl.u32 %v563, 7
    %v565 = vsub.s32 0, %v564
    %v566 = vrot.slane %v561, %v565
    %v568 = vadd.f32 %v556, %v566
    %v569 = vadd.f32 %v557, %v566
    %v570 = vadd.f32 %v558, %v566
    %v571 = vadd.f32 %v559, %v566
    %v572 = vadd.f32 %v560, %v566
    %573 = vst [vmem:[#allocation4] sm:$0xff] %v568
    %574 = vst [vmem:[#allocation4 + $0x8] sm:$0xff] %v569
    %575 = vst [vmem:[#allocation4 + $0x10] sm:$0xff] %v570
    %576 = vst [vmem:[#allocation4 + $0x18] sm:$0xff] %v571
    %577 = vst [vmem:[#allocation4 + $0x20] sm:$0x3] %v572
    %v578 = vld [vmem:[%s4] sm:$0x1]
    %v580 = vlaneseq
    %v581 = vshrl.u32 %v580, 7
    %v582 = vsub.s32 0, %v581
    %v583 = vrot.slane %v578, %v582
    %v585 = vmul.f32 %v568, %v583
    %v586 = vmul.f32 %v569, %v583
    %v587 = vmul.f32 %v570, %v583
    %v588 = vmul.f32 %v571, %v583
    %v589 = vmul.f32 %v572, %v583
    %v590 = vld [vmem:[%s5] sm:$0x1]
    %v592 = vlaneseq
    %v593 = vshrl.u32 %v592, 7
    %v594 = vsub.s32 0, %v593
    %v595 = vrot.slane %v590, %v594
    %v597 = vadd.f32 %v585, %v595
    %v598 = vadd.f32 %v586, %v595
    %v599 = vadd.f32 %v587, %v595
    %v600 = vadd.f32 %v588, %v595
    %v601 = vadd.f32 %v589, %v595
    %v602 = vmax.f32 %v597, 0.0
    %v603 = vmax.f32 %v598, 0.0
    %v604 = vmax.f32 %v599, 0.0
    %v605 = vmax.f32 %v600, 0.0
    %v606 = vmax.f32 %v601, 0.0
    %v607 = vpack.c.bf16 %v603, %v602
    %v609 = vunpack.c.l.b16 %v607
    %v610 = vunpack.c.h.b16 %v607
    %v611 = vpack.c.b16 %v609, %v609
    %v612 = vpack.c.b16 %v610, %v610
    %v614 = vshrl.u32 %v611, 16
    %v616 = vrot.slane %v614, 7
    %v617 = vshll.u32 %v611, 16
    %v619 = vor.u32 %v616, %v617
    %v620 = vrot.slane %v616, 4
    %v622 = vshrl.u32 %v612, 16
    %v624 = vrot.slane %v622, 7
    %v625 = vshll.u32 %v612, 16
    %v627 = vor.u32 %v624, %v625
    %v628 = vsel %vm99, %v620, %v627
    %v629 = vrot.slane %v624, 4
    %vm633 = vcmask 1043456
    %vm634 = vmand %vm633, %vm121
    %v635 = vld [vmem:[#allocation3] sm:$0xf]
    %v636 = vsel %vm634, %v619, %v635
    %637 = vst [vmem:[#allocation3] sm:$0xf] %v636
    %638 = vst [vmem:[#allocation3 + $0x4] sm:$0xf] %v628
    %v639 = vld [vmem:[#allocation3 + $0x8] sm:$0x1]
    %v640 = vsel %vm136, %v629, %v639
    %641 = vst [vmem:[#allocation3 + $0x8] sm:$0x1] %v640
    %v642 = vpack.c.bf16 %v605, %v604
    %v643 = vpack.c.bf16 %v606, %v606
    %v646 = vunpack.c.l.b16 %v642
    %v647 = vunpack.c.h.b16 %v642
    %v648 = vunpack.c.l.b16 %v643
    %v649 = vpack.c.b16 %v646, %v646
    %v650 = vpack.c.b16 %v647, %v647
    %v651 = vpack.c.b16 %v648, %v648
    %v653 = vshrl.u32 %v649, 16
    %v655 = vrot.slane %v653, 7
    %v656 = vshll.u32 %v649, 16
    %v658 = vor.u32 %v655, %v656
    %v659 = vrot.slane %v655, 4
    %v661 = vshrl.u32 %v650, 16
    %v663 = vrot.slane %v661, 7
    %v664 = vshll.u32 %v650, 16
    %v666 = vor.u32 %v663, %v664
    %v667 = vsel %vm99, %v659, %v666
    %v668 = vrot.slane %v663, 4
    %v670 = vshrl.u32 %v651, 16
    %v672 = vrot.slane %v670, 7
    %v673 = vshll.u32 %v651, 16
    %v675 = vor.u32 %v672, %v673
    %v676 = vsel %vm99, %v668, %v675
    %vm680 = vcmask 1043457
    %vm681 = vmand %vm680, %vm184
    %v682 = vld [vmem:[#allocation3 + $0x8] sm:$0xe]
    %v683 = vsel %vm681, %v658, %v682
    %684 = vst [vmem:[#allocation3 + $0x8] sm:$0xe] %v683
    %685 = vst [vmem:[#allocation3 + $0xc] sm:$0xf] %v667
    %vm686 = vcmask 1041408
    %vm687 = vmand %vm686, %vm145
    %v688 = vld [vmem:[#allocation3 + $0x10] sm:$0x3]
    %v689 = vsel %vm687, %v676, %v688
    %690 = vst [vmem:[#allocation3 + $0x10] sm:$0x3] %v689
    %v691 = vld [vmem:[#allocation3] sm:$0xf]
    %v692 = vld [vmem:[#allocation3 + $0x4] sm:$0xf]
    %v693 = vld [vmem:[#allocation3 + $0x8] sm:$0xf]
    %v694 = vld [vmem:[#allocation3 + $0xc] sm:$0xf]
    %v695 = vld [vmem:[#allocation3 + $0x10] sm:$0x1]
    %v696 = vld [vmem:[#allocation10] sm:$0xf]
    %v697 = vld [vmem:[#allocation10 + $0x4] sm:$0xf]
    %v698 = vld [vmem:[#allocation10 + $0x8] sm:$0xf]
    %v699 = vld [vmem:[#allocation10 + $0xc] sm:$0xf]
    %v700 = vld [vmem:[#allocation10 + $0x10] sm:$0xf]
    %v701 = vld [vmem:[#allocation10 + $0x14] sm:$0xf]
    %v702 = vld [vmem:[#allocation10 + $0x18] sm:$0xf]
    %v703 = vld [vmem:[#allocation10 + $0x1c] sm:$0xf]
    %v704 = vld [vmem:[#allocation10 + $0x20] sm:$0xf]
    %v705 = vld [vmem:[#allocation10 + $0x24] sm:$0xf]
    %v706 = vld [vmem:[#allocation10 + $0x28] sm:$0xf]
    %v707 = vld [vmem:[#allocation10 + $0x2c] sm:$0xf]
    %v708 = vld [vmem:[#allocation10 + $0x30] sm:$0xf]
    %v709 = vld [vmem:[#allocation10 + $0x34] sm:$0xf]
    %v710 = vld [vmem:[#allocation10 + $0x38] sm:$0xf]
    %v711 = vld [vmem:[#allocation10 + $0x3c] sm:$0xf]
    %v712 = vld [vmem:[#allocation3 + $0x10] sm:$0x3]
    %s713 = scalar_lea.vmem [#allocation10], 64
    %v714 = vld [vmem:[%s713] sm:$0xf]
    %v715 = vld [vmem:[%s713 + $0x4] sm:$0xf]
    %v716 = vld [vmem:[%s713 + $0x8] sm:$0xf]
    %v717 = vld [vmem:[%s713 + $0xc] sm:$0xf]
    %v718 = vld [vmem:[%s713 + $0x10] sm:$0xf]
    %v719 = vld [vmem:[%s713 + $0x14] sm:$0xf]
    %v720 = vld [vmem:[%s713 + $0x18] sm:$0xf]
    %v721 = vld [vmem:[%s713 + $0x1c] sm:$0xf]
    %v722 = vld [vmem:[%s713 + $0x20] sm:$0xf]
    %v723 = vld [vmem:[%s713 + $0x24] sm:$0xf]
    %v724 = vld [vmem:[%s713 + $0x28] sm:$0xf]
    %v725 = vld [vmem:[%s713 + $0x2c] sm:$0xf]
    %v726 = vld [vmem:[%s713 + $0x30] sm:$0xf]
    %v727 = vld [vmem:[%s713 + $0x34] sm:$0xf]
    %v728 = vld [vmem:[%s713 + $0x38] sm:$0xf]
    %v729 = vld [vmem:[%s713 + $0x3c] sm:$0xf]
    %v735 = vunpack.c.l.b16 %v691
    %v736 = vunpack.c.l.b16 %v692
    %v737 = vunpack.c.l.b16 %v693
    %v738 = vunpack.c.l.b16 %v694
    %v739 = vunpack.c.l.b16 %v712
    %v740 = vpack.c.b16 %v736, %v735
    %v741 = vpack.c.b16 %v738, %v737
    %v742 = vpack.c.b16 %v739, %v739
    %v744 = vshrl.u32 %v740, 16
    %v746 = vshll.u32 %v740, 16
    %v748 = vrot.slane %v746, 1
    %v749 = vor.u32 %v744, %v748
    %v751 = vshll.u32 %v741, 16
    %v753 = vrot.slane %v751, 1
    %v754 = vsel %vm244, %v749, %v753
    %v755 = vshrl.u32 %v741, 16
    %v757 = vor.u32 %v755, %v753
    %v759 = vshll.u32 %v742, 16
    %v761 = vrot.slane %v759, 1
    %v762 = vsel %vm244, %v757, %v761
    %v763 = vshrl.u32 %v742, 16
    %v765 = vor.u32 %v763, %v761
    %v785 = vunpack.c.l.b16 %v714
    %v786 = vunpack.c.l.b16 %v715
    %v787 = vunpack.c.l.b16 %v716
    %v788 = vunpack.c.l.b16 %v717
    %v789 = vunpack.c.l.b16 %v718
    %v790 = vunpack.c.l.b16 %v719
    %v791 = vunpack.c.l.b16 %v720
    %v792 = vunpack.c.l.b16 %v721
    %v793 = vunpack.c.l.b16 %v722
    %v794 = vunpack.c.l.b16 %v723
    %v795 = vunpack.c.l.b16 %v724
    %v796 = vunpack.c.l.b16 %v725
    %v797 = vunpack.c.l.b16 %v726
    %v798 = vunpack.c.l.b16 %v727
    %v799 = vunpack.c.l.b16 %v728
    %v800 = vunpack.c.l.b16 %v729
    %v801 = vpack.c.b16 %v786, %v785
    %v802 = vpack.c.b16 %v788, %v787
    %v803 = vpack.c.b16 %v790, %v789
    %v804 = vpack.c.b16 %v792, %v791
    %v805 = vpack.c.b16 %v794, %v793
    %v806 = vpack.c.b16 %v796, %v795
    %v807 = vpack.c.b16 %v798, %v797
    %v808 = vpack.c.b16 %v800, %v799
    %817 = vmatprep.subr.bf16.mxu0 0
    %818 = vmatpush1.bf16.msra.mxu0 %v801
    %819 = vmatprep.subr.bf16.mxu0 0
    %820 = vmatpush1.bf16.msra.mxu0 %v802
    %821 = vmatprep.subr.bf16.mxu0 0
    %822 = vmatpush1.bf16.msra.mxu0 %v803
    %823 = vmatprep.subr.bf16.mxu0 0
    %824 = vmatpush1.bf16.msra.mxu0 %v804
    %825 = vmatprep.subr.bf16.mxu0 0
    %826 = vmatpush1.bf16.msra.mxu0 %v805
    %827 = vmatprep.subr.bf16.mxu0 0
    %828 = vmatpush1.bf16.msra.mxu0 %v806
    %829 = vmatprep.subr.bf16.mxu0 0
    %830 = vmatpush1.bf16.msra.mxu0 %v807
    %831 = vmatprep.subr.bf16.mxu0 0
    %832 = vmatpush1.bf16.msra.mxu0 %v808
    %833 = vmatprep.subr.bf16.mxu0 0
    %834 = vmatpush1.bf16.msra.mxu0 0
    %835 = vmatprep.subr.bf16.mxu0 0
    %836 = vmatpush1.bf16.msra.mxu0 0
    %837 = vmatprep.subr.bf16.mxu0 0
    %838 = vmatpush1.bf16.msra.mxu0 0
    %839 = vmatprep.subr.bf16.mxu0 0
    %840 = vmatpush1.bf16.msra.mxu0 0
    %841 = vmatprep.subr.bf16.mxu0 0
    %842 = vmatpush1.bf16.msra.mxu0 0
    %843 = vmatprep.subr.bf16.mxu0 0
    %844 = vmatpush1.bf16.msra.mxu0 0
    %845 = vmatprep.subr.bf16.mxu0 0
    %846 = vmatpush1.bf16.msra.mxu0 0
    %847 = vmatprep.subr.bf16.mxu0 0
    %848 = vmatpush1.bf16.msra.mxu0 0
    %849 = vmatprep.mubr.bf16.mxu0 0
    %850 = vmatmul.mubr.bf16.gmra.mrb[0].mxu0 %v754
    %v851 = vpop.f32.mrb[0].mxu0
    %v852 = vadd.f32 0.0, %v851
    %v853 = vpop.f32.mrb[0].mxu0
    %v854 = vpop.f32.mrb[0].mxu0
    %v855 = vadd.f32 0.0, %v854
    %v856 = vpop.f32.mrb[0].mxu0
    %857 = vmatprep.mubr.bf16.mxu0 0
    %858 = vmatmul.mubr.bf16.gmra.mrb[0].mxu0 %v762
    %v859 = vpop.f32.mrb[0].mxu0
    %v860 = vadd.f32 0.0, %v859
    %v861 = vpop.f32.mrb[0].mxu0
    %v862 = vpop.f32.mrb[0].mxu0
    %v863 = vadd.f32 0.0, %v862
    %v864 = vpop.f32.mrb[0].mxu0
    %865 = vmatprep.mubr.bf16.mxu0 0
    %866 = vmatmul.mubr.bf16.gmra.mrb[0].mxu0 %v765
    %v867 = vpop.f32.mrb[0].mxu0
    %v868 = vadd.f32 0.0, %v867
    %v869 = vpop.f32.mrb[0].mxu0
    %v870 = vpop.f32.mrb[0].mxu0
    %v871 = vpop.f32.mrb[0].mxu0
    %872 = vdwg.mxu0
    %v874 = vunpack.c.l.b16 %v695
    %v875 = vpack.c.b16 %v874, %v874
    %v895 = vunpack.c.l.b16 %v696
    %v896 = vunpack.c.l.b16 %v697
    %v897 = vunpack.c.l.b16 %v698
    %v898 = vunpack.c.l.b16 %v699
    %v899 = vunpack.c.l.b16 %v700
    %v900 = vunpack.c.l.b16 %v701
    %v901 = vunpack.c.l.b16 %v702
    %v902 = vunpack.c.l.b16 %v703
    %v903 = vunpack.c.l.b16 %v704
    %v904 = vunpack.c.l.b16 %v705
    %v905 = vunpack.c.l.b16 %v706
    %v906 = vunpack.c.l.b16 %v707
    %v907 = vunpack.c.l.b16 %v708
    %v908 = vunpack.c.l.b16 %v709
    %v909 = vunpack.c.l.b16 %v710
    %v910 = vunpack.c.l.b16 %v711
    %v911 = vpack.c.b16 %v896, %v895
    %v912 = vpack.c.b16 %v898, %v897
    %v913 = vpack.c.b16 %v900, %v899
    %v914 = vpack.c.b16 %v902, %v901
    %v915 = vpack.c.b16 %v904, %v903
    %v916 = vpack.c.b16 %v906, %v905
    %v917 = vpack.c.b16 %v908, %v907
    %v918 = vpack.c.b16 %v910, %v909
    %927 = vmatprep.subr.bf16.mxu0 0
    %928 = vmatpush1.bf16.msra.mxu0 %v911
    %929 = vmatprep.subr.bf16.mxu0 0
    %930 = vmatpush1.bf16.msra.mxu0 %v912
    %931 = vmatprep.subr.bf16.mxu0 0
    %932 = vmatpush1.bf16.msra.mxu0 %v913
    %933 = vmatprep.subr.bf16.mxu0 0
    %934 = vmatpush1.bf16.msra.mxu0 %v914
    %935 = vmatprep.subr.bf16.mxu0 0
    %936 = vmatpush1.bf16.msra.mxu0 %v915
    %937 = vmatprep.subr.bf16.mxu0 0
    %938 = vmatpush1.bf16.msra.mxu0 %v916
    %939 = vmatprep.subr.bf16.mxu0 0
    %940 = vmatpush1.bf16.msra.mxu0 %v917
    %941 = vmatprep.subr.bf16.mxu0 0
    %942 = vmatpush1.bf16.msra.mxu0 %v918
    %943 = vmatprep.subr.bf16.mxu0 0
    %944 = vmatpush1.bf16.msra.mxu0 0
    %945 = vmatprep.subr.bf16.mxu0 0
    %946 = vmatpush1.bf16.msra.mxu0 0
    %947 = vmatprep.subr.bf16.mxu0 0
    %948 = vmatpush1.bf16.msra.mxu0 0
    %949 = vmatprep.subr.bf16.mxu0 0
    %950 = vmatpush1.bf16.msra.mxu0 0
    %951 = vmatprep.subr.bf16.mxu0 0
    %952 = vmatpush1.bf16.msra.mxu0 0
    %953 = vmatprep.subr.bf16.mxu0 0
    %954 = vmatpush1.bf16.msra.mxu0 0
    %955 = vmatprep.subr.bf16.mxu0 0
    %956 = vmatpush1.bf16.msra.mxu0 0
    %957 = vmatprep.subr.bf16.mxu0 0
    %958 = vmatpush1.bf16.msra.mxu0 0
    %959 = vmatprep.mubr.bf16.mxu0 0
    %960 = vmatmul.mubr.bf16.gmra.mrb[0].mxu0 %v740
    %v961 = vpop.f32.mrb[0].mxu0
    %v962 = vadd.f32 %v852, %v961
    %v963 = vpop.f32.mrb[0].mxu0
    %v964 = vpop.f32.mrb[0].mxu0
    %v965 = vadd.f32 %v855, %v964
    %v966 = vpop.f32.mrb[0].mxu0
    %967 = vmatprep.mubr.bf16.mxu0 0
    %968 = vmatmul.mubr.bf16.gmra.mrb[0].mxu0 %v741
    %v969 = vpop.f32.mrb[0].mxu0
    %v970 = vadd.f32 %v860, %v969
    %v971 = vpop.f32.mrb[0].mxu0
    %v972 = vpop.f32.mrb[0].mxu0
    %v973 = vadd.f32 %v863, %v972
    %v974 = vpop.f32.mrb[0].mxu0
    %975 = vmatprep.mubr.bf16.mxu0 0
    %976 = vmatmul.mubr.bf16.gmra.mrb[0].mxu0 %v875
    %v977 = vpop.f32.mrb[0].mxu0
    %v978 = vadd.f32 %v868, %v977
    %v979 = vpop.f32.mrb[0].mxu0
    %v980 = vpop.f32.mrb[0].mxu0
    %v981 = vpop.f32.mrb[0].mxu0
    %982 = vdwg.mxu0
    %v983 = vld [vmem:[#allocation3] sm:$0xe]
    %s984 = scalar_lea.vmem [#allocation10], 128
    %v985 = vld [vmem:[%s984] sm:$0xf]
    %v986 = vld [vmem:[%s984 + $0x4] sm:$0xf]
    %v987 = vld [vmem:[%s984 + $0x8] sm:$0xf]
    %v988 = vld [vmem:[%s984 + $0xc] sm:$0xf]
    %v989 = vld [vmem:[%s984 + $0x10] sm:$0xf]
    %v990 = vld [vmem:[%s984 + $0x14] sm:$0xf]
    %v991 = vld [vmem:[%s984 + $0x18] sm:$0xf]
    %v992 = vld [vmem:[%s984 + $0x1c] sm:$0xf]
    %v993 = vld [vmem:[%s984 + $0x20] sm:$0xf]
    %v994 = vld [vmem:[%s984 + $0x24] sm:$0xf]
    %v995 = vld [vmem:[%s984 + $0x28] sm:$0xf]
    %v996 = vld [vmem:[%s984 + $0x2c] sm:$0xf]
    %v997 = vld [vmem:[%s984 + $0x30] sm:$0xf]
    %v998 = vld [vmem:[%s984 + $0x34] sm:$0xf]
    %v999 = vld [vmem:[%s984 + $0x38] sm:$0xf]
    %v1000 = vld [vmem:[%s984 + $0x3c] sm:$0xf]
    %v1002 = vunpack.c.l.b16 %v983
    %v1003 = vpack.c.b16 %v736, %v1002
    %v1004 = vrot.slane %v1003, 1
    %v1005 = vrot.slane %v741, 1
    %v1006 = vsel %vm461, %v1004, %v1005
    %v1007 = vrot.slane %v742, 1
    %v1008 = vsel %vm461, %v1005, %v1007
    %v1028 = vunpack.c.l.b16 %v985
    %v1029 = vunpack.c.l.b16 %v986
    %v1030 = vunpack.c.l.b16 %v987
    %v1031 = vunpack.c.l.b16 %v988
    %v1032 = vunpack.c.l.b16 %v989
    %v1033 = vunpack.c.l.b16 %v990
    %v1034 = vunpack.c.l.b16 %v991
    %v1035 = vunpack.c.l.b16 %v992
    %v1036 = vunpack.c.l.b16 %v993
    %v1037 = vunpack.c.l.b16 %v994
    %v1038 = vunpack.c.l.b16 %v995
    %v1039 = vunpack.c.l.b16 %v996
    %v1040 = vunpack.c.l.b16 %v997
    %v1041 = vunpack.c.l.b16 %v998
    %v1042 = vunpack.c.l.b16 %v999
    %v1043 = vunpack.c.l.b16 %v1000
    %v1044 = vpack.c.b16 %v1029, %v1028
    %v1045 = vpack.c.b16 %v1031, %v1030
    %v1046 = vpack.c.b16 %v1033, %v1032
    %v1047 = vpack.c.b16 %v1035, %v1034
    %v1048 = vpack.c.b16 %v1037, %v1036
    %v1049 = vpack.c.b16 %v1039, %v1038
    %v1050 = vpack.c.b16 %v1041, %v1040
    %v1051 = vpack.c.b16 %v1043, %v1042
    %1060 = vmatprep.subr.bf16.mxu0 0
    %1061 = vmatpush1.bf16.msra.mxu0 %v1044
    %1062 = vmatprep.subr.bf16.mxu0 0
    %1063 = vmatpush1.bf16.msra.mxu0 %v1045
    %1064 = vmatprep.subr.bf16.mxu0 0
    %1065 = vmatpush1.bf16.msra.mxu0 %v1046
    %1066 = vmatprep.subr.bf16.mxu0 0
    %1067 = vmatpush1.bf16.msra.mxu0 %v1047
    %1068 = vmatprep.subr.bf16.mxu0 0
    %1069 = vmatpush1.bf16.msra.mxu0 %v1048
    %1070 = vmatprep.subr.bf16.mxu0 0
    %1071 = vmatpush1.bf16.msra.mxu0 %v1049
    %1072 = vmatprep.subr.bf16.mxu0 0
    %1073 = vmatpush1.bf16.msra.mxu0 %v1050
    %1074 = vmatprep.subr.bf16.mxu0 0
    %1075 = vmatpush1.bf16.msra.mxu0 %v1051
    %1076 = vmatprep.subr.bf16.mxu0 0
    %1077 = vmatpush1.bf16.msra.mxu0 0
    %1078 = vmatprep.subr.bf16.mxu0 0
    %1079 = vmatpush1.bf16.msra.mxu0 0
    %1080 = vmatprep.subr.bf16.mxu0 0
    %1081 = vmatpush1.bf16.msra.mxu0 0
    %1082 = vmatprep.subr.bf16.mxu0 0
    %1083 = vmatpush1.bf16.msra.mxu0 0
    %1084 = vmatprep.subr.bf16.mxu0 0
    %1085 = vmatpush1.bf16.msra.mxu0 0
    %1086 = vmatprep.subr.bf16.mxu0 0
    %1087 = vmatpush1.bf16.msra.mxu0 0
    %1088 = vmatprep.subr.bf16.mxu0 0
    %1089 = vmatpush1.bf16.msra.mxu0 0
    %1090 = vmatprep.subr.bf16.mxu0 0
    %1091 = vmatpush1.bf16.msra.mxu0 0
    %1092 = vmatprep.mubr.bf16.mxu0 0
    %1093 = vmatmul.mubr.bf16.gmra.mrb[0].mxu0 %v1006
    %v1094 = vpop.f32.mrb[0].mxu0
    %v1095 = vadd.f32 0.0, %v1094
    %v1096 = vpop.f32.mrb[0].mxu0
    %v1097 = vpop.f32.mrb[0].mxu0
    %v1098 = vadd.f32 0.0, %v1097
    %v1099 = vpop.f32.mrb[0].mxu0
    %1100 = vmatprep.mubr.bf16.mxu0 0
    %1101 = vmatmul.mubr.bf16.gmra.mrb[0].mxu0 %v1008
    %v1102 = vpop.f32.mrb[0].mxu0
    %v1103 = vadd.f32 0.0, %v1102
    %v1104 = vpop.f32.mrb[0].mxu0
    %v1105 = vpop.f32.mrb[0].mxu0
    %v1106 = vadd.f32 0.0, %v1105
    %v1107 = vpop.f32.mrb[0].mxu0
    %1108 = vmatprep.mubr.bf16.mxu0 0
    %1109 = vmatmul.mubr.bf16.gmra.mrb[0].mxu0 %v1007
    %v1110 = vpop.f32.mrb[0].mxu0
    %v1111 = vadd.f32 0.0, %v1110
    %v1112 = vpop.f32.mrb[0].mxu0
    %v1113 = vpop.f32.mrb[0].mxu0
    %v1114 = vpop.f32.mrb[0].mxu0
    %1115 = vdwg.mxu0
    %v1116 = vadd.f32 %v962, %v1095
    %v1117 = vadd.f32 %v965, %v1098
    %v1118 = vadd.f32 %v970, %v1103
    %v1119 = vadd.f32 %v973, %v1106
    %v1120 = vadd.f32 %v978, %v1111
    %v1121 = vld [vmem:[%s6] sm:$0x1]
    %v1123 = vlaneseq
    %v1124 = vshrl.u32 %v1123, 7
    %v1125 = vsub.s32 0, %v1124
    %v1126 = vrot.slane %v1121, %v1125
    %v1128 = vmul.f32 %v1116, %v1126
    %v1129 = vmul.f32 %v1117, %v1126
    %v1130 = vmul.f32 %v1118, %v1126
    %v1131 = vmul.f32 %v1119, %v1126
    %v1132 = vmul.f32 %v1120, %v1126
    %v1133 = vld [vmem:[%s7] sm:$0x1]
    %v1135 = vlaneseq
    %v1136 = vshrl.u32 %v1135, 7
    %v1137 = vsub.s32 0, %v1136
    %v1138 = vrot.slane %v1133, %v1137
    %v1140 = vadd.f32 %v1128, %v1138
    %v1141 = vadd.f32 %v1129, %v1138
    %v1142 = vadd.f32 %v1130, %v1138
    %v1143 = vadd.f32 %v1131, %v1138
    %v1144 = vadd.f32 %v1132, %v1138
    %v1145 = vadd.f32 %v1140, %v1141
    %v1146 = vrot.slane %v1145, 4
    %v1147 = vadd.f32 %v1145, %v1146
    %v1148 = vrot.slane %v1147, 2
    %v1149 = vadd.f32 %v1147, %v1148
    %v1150 = vrot.slane %v1149, 1
    %v1151 = vadd.f32 %v1149, %v1150
    %v1152 = vld [vmem:[%s8] sm:$0x3]
    %v1153 = vmul.f32 %v1151, %v1152
    %vm1154 = vcmask 1041408
    %v1155 = vsel %vm1154, %v1153, 0.0
    %1156 = vadd.xlane.f32.xlu0 %v1155
    %v1157 = vpop.xlane.xlu0 %1156
    %v1158 = vld [vmem:[%s9] sm:$0x3]
    %v1159 = vadd.f32 %v1157, %v1158
    %v1160 = vmax.f32 %v1159, 0.0
    %v1161 = vld [vmem:[%s10] sm:$0x3]
    %1163 = vset.pattern.permute.xlu0 0
    %1164 = vperm.xlu0 %1163, %v1160
    %v1165 = vpop.permute.xlu0 %1164
    %v1167 = vmul.f32 %v1165, %v1161
    %v1168 = vsel %vm1154, %v1167, 0.0
    %v1169 = vrot.slane %v1168, 4
    %v1170 = vadd.f32 %v1168, %v1169
    %v1171 = vrot.slane %v1170, 2
    %v1172 = vadd.f32 %v1170, %v1171
    %v1173 = vrot.slane %v1172, 1
    %v1174 = vadd.f32 %v1172, %v1173
    %v1175 = vld [vmem:[%s11] sm:$0x1]
    %v1176 = vadd.f32 %v1174, %v1175
    %v1177 = vxor.u32 %v1176, 2147483648
    %v1178 = vmul.f32 %v1177, 1.442695
    %v1179 = vpow.pop %v1178
    %v1180 = vadd.f32 %v1179, 1.0
    %v1181 = vrcp.pop %v1180
    %v1182 = vmul.f32 1.0, %v1181
    %v1183 = vlaneseq
    %v1184 = vshrl.u32 %v1183, 7
    %v1185 = vsub.s32 0, %v1184
    %v1186 = vrot.slane %v1182, %v1185
    %v1187 = vmul.f32 %v1140, %v1186
    %v1188 = vmul.f32 %v1141, %v1186
    %v1189 = vld [vmem:[#allocation4] sm:$0xff]
    %v1190 = vld [vmem:[#allocation4 + $0x8] sm:$0xff]
    %v1191 = vadd.f32 %v1187, %v1189
    %v1192 = vadd.f32 %v1188, %v1190
    %v1193 = vmax.f32 %v1191, 0.0
    %v1194 = vmax.f32 %v1192, 0.0
    %v1195 = vpack.c.bf16 %v1194, %v1193
    %v1197 = vunpack.c.l.b16 %v1195
    %v1198 = vunpack.c.h.b16 %v1195
    %v1199 = vpack.c.b16 %v1197, %v1197
    %v1200 = vpack.c.b16 %v1198, %v1198
    %1203 = vst [vmem:[#allocation11] sm:$0xf] %v1199
    %1204 = vst [vmem:[#allocation11 + $0x4] sm:$0xf] %v1200
    %vm1208 = vcmask 1045504
    %v1209 = vrot.slane %v1142, 2
    %v1210 = vrot.slane %v1143, 2
    %v1211 = vsel %vm1208, %v1209, %v1210
    %v1212 = vrot.slane %v1144, 2
    %v1213 = vsel %vm1208, %v1210, %v1212
    %v1216 = vadd.f32 %v1211, %v1213
    %v1217 = vrot.slane %v1216, 4
    %v1218 = vadd.f32 %v1216, %v1217
    %v1219 = vrot.slane %v1218, 2
    %v1220 = vadd.f32 %v1218, %v1219
    %v1221 = vrot.slane %v1220, 1
    %v1222 = vadd.f32 %v1220, %v1221
    %v1223 = vld [vmem:[%s8] sm:$0x3]
    %v1224 = vmul.f32 %v1222, %v1223
    %v1225 = vsel %vm1154, %v1224, 0.0
    %1226 = vadd.xlane.f32.xlu0 %v1225
    %v1227 = vpop.xlane.xlu0 %1226
    %v1228 = vld [vmem:[%s9] sm:$0x3]
    %v1229 = vadd.f32 %v1227, %v1228
    %v1230 = vmax.f32 %v1229, 0.0
    %v1231 = vld [vmem:[%s10] sm:$0x3]
    %1233 = vset.pattern.permute.xlu0 0
    %1234 = vperm.xlu0 %1233, %v1230
    %v1235 = vpop.permute.xlu0 %1234
    %v1237 = vmul.f32 %v1235, %v1231
    %v1238 = vsel %vm1154, %v1237, 0.0
    %v1239 = vrot.slane %v1238, 4
    %v1240 = vadd.f32 %v1238, %v1239
    %v1241 = vrot.slane %v1240, 2
    %v1242 = vadd.f32 %v1240, %v1241
    %v1243 = vrot.slane %v1242, 1
    %v1244 = vadd.f32 %v1242, %v1243
    %v1245 = vld [vmem:[%s11] sm:$0x1]
    %v1246 = vadd.f32 %v1244, %v1245
    %v1247 = vxor.u32 %v1246, 2147483648
    %v1248 = vmul.f32 %v1247, 1.442695
    %v1249 = vpow.pop %v1248
    %v1250 = vadd.f32 %v1249, 1.0
    %v1251 = vrcp.pop %v1250
    %v1252 = vmul.f32 1.0, %v1251
    %v1253 = vlaneseq
    %v1254 = vshrl.u32 %v1253, 7
    %v1255 = vsub.s32 0, %v1254
    %v1256 = vrot.slane %v1252, %v1255
    %v1257 = vmul.f32 %v1142, %v1256
    %v1258 = vmul.f32 %v1143, %v1256
    %v1259 = vmul.f32 %v1144, %v1256
    %v1260 = vld [vmem:[#allocation4 + $0x12] sm:$0xff]
    %v1261 = vld [vmem:[#allocation4 + $0x1a] sm:$0xff]
    %v1264 = vrot.slane %v1260, 6
    %v1265 = vrot.slane %v1261, 6
    %v1266 = vsel %vm1154, %v1264, %v1265
    %v1270 = vadd.f32 %v1257, %v1264
    %v1271 = vadd.f32 %v1258, %v1266
    %v1272 = vadd.f32 %v1259, %v1265
    %v1273 = vmax.f32 %v1270, 0.0
    %v1274 = vmax.f32 %v1271, 0.0
    %v1275 = vmax.f32 %v1272, 0.0
    %v1276 = vpack.c.bf16 %v1274, %v1273
    %v1277 = vpack.c.bf16 %v1275, %v1275
    %v1280 = vunpack.c.l.b16 %v1276
    %v1281 = vunpack.c.h.b16 %v1276
    %v1282 = vunpack.c.l.b16 %v1277
    %v1283 = vpack.c.b16 %v1280, %v1280
    %v1284 = vpack.c.b16 %v1281, %v1281
    %v1285 = vpack.c.b16 %v1282, %v1282
    %vm1286 = vcmask 1042432
    %vm1287 = vcmask 1046532
    %vm1288 = vmor %vm1286, %vm1287
    %v1289 = vrot.slane %v1283, 5
    %v1290 = vrot.slane %v1289, 4
    %v1291 = vrot.slane %v1284, 5
    %v1292 = vsel %vm1288, %v1290, %v1291
    %v1293 = vrot.slane %v1291, 4
    %v1294 = vrot.slane %v1285, 5
    %v1295 = vsel %vm1288, %v1293, %v1294
    %s1298 = scalar_lea.vmem [#allocation11], 8
    %1299 = vst [vmem:[%s1298] sm:$0xf] %v1292
    %1300 = vst [vmem:[%s1298 + $0x4] sm:$0xf] %v1295
    // Predicated region
    $region62: #{tpu_custom_call.1} parent=1 // pred_check
      _
    $region63: #{tpu_custom_call.1} parent=1 // pred_check_branch
      %1302 = sbr.rel (0) target = $region65
    $region64: #{tpu_custom_call.1} parent=1 // pred_region
      %s1304 = ssub.s32 256, 256
      %1305 = vsyncadd [#allocation7], %s1304
      %s1306 = sshll.u32 [#allocation11], 4
      %s1307 = int_to_ptr.vmem [resolvable:$true] %s1306
      %1312 = dma.vmem_to_hbm [thread:$0]  %s1307, 256, %s12, [#allocation7], 64, 64, 4
    $region65: #{tpu_custom_call.1} parent=1 // pred_fallthru
      _
    // Predicated region
    $region66: #{tpu_custom_call.1} parent=1 // pred_check
      _
    $region67: #{tpu_custom_call.1} parent=1 // pred_check_branch
      %1314 = sbr.rel (0) target = $region69
    $region68: #{tpu_custom_call.1} parent=1 // pred_region
      %1315 = dma.done [#allocation7], 256
    $region69: #{tpu_custom_call.1} parent=1 // pred_fallthru
      _
    %1316 = vsyncpa [#allocation6], 1
    %1317 = vsyncpa [#allocation9], 1
    %1318 = vsyncpa [#allocation7], 1

// kernel: tpu_custom_call.1
$region0: #{tpu_custom_call.1}
  #allocation0 [shape = 'u32[]', space=smem, size = 0x4, offset = 0x4, fixed_abs, tag = 'smem constant byte address 0x4 - core index']
  #allocation1 [shape = 'u32[144,128]{1,0:T(1,128)}', space=vmem, size = 0x12000, scoped, tag = 'internal scratch']
  #allocation2 [shape = 'bf16[36,64]{1,0:T(8,128)(2,1)}', space=vmem, size = 0x2800, scoped, tag = 'scratch operand']
  #allocation3 [shape = 'bf16[36,128]{1,0:T(8,128)(2,1)}', space=vmem, size = 0x2800, scoped, tag = 'scratch operand']
  #allocation4 [shape = 'f32[34,128]{1,0:T(8,128)}', space=vmem, size = 0x5000, scoped, tag = 'scratch operand']
  %s0 = inlined_call_operand.hbm [shape: f32[2,16,64], index: 0, kind: input, shape index: {}]
  %s1 = inlined_call_operand.hbm [shape: bf16[3,64,128], index: 1, kind: input, shape index: {}]
  %s2 = inlined_call_operand.hbm [shape: bf16[3,128,128], index: 2, kind: input, shape index: {}]
  %s3 = inlined_call_operand.vmem [shape: f32[1,128], index: 3, kind: input, shape index: {}]
  %s4 = inlined_call_operand.vmem [shape: f32[1,128], index: 4, kind: input, shape index: {}]
  %s5 = inlined_call_operand.vmem [shape: f32[1,128], index: 5, kind: input, shape index: {}]
  %s6 = inlined_call_operand.vmem [shape: f32[1,128], index: 6, kind: input, shape index: {}]
  %s7 = inlined_call_operand.vmem [shape: f32[1,128], index: 7, kind: input, shape index: {}]
  %s8 = inlined_call_operand.vmem [shape: f32[2,128], index: 8, kind: input, shape index: {}]
  %s9 = inlined_call_operand.vmem [shape: f32[2,1], index: 9, kind: input, shape index: {}]
  %s10 = inlined_call_operand.vmem [shape: f32[2,128], index: 10, kind: input, shape index: {}]
  %s11 = inlined_call_operand.vmem [shape: f32[1,128], index: 11, kind: input, shape index: {}]
  %s12 = inlined_call_operand.hbm [shape: bf16[2,16,128], index: 12, kind: output, shape index: {}]
  %s13 = sld [smem:[#allocation0]]
  $region70: #{tpu_custom_call.1} parent=0
    _
  %s15 = ssub.s32 1, %s13
  %s16 = scalar_select 0, %s15, %s13
  $region1: #{tpu_custom_call.1} parent=0
    #allocation5 [shape = 'u8[16384]{0}', space=vmem, size = 0x4000, scoped, tag = 'input window, operand 0, single buffered']
    #allocation6 [shape = 's32[1]{0}', space=sflag, size = 0x4, scoped, tag = 'scoped memory for tpu_custom_call.1']
    #allocation7 [shape = 's32[1]{0}', space=sflag, size = 0x4, scoped, tag = 'scoped memory for tpu_custom_call.1']
    #allocation8 [shape = 'u8[49152]{0}', space=vmem, size = 0xc000, scoped, tag = 'input window, operand 1, single buffered']
    #allocation9 [shape = 's32[1]{0}', space=sflag, size = 0x4, scoped, tag = 'scoped memory for tpu_custom_call.1']
    #allocation10 [shape = 'u8[98304]{0}', space=vmem, size = 0x18000, scoped, tag = 'input window, operand 2, single buffered']
    #allocation11 [shape = 'u8[8192]{0}', space=vmem, size = 0x2000, scoped, tag = 'output window, operand 0, single buffered']
    %17 = vsyncpa [#allocation6], 0
    %18 = vsyncpa [#allocation9], 0
    %19 = vsyncpa [#allocation7], 0
    // Predicated region
    $region2: #{tpu_custom_call.1} parent=1 // pred_check
      _
    $region3: #{tpu_custom_call.1} parent=1 // pred_check_branch
      %21 = sbr.rel (0) target = $region5
    $region4: #{tpu_custom_call.1} parent=1 // pred_region
      %s23 = ssub.s32 512, 512
      %24 = vsyncadd [#allocation6], %s23
      %s25 = sshll.u32 [#allocation5], 4
      %s26 = int_to_ptr.vmem [resolvable:$true] %s25
      %31 = dma.hbm_to_vmem [thread:$0]  %s0, 512, %s26, [#allocation6], 128, 128, 8
    $region5: #{tpu_custom_call.1} parent=1 // pred_fallthru
      _
    // Predicated region
    $region6: #{tpu_custom_call.1} parent=1 // pred_check
      _
    $region7: #{tpu_custom_call.1} parent=1 // pred_check_branch
      %33 = sbr.rel (0) target = $region9
    $region8: #{tpu_custom_call.1} parent=1 // pred_region
      %s35 = ssub.s32 1536, 1536
      %36 = vsyncadd [#allocation9], %s35
      %s37 = sshll.u32 [#allocation8], 4
      %s38 = int_to_ptr.vmem [resolvable:$true] %s37
      %43 = dma.hbm_to_vmem [thread:$0]  %s1, 1536, %s38, [#allocation9], 64, 64, 4
    $region9: #{tpu_custom_call.1} parent=1 // pred_fallthru
      _
    // Predicated region
    $region10: #{tpu_custom_call.1} parent=1 // pred_check
      _
    $region11: #{tpu_custom_call.1} parent=1 // pred_check_branch
      %45 = sbr.rel (0) target = $region13
    $region12: #{tpu_custom_call.1} parent=1 // pred_region
      %s47 = ssub.s32 3072, 3072
      %48 = vsyncadd [#allocation9], %s47
      %s49 = sshll.u32 [#allocation10], 4
      %s50 = int_to_ptr.vmem [resolvable:$true] %s49
      %55 = dma.hbm_to_vmem [thread:$0]  %s2, 3072, %s50, [#allocation9], 64, 64, 4
    $region13: #{tpu_custom_call.1} parent=1 // pred_fallthru
      _
    // Predicated region
    $region14: #{tpu_custom_call.1} parent=1 // pred_check
      _
    $region15: #{tpu_custom_call.1} parent=1 // pred_check_branch
      %57 = sbr.rel (0) target = $region17
    $region16: #{tpu_custom_call.1} parent=1 // pred_region
      _
    $region17: #{tpu_custom_call.1} parent=1 // pred_fallthru
      _
    // Predicated region
    $region18: #{tpu_custom_call.1} parent=1 // pred_check
      _
    $region19: #{tpu_custom_call.1} parent=1 // pred_check_branch
      %59 = sbr.rel (0) target = $region21
    $region20: #{tpu_custom_call.1} parent=1 // pred_region
      _
    $region21: #{tpu_custom_call.1} parent=1 // pred_fallthru
      _
    // Predicated region
    $region22: #{tpu_custom_call.1} parent=1 // pred_check
      _
    $region23: #{tpu_custom_call.1} parent=1 // pred_check_branch
      %61 = sbr.rel (0) target = $region25
    $region24: #{tpu_custom_call.1} parent=1 // pred_region
      _
    $region25: #{tpu_custom_call.1} parent=1 // pred_fallthru
      _
    // Predicated region
    $region26: #{tpu_custom_call.1} parent=1 // pred_check
      _
    $region27: #{tpu_custom_call.1} parent=1 // pred_check_branch
      %63 = sbr.rel (0) target = $region29
    $region28: #{tpu_custom_call.1} parent=1 // pred_region
      _
    $region29: #{tpu_custom_call.1} parent=1 // pred_fallthru
      _
    // Predicated region
    $region30: #{tpu_custom_call.1} parent=1 // pred_check
      _
    $region31: #{tpu_custom_call.1} parent=1 // pred_check_branch
      %65 = sbr.rel (0) target = $region33
    $region32: #{tpu_custom_call.1} parent=1 // pred_region
      _
    $region33: #{tpu_custom_call.1} parent=1 // pred_fallthru
      _
    // Predicated region
    $region34: #{tpu_custom_call.1} parent=1 // pred_check
      _
    $region35: #{tpu_custom_call.1} parent=1 // pred_check_branch
      %67 = sbr.rel (0) target = $region37
    $region36: #{tpu_custom_call.1} parent=1 // pred_region
      _
    $region37: #{tpu_custom_call.1} parent=1 // pred_fallthru
      _
    // Predicated region
    $region38: #{tpu_custom_call.1} parent=1 // pred_check
      _
    $region39: #{tpu_custom_call.1} parent=1 // pred_check_branch
      %69 = sbr.rel (0) target = $region41
    $region40: #{tpu_custom_call.1} parent=1 // pred_region
      _
    $region41: #{tpu_custom_call.1} parent=1 // pred_fallthru
      _
    // Predicated region
    $region42: #{tpu_custom_call.1} parent=1 // pred_check
      _
    $region43: #{tpu_custom_call.1} parent=1 // pred_check_branch
      %71 = sbr.rel (0) target = $region45
    $region44: #{tpu_custom_call.1} parent=1 // pred_region
      _
    $region45: #{tpu_custom_call.1} parent=1 // pred_fallthru
      _
    // Predicated region
    $region46: #{tpu_custom_call.1} parent=1 // pred_check
      _
    $region47: #{tpu_custom_call.1} parent=1 // pred_check_branch
      %73 = sbr.rel (0) target = $region49
    $region48: #{tpu_custom_call.1} parent=1 // pred_region
      _
    $region49: #{tpu_custom_call.1} parent=1 // pred_fallthru
      _
    // Predicated region
    $region50: #{tpu_custom_call.1} parent=1 // pred_check
      _
    $region51: #{tpu_custom_call.1} parent=1 // pred_check_branch
      %75 = sbr.rel (0) target = $region53
    $region52: #{tpu_custom_call.1} parent=1 // pred_region
      %76 = dma.done [#allocation6], 512
    $region53: #{tpu_custom_call.1} parent=1 // pred_fallthru
      _
    // Predicated region
    $region54: #{tpu_custom_call.1} parent=1 // pred_check
      _
    $region55: #{tpu_custom_call.1} parent=1 // pred_check_branch
      %78 = sbr.rel (0) target = $region57
    $region56: #{tpu_custom_call.1} parent=1 // pred_region
      %79 = dma.done [#allocation9], 1536
    $region57: #{tpu_custom_call.1} parent=1 // pred_fallthru
      _
    // Predicated region
    $region58: #{tpu_custom_call.1} parent=1 // pred_check
      _
    $region59: #{tpu_custom_call.1} parent=1 // pred_check_branch
      %81 = sbr.rel (0) target = $region61
    $region60: #{tpu_custom_call.1} parent=1 // pred_region
      %82 = dma.done [#allocation9], 3072
    $region61: #{tpu_custom_call.1} parent=1 // pred_fallthru
      _
    %vm84 = vcmask 516096
    %vm85 = vsmask.f32 256
    %vm86 = vmand %vm84, %vm85
    %v87 = vld [vmem:[#allocation2] sm:$0x1]
    %v88 = vsel %vm86, 0, %v87
    %89 = vst [vmem:[#allocation2] sm:$0x1] %v88
    %v90 = vld [vmem:[#allocation5] sm:$0xff]
    %v91 = vld [vmem:[#allocation5 + $0x8] sm:$0xff]
    %v92 = vpack.c.bf16 %v91, %v90
    %v94 = vunpack.c.l.b16 %v92
    %v95 = vunpack.c.h.b16 %v92
    %v96 = vpack.c.b16 %v94, %v94
    %v97 = vpack.c.b16 %v95, %v95
    %vm98 = vsmask.f32 4368
    %vm99 = vmor %vm85, %vm98
    %v101 = vshrl.u32 %v96, 16
    %v103 = vrot.slane %v101, 7
    %v104 = vshll.u32 %v96, 16
    %v106 = vor.u32 %v103, %v104
    %v107 = vrot.slane %v103, 4
    %v109 = vshrl.u32 %v97, 16
    %v111 = vrot.slane %v109, 7
    %v112 = vshll.u32 %v97, 16
    %v114 = vor.u32 %v111, %v112
    %v115 = vsel %vm99, %v107, %v114
    %v116 = vrot.slane %v111, 4
    %vm120 = vcmask 519168
    %vm121 = vsmask.f32 7938
    %vm122 = vmand %vm120, %vm121
    %v123 = vld [vmem:[#allocation2] sm:$0xf]
    %v124 = vsel %vm122, %v106, %v123
    %125 = vst [vmem:[#allocation2] sm:$0xf] %v124
    %vm126 = vcmask 519168
    %127 = vst.msk [vmem:[#allocation2 + $0x4] sm:$0xf] %vm126, %v115
    %v128 = vld [vmem:[#allocation2 + $0x8] sm:$0x1]
    %v129 = vsel %vm86, %v116, %v128
    %130 = vst [vmem:[#allocation2 + $0x8] sm:$0x1] %v129
    %vm131 = vmand %vm84, %vm121
    %v132 = vld [vmem:[#allocation2 + $0x8] sm:$0x1]
    %v133 = vsel %vm131, 0, %v132
    %134 = vst [vmem:[#allocation2 + $0x8] sm:$0x1] %v133
    %vm135 = vcmask 1040384
    %vm136 = vmand %vm135, %vm85
    %v137 = vld [vmem:[#allocation3] sm:$0x1]
    %v138 = vsel %vm136, 0, %v137
    %139 = vst [vmem:[#allocation3] sm:$0x1] %v138
    %vm140 = vmand %vm135, %vm121
    %v141 = vld [vmem:[#allocation3 + $0x8] sm:$0x1]
    %v142 = vsel %vm140, 0, %v141
    %143 = vst [vmem:[#allocation3 + $0x8] sm:$0x1] %v142
    %vm144 = vcmask 517121
    %vm145 = vsmask.f32 1280
    %vm146 = vmand %vm144, %vm145
    %v147 = vld [vmem:[#allocation2 + $0x8] sm:$0x2]
    %v148 = vsel %vm146, 0, %v147
    %149 = vst [vmem:[#allocation2 + $0x8] sm:$0x2] %v148
    %s150 = scalar_lea.vmem [#allocation5], 16
    %v151 = vld [vmem:[%s150] sm:$0xff]
    %v152 = vld [vmem:[%s150 + $0x8] sm:$0xff]
    %v153 = vpack.c.bf16 %v152, %v151
    %v155 = vunpack.c.l.b16 %v153
    %v156 = vunpack.c.h.b16 %v153
    %v157 = vpack.c.b16 %v155, %v155
    %v158 = vpack.c.b16 %v156, %v156
    %vm159 = vsmask.f32 5392
    %vm160 = vmor %vm145, %vm159
    %v162 = vshrl.u32 %v157, 16
    %v164 = vrot.slane %v162, 6
    %v165 = vshll.u32 %v157, 16
    %v167 = vrot.slane %v165, 7
    %v168 = vor.u32 %v164, %v167
    %v169 = vrot.slane %v168, 4
    %v171 = vshrl.u32 %v158, 16
    %v173 = vrot.slane %v171, 6
    %v174 = vshll.u32 %v158, 16
    %v176 = vrot.slane %v174, 7
    %v177 = vor.u32 %v173, %v176
    %v178 = vsel %vm160, %v169, %v177
    %v179 = vrot.slane %v177, 4
    %vm183 = vcmask 519169
    %vm184 = vsmask.f32 7942
    %vm185 = vmand %vm183, %vm184
    %v186 = vld [vmem:[#allocation2 + $0x8] sm:$0xe]
    %v187 = vsel %vm185, %v168, %v186
    %188 = vst [vmem:[#allocation2 + $0x8] sm:$0xe] %v187
    %189 = vst.msk [vmem:[#allocation2 + $0xc] sm:$0xf] %vm126, %v178
    %vm190 = vcmask 517120
    %vm191 = vmand %vm190, %vm145
    %v192 = vld [vmem:[#allocation2 + $0x10] sm:$0x3]
    %v193 = vsel %vm191, %v179, %v192
    %194 = vst [vmem:[#allocation2 + $0x10] sm:$0x3] %v193
    %vm195 = vmand %vm144, %vm184
    %v196 = vld [vmem:[#allocation2 + $0x10] sm:$0x2]
    %v197 = vsel %vm195, 0, %v196
    %198 = vst [vmem:[#allocation2 + $0x10] sm:$0x2] %v197
    %vm199 = vcmask 1041409
    %vm200 = vmand %vm199, %vm145
    %v201 = vld [vmem:[#allocation3 + $0x8] sm:$0x2]
    %v202 = vsel %vm200, 0, %v201
    %203 = vst [vmem:[#allocation3 + $0x8] sm:$0x2] %v202
    %vm204 = vmand %vm199, %vm184
    %v205 = vld [vmem:[#allocation3 + $0x10] sm:$0x2]
    %v206 = vsel %vm204, 0, %v205
    %207 = vst [vmem:[#allocation3 + $0x10] sm:$0x2] %v206
    %v208 = vld [vmem:[#allocation2] sm:$0xf]
    %v209 = vld [vmem:[#allocation2 + $0x4] sm:$0xf]
    %v210 = vld [vmem:[#allocation2 + $0x8] sm:$0xf]
    %v211 = vld [vmem:[#allocation2 + $0xc] sm:$0xf]
    %v212 = vld [vmem:[#allocation2 + $0x10] sm:$0x1]
    %v213 = vld [vmem:[#allocation8] sm:$0xf]
    %v214 = vld [vmem:[#allocation8 + $0x4] sm:$0xf]
    %v215 = vld [vmem:[#allocation8 + $0x8] sm:$0xf]
    %v216 = vld [vmem:[#allocation8 + $0xc] sm:$0xf]
    %v217 = vld [vmem:[#allocation8 + $0x10] sm:$0xf]
    %v218 = vld [vmem:[#allocation8 + $0x14] sm:$0xf]
    %v219 = vld [vmem:[#allocation8 + $0x18] sm:$0xf]
    %v220 = vld [vmem:[#allocation8 + $0x1c] sm:$0xf]
    %v221 = vld [vmem:[#allocation2 + $0x10] sm:$0x3]
    %s222 = scalar_lea.vmem [#allocation8], 32
    %v223 = vld [vmem:[%s222] sm:$0xf]
    %v224 = vld [vmem:[%s222 + $0x4] sm:$0xf]
    %v225 = vld [vmem:[%s222 + $0x8] sm:$0xf]
    %v226 = vld [vmem:[%s222 + $0xc] sm:$0xf]
    %v227 = vld [vmem:[%s222 + $0x10] sm:$0xf]
    %v228 = vld [vmem:[%s222 + $0x14] sm:$0xf]
    %v229 = vld [vmem:[%s222 + $0x18] sm:$0xf]
    %v230 = vld [vmem:[%s222 + $0x1c] sm:$0xf]
    %v236 = vunpack.c.l.b16 %v208
    %v237 = vunpack.c.l.b16 %v209
    %v238 = vunpack.c.l.b16 %v210
    %v239 = vunpack.c.l.b16 %v211
    %v240 = vunpack.c.l.b16 %v221
    %v241 = vpack.c.b16 %v237, %v236
    %v242 = vpack.c.b16 %v239, %v238
    %v243 = vpack.c.b16 %v240, %v240
    %vm244 = vsmask.f32 7424
    %v246 = vshrl.u32 %v241, 16
    %v248 = vshll.u32 %v241, 16
    %v250 = vrot.slane %v248, 1
    %v251 = vor.u32 %v246, %v250
    %v253 = vshll.u32 %v242, 16
    %v255 = vrot.slane %v253, 1
    %v256 = vsel %vm244, %v251, %v255
    %v257 = vshrl.u32 %v242, 16
    %v259 = vor.u32 %v257, %v255
    %v261 = vshll.u32 %v243, 16
    %v263 = vrot.slane %v261, 1
    %v264 = vsel %vm244, %v259, %v263
    %v265 = vshrl.u32 %v243, 16
    %v267 = vor.u32 %v265, %v263
    %v276 = vunpack.c.l.b16 %v223
    %v277 = vunpack.c.l.b16 %v224
    %v278 = vunpack.c.l.b16 %v225
    %v279 = vunpack.c.l.b16 %v226
    %v280 = vunpack.c.l.b16 %v227
    %v281 = vunpack.c.l.b16 %v228
    %v282 = vunpack.c.l.b16 %v229
    %v283 = vunpack.c.l.b16 %v230
    %v284 = vpack.c.b16 %v277, %v276
    %v285 = vpack.c.b16 %v279, %v278
    %v286 = vpack.c.b16 %v281, %v280
    %v287 = vpack.c.b16 %v283, %v282
    %vm292 = vcmask 523264
    %v294 = vsel %vm292, %v256, 0
    %v297 = vsel %vm292, %v264, 0
    %v300 = vsel %vm292, %v267, 0
    %302 = vmatprep.subr.bf16.mxu0 0
    %303 = vmatpush1.bf16.msra.mxu0 %v284
    %304 = vmatprep.subr.bf16.mxu0 0
    %305 = vmatpush1.bf16.msra.mxu0 %v285
    %306 = vmatprep.subr.bf16.mxu0 0
    %307 = vmatpush1.bf16.msra.mxu0 %v286
    %308 = vmatprep.subr.bf16.mxu0 0
    %309 = vmatpush1.bf16.msra.mxu0 %v287
    %310 = vmatprep.subr.bf16.mxu0 0
    %311 = vmatpush1.bf16.msra.mxu0 0
    %312 = vmatprep.subr.bf16.mxu0 0
    %313 = vmatpush1.bf16.msra.mxu0 0
    %314 = vmatprep.subr.bf16.mxu0 0
    %315 = vmatpush1.bf16.msra.mxu0 0
    %316 = vmatprep.subr.bf16.mxu0 0
    %317 = vmatpush1.bf16.msra.mxu0 0
    %318 = vmatprep.subr.bf16.mxu0 0
    %319 = vmatpush1.bf16.msra.mxu0 0
    %320 = vmatprep.subr.bf16.mxu0 0
    %321 = vmatpush1.bf16.msra.mxu0 0
    %322 = vmatprep.subr.bf16.mxu0 0
    %323 = vmatpush1.bf16.msra.mxu0 0
    %324 = vmatprep.subr.bf16.mxu0 0
    %325 = vmatpush1.bf16.msra.mxu0 0
    %326 = vmatprep.subr.bf16.mxu0 0
    %327 = vmatpush1.bf16.msra.mxu0 0
    %328 = vmatprep.subr.bf16.mxu0 0
    %329 = vmatpush1.bf16.msra.mxu0 0
    %330 = vmatprep.subr.bf16.mxu0 0
    %331 = vmatpush1.bf16.msra.mxu0 0
    %332 = vmatprep.subr.bf16.mxu0 0
    %333 = vmatpush1.bf16.msra.mxu0 0
    %334 = vmatprep.mubr.bf16.mxu0 0
    %335 = vmatmul.mubr.bf16.gmra.mrb[0].mxu0 %v294
    %v336 = vpop.f32.mrb[0].mxu0
    %v337 = vadd.f32 0.0, %v336
    %v338 = vpop.f32.mrb[0].mxu0
    %v339 = vpop.f32.mrb[0].mxu0
    %v340 = vadd.f32 0.0, %v339
    %v341 = vpop.f32.mrb[0].mxu0
    %342 = vmatprep.mubr.bf16.mxu0 0
    %343 = vmatmul.mubr.bf16.gmra.mrb[0].mxu0 %v297
    %v344 = vpop.f32.mrb[0].mxu0
    %v345 = vadd.f32 0.0, %v344
    %v346 = vpop.f32.mrb[0].mxu0
    %v347 = vpop.f32.mrb[0].mxu0
    %v348 = vadd.f32 0.0, %v347
    %v349 = vpop.f32.mrb[0].mxu0
    %350 = vmatprep.mubr.bf16.mxu0 0
    %351 = vmatmul.mubr.bf16.gmra.mrb[0].mxu0 %v300
    %v352 = vpop.f32.mrb[0].mxu0
    %v353 = vadd.f32 0.0, %v352
    %v354 = vpop.f32.mrb[0].mxu0
    %v355 = vpop.f32.mrb[0].mxu0
    %v356 = vpop.f32.mrb[0].mxu0
    %357 = vdwg.mxu0
    %v359 = vunpack.c.l.b16 %v212
    %v360 = vpack.c.b16 %v359, %v359
    %v369 = vunpack.c.l.b16 %v213
    %v370 = vunpack.c.l.b16 %v214
    %v371 = vunpack.c.l.b16 %v215
    %v372 = vunpack.c.l.b16 %v216
    %v373 = vunpack.c.l.b16 %v217
    %v374 = vunpack.c.l.b16 %v218
    %v375 = vunpack.c.l.b16 %v219
    %v376 = vunpack.c.l.b16 %v220
    %v377 = vpack.c.b16 %v370, %v369
    %v378 = vpack.c.b16 %v372, %v371
    %v379 = vpack.c.b16 %v374, %v373
    %v380 = vpack.c.b16 %v376, %v375
    %v385 = vsel %vm292, %v241, 0
    %v387 = vsel %vm292, %v242, 0
    %v390 = vsel %vm292, %v360, 0
    %392 = vmatprep.subr.bf16.mxu0 0
    %393 = vmatpush1.bf16.msra.mxu0 %v377
    %394 = vmatprep.subr.bf16.mxu0 0
    %395 = vmatpush1.bf16.msra.mxu0 %v378
    %396 = vmatprep.subr.bf16.mxu0 0
    %397 = vmatpush1.bf16.msra.mxu0 %v379
    %398 = vmatprep.subr.bf16.mxu0 0
    %399 = vmatpush1.bf16.msra.mxu0 %v380
    %400 = vmatprep.subr.bf16.mxu0 0
    %401 = vmatpush1.bf16.msra.mxu0 0
    %402 = vmatprep.subr.bf16.mxu0 0
    %403 = vmatpush1.bf16.msra.mxu0 0
    %404 = vmatprep.subr.bf16.mxu0 0
    %405 = vmatpush1.bf16.msra.mxu0 0
    %406 = vmatprep.subr.bf16.mxu0 0
    %407 = vmatpush1.bf16.msra.mxu0 0
    %408 = vmatprep.subr.bf16.mxu0 0
    %409 = vmatpush1.bf16.msra.mxu0 0
    %410 = vmatprep.subr.bf16.mxu0 0
    %411 = vmatpush1.bf16.msra.mxu0 0
    %412 = vmatprep.subr.bf16.mxu0 0
    %413 = vmatpush1.bf16.msra.mxu0 0
    %414 = vmatprep.subr.bf16.mxu0 0
    %415 = vmatpush1.bf16.msra.mxu0 0
    %416 = vmatprep.subr.bf16.mxu0 0
    %417 = vmatpush1.bf16.msra.mxu0 0
    %418 = vmatprep.subr.bf16.mxu0 0
    %419 = vmatpush1.bf16.msra.mxu0 0
    %420 = vmatprep.subr.bf16.mxu0 0
    %421 = vmatpush1.bf16.msra.mxu0 0
    %422 = vmatprep.subr.bf16.mxu0 0
    %423 = vmatpush1.bf16.msra.mxu0 0
    %424 = vmatprep.mubr.bf16.mxu0 0
    %425 = vmatmul.mubr.bf16.gmra.mrb[0].mxu0 %v385
    %v426 = vpop.f32.mrb[0].mxu0
    %v427 = vadd.f32 %v337, %v426
    %v428 = vpop.f32.mrb[0].mxu0
    %v429 = vpop.f32.mrb[0].mxu0
    %v430 = vadd.f32 %v340, %v429
    %v431 = vpop.f32.mrb[0].mxu0
    %432 = vmatprep.mubr.bf16.mxu0 0
    %433 = vmatmul.mubr.bf16.gmra.mrb[0].mxu0 %v387
    %v434 = vpop.f32.mrb[0].mxu0
    %v435 = vadd.f32 %v345, %v434
    %v436 = vpop.f32.mrb[0].mxu0
    %v437 = vpop.f32.mrb[0].mxu0
    %v438 = vadd.f32 %v348, %v437
    %v439 = vpop.f32.mrb[0].mxu0
    %440 = vmatprep.mubr.bf16.mxu0 0
    %441 = vmatmul.mubr.bf16.gmra.mrb[0].mxu0 %v390
    %v442 = vpop.f32.mrb[0].mxu0
    %v443 = vadd.f32 %v353, %v442
    %v444 = vpop.f32.mrb[0].mxu0
    %v445 = vpop.f32.mrb[0].mxu0
    %v446 = vpop.f32.mrb[0].mxu0
    %447 = vdwg.mxu0
    %v448 = vld [vmem:[#allocation2] sm:$0xe]
    %s449 = scalar_lea.vmem [#allocation8], 64
    %v450 = vld [vmem:[%s449] sm:$0xf]
    %v451 = vld [vmem:[%s449 + $0x4] sm:$0xf]
    %v452 = vld [vmem:[%s449 + $0x8] sm:$0xf]
    %v453 = vld [vmem:[%s449 + $0xc] sm:$0xf]
    %v454 = vld [vmem:[%s449 + $0x10] sm:$0xf]
    %v455 = vld [vmem:[%s449 + $0x14] sm:$0xf]
    %v456 = vld [vmem:[%s449 + $0x18] sm:$0xf]
    %v457 = vld [vmem:[%s449 + $0x1c] sm:$0xf]
    %v459 = vunpack.c.l.b16 %v448
    %v460 = vpack.c.b16 %v237, %v459
    %vm461 = vcmask 1046528
    %v462 = vrot.slane %v460, 1
    %v463 = vrot.slane %v242, 1
    %v464 = vsel %vm461, %v462, %v463
    %v465 = vrot.slane %v243, 1
    %v466 = vsel %vm461, %v463, %v465
    %v475 = vunpack.c.l.b16 %v450
    %v476 = vunpack.c.l.b16 %v451
    %v477 = vunpack.c.l.b16 %v452
    %v478 = vunpack.c.l.b16 %v453
    %v479 = vunpack.c.l.b16 %v454
    %v480 = vunpack.c.l.b16 %v455
    %v481 = vunpack.c.l.b16 %v456
    %v482 = vunpack.c.l.b16 %v457
    %v483 = vpack.c.b16 %v476, %v475
    %v484 = vpack.c.b16 %v478, %v477
    %v485 = vpack.c.b16 %v480, %v479
    %v486 = vpack.c.b16 %v482, %v481
    %v492 = vsel %vm292, %v464, 0
    %v495 = vsel %vm292, %v466, 0
    %v498 = vsel %vm292, %v465, 0
    %500 = vmatprep.subr.bf16.mxu0 0
    %501 = vmatpush1.bf16.msra.mxu0 %v483
    %502 = vmatprep.subr.bf16.mxu0 0
    %503 = vmatpush1.bf16.msra.mxu0 %v484
    %504 = vmatprep.subr.bf16.mxu0 0
    %505 = vmatpush1.bf16.msra.mxu0 %v485
    %506 = vmatprep.subr.bf16.mxu0 0
    %507 = vmatpush1.bf16.msra.mxu0 %v486
    %508 = vmatprep.subr.bf16.mxu0 0
    %509 = vmatpush1.bf16.msra.mxu0 0
    %510 = vmatprep.subr.bf16.mxu0 0
    %511 = vmatpush1.bf16.msra.mxu0 0
    %512 = vmatprep.subr.bf16.mxu0 0
    %513 = vmatpush1.bf16.msra.mxu0 0
    %514 = vmatprep.subr.bf16.mxu0 0
    %515 = vmatpush1.bf16.msra.mxu0 0
    %516 = vmatprep.subr.bf16.mxu0 0
    %517 = vmatpush1.bf16.msra.mxu0 0
    %518 = vmatprep.subr.bf16.mxu0 0
    %519 = vmatpush1.bf16.msra.mxu0 0
    %520 = vmatprep.subr.bf16.mxu0 0
    %521 = vmatpush1.bf16.msra.mxu0 0
    %522 = vmatprep.subr.bf16.mxu0 0
    %523 = vmatpush1.bf16.msra.mxu0 0
    %524 = vmatprep.subr.bf16.mxu0 0
    %525 = vmatpush1.bf16.msra.mxu0 0
    %526 = vmatprep.subr.bf16.mxu0 0
    %527 = vmatpush1.bf16.msra.mxu0 0
    %528 = vmatprep.subr.bf16.mxu0 0
    %529 = vmatpush1.bf16.msra.mxu0 0
    %530 = vmatprep.subr.bf16.mxu0 0
    %531 = vmatpush1.bf16.msra.mxu0 0
    %532 = vmatprep.mubr.bf16.mxu0 0
    %533 = vmatmul.mubr.bf16.gmra.mrb[0].mxu0 %v492
    %v534 = vpop.f32.mrb[0].mxu0
    %v535 = vadd.f32 0.0, %v534
    %v536 = vpop.f32.mrb[0].mxu0
    %v537 = vpop.f32.mrb[0].mxu0
    %v538 = vadd.f32 0.0, %v537
    %v539 = vpop.f32.mrb[0].mxu0
    %540 = vmatprep.mubr.bf16.mxu0 0
    %541 = vmatmul.mubr.bf16.gmra.mrb[0].mxu0 %v495
    %v542 = vpop.f32.mrb[0].mxu0
    %v543 = vadd.f32 0.0, %v542
    %v544 = vpop.f32.mrb[0].mxu0
    %v545 = vpop.f32.mrb[0].mxu0
    %v546 = vadd.f32 0.0, %v545
    %v547 = vpop.f32.mrb[0].mxu0
    %548 = vmatprep.mubr.bf16.mxu0 0
    %549 = vmatmul.mubr.bf16.gmra.mrb[0].mxu0 %v498
    %v550 = vpop.f32.mrb[0].mxu0
    %v551 = vadd.f32 0.0, %v550
    %v552 = vpop.f32.mrb[0].mxu0
    %v553 = vpop.f32.mrb[0].mxu0
    %v554 = vpop.f32.mrb[0].mxu0
    %555 = vdwg.mxu0
    %v556 = vadd.f32 %v427, %v535
    %v557 = vadd.f32 %v430, %v538
    %v558 = vadd.f32 %v435, %v543
    %v559 = vadd.f32 %v438, %v546
    %v560 = vadd.f32 %v443, %v551
    %v561 = vld [vmem:[%s3] sm:$0x1]
    %v563 = vlaneseq
    %v564 = vshrl.u32 %v563, 7
    %v565 = vsub.s32 0, %v564
    %v566 = vrot.slane %v561, %v565
    %v568 = vadd.f32 %v556, %v566
    %v569 = vadd.f32 %v557, %v566
    %v570 = vadd.f32 %v558, %v566
    %v571 = vadd.f32 %v559, %v566
    %v572 = vadd.f32 %v560, %v566
    %573 = vst [vmem:[#allocation4] sm:$0xff] %v568
    %574 = vst [vmem:[#allocation4 + $0x8] sm:$0xff] %v569
    %575 = vst [vmem:[#allocation4 + $0x10] sm:$0xff] %v570
    %576 = vst [vmem:[#allocation4 + $0x18] sm:$0xff] %v571
    %577 = vst [vmem:[#allocation4 + $0x20] sm:$0x3] %v572
    %v578 = vld [vmem:[%s4] sm:$0x1]
    %v580 = vlaneseq
    %v581 = vshrl.u32 %v580, 7
    %v582 = vsub.s32 0, %v581
    %v583 = vrot.slane %v578, %v582
    %v585 = vmul.f32 %v568, %v583
    %v586 = vmul.f32 %v569, %v583
    %v587 = vmul.f32 %v570, %v583
    %v588 = vmul.f32 %v571, %v583
    %v589 = vmul.f32 %v572, %v583
    %v590 = vld [vmem:[%s5] sm:$0x1]
    %v592 = vlaneseq
    %v593 = vshrl.u32 %v592, 7
    %v594 = vsub.s32 0, %v593
    %v595 = vrot.slane %v590, %v594
    %v597 = vadd.f32 %v585, %v595
    %v598 = vadd.f32 %v586, %v595
    %v599 = vadd.f32 %v587, %v595
    %v600 = vadd.f32 %v588, %v595
    %v601 = vadd.f32 %v589, %v595
    %v602 = vmax.f32 %v597, 0.0
    %v603 = vmax.f32 %v598, 0.0
    %v604 = vmax.f32 %v599, 0.0
    %v605 = vmax.f32 %v600, 0.0
    %v606 = vmax.f32 %v601, 0.0
    %v607 = vpack.c.bf16 %v603, %v602
    %v609 = vunpack.c.l.b16 %v607
    %v610 = vunpack.c.h.b16 %v607
    %v611 = vpack.c.b16 %v609, %v609
    %v612 = vpack.c.b16 %v610, %v610
    %v614 = vshrl.u32 %v611, 16
    %v616 = vrot.slane %v614, 7
    %v617 = vshll.u32 %v611, 16
    %v619 = vor.u32 %v616, %v617
    %v620 = vrot.slane %v616, 4
    %v622 = vshrl.u32 %v612, 16
    %v624 = vrot.slane %v622, 7
    %v625 = vshll.u32 %v612, 16
    %v627 = vor.u32 %v624, %v625
    %v628 = vsel %vm99, %v620, %v627
    %v629 = vrot.slane %v624, 4
    %vm633 = vcmask 1043456
    %vm634 = vmand %vm633, %vm121
    %v635 = vld [vmem:[#allocation3] sm:$0xf]
    %v636 = vsel %vm634, %v619, %v635
    %637 = vst [vmem:[#allocation3] sm:$0xf] %v636
    %638 = vst [vmem:[#allocation3 + $0x4] sm:$0xf] %v628
    %v639 = vld [vmem:[#allocation3 + $0x8] sm:$0x1]
    %v640 = vsel %vm136, %v629, %v639
    %641 = vst [vmem:[#allocation3 + $0x8] sm:$0x1] %v640
    %v642 = vpack.c.bf16 %v605, %v604
    %v643 = vpack.c.bf16 %v606, %v606
    %v646 = vunpack.c.l.b16 %v642
    %v647 = vunpack.c.h.b16 %v642
    %v648 = vunpack.c.l.b16 %v643
    %v649 = vpack.c.b16 %v646, %v646
    %v650 = vpack.c.b16 %v647, %v647
    %v651 = vpack.c.b16 %v648, %v648
    %v653 = vshrl.u32 %v649, 16
    %v655 = vrot.slane %v653, 7
    %v656 = vshll.u32 %v649, 16
    %v658 = vor.u32 %v655, %v656
    %v659 = vrot.slane %v655, 4
    %v661 = vshrl.u32 %v650, 16
    %v663 = vrot.slane %v661, 7
    %v664 = vshll.u32 %v650, 16
    %v666 = vor.u32 %v663, %v664
    %v667 = vsel %vm99, %v659, %v666
    %v668 = vrot.slane %v663, 4
    %v670 = vshrl.u32 %v651, 16
    %v672 = vrot.slane %v670, 7
    %v673 = vshll.u32 %v651, 16
    %v675 = vor.u32 %v672, %v673
    %v676 = vsel %vm99, %v668, %v675
    %vm680 = vcmask 1043457
    %vm681 = vmand %vm680, %vm184
    %v682 = vld [vmem:[#allocation3 + $0x8] sm:$0xe]
    %v683 = vsel %vm681, %v658, %v682
    %684 = vst [vmem:[#allocation3 + $0x8] sm:$0xe] %v683
    %685 = vst [vmem:[#allocation3 + $0xc] sm:$0xf] %v667
    %vm686 = vcmask 1041408
    %vm687 = vmand %vm686, %vm145
    %v688 = vld [vmem:[#allocation3 + $0x10] sm:$0x3]
    %v689 = vsel %vm687, %v676, %v688
    %690 = vst [vmem:[#allocation3 + $0x10] sm:$0x3] %v689
    %v691 = vld [vmem:[#allocation3] sm:$0xf]
    %v692 = vld [vmem:[#allocation3 + $0x4] sm:$0xf]
    %v693 = vld [vmem:[#allocation3 + $0x8] sm:$0xf]
    %v694 = vld [vmem:[#allocation3 + $0xc] sm:$0xf]
    %v695 = vld [vmem:[#allocation3 + $0x10] sm:$0x1]
    %v696 = vld [vmem:[#allocation10] sm:$0xf]
    %v697 = vld [vmem:[#allocation10 + $0x4] sm:$0xf]
    %v698 = vld [vmem:[#allocation10 + $0x8] sm:$0xf]
    %v699 = vld [vmem:[#allocation10 + $0xc] sm:$0xf]
    %v700 = vld [vmem:[#allocation10 + $0x10] sm:$0xf]
    %v701 = vld [vmem:[#allocation10 + $0x14] sm:$0xf]
    %v702 = vld [vmem:[#allocation10 + $0x18] sm:$0xf]
    %v703 = vld [vmem:[#allocation10 + $0x1c] sm:$0xf]
    %v704 = vld [vmem:[#allocation10 + $0x20] sm:$0xf]
    %v705 = vld [vmem:[#allocation10 + $0x24] sm:$0xf]
    %v706 = vld [vmem:[#allocation10 + $0x28] sm:$0xf]
    %v707 = vld [vmem:[#allocation10 + $0x2c] sm:$0xf]
    %v708 = vld [vmem:[#allocation10 + $0x30] sm:$0xf]
    %v709 = vld [vmem:[#allocation10 + $0x34] sm:$0xf]
    %v710 = vld [vmem:[#allocation10 + $0x38] sm:$0xf]
    %v711 = vld [vmem:[#allocation10 + $0x3c] sm:$0xf]
    %v712 = vld [vmem:[#allocation3 + $0x10] sm:$0x3]
    %s713 = scalar_lea.vmem [#allocation10], 64
    %v714 = vld [vmem:[%s713] sm:$0xf]
    %v715 = vld [vmem:[%s713 + $0x4] sm:$0xf]
    %v716 = vld [vmem:[%s713 + $0x8] sm:$0xf]
    %v717 = vld [vmem:[%s713 + $0xc] sm:$0xf]
    %v718 = vld [vmem:[%s713 + $0x10] sm:$0xf]
    %v719 = vld [vmem:[%s713 + $0x14] sm:$0xf]
    %v720 = vld [vmem:[%s713 + $0x18] sm:$0xf]
    %v721 = vld [vmem:[%s713 + $0x1c] sm:$0xf]
    %v722 = vld [vmem:[%s713 + $0x20] sm:$0xf]
    %v723 = vld [vmem:[%s713 + $0x24] sm:$0xf]
    %v724 = vld [vmem:[%s713 + $0x28] sm:$0xf]
    %v725 = vld [vmem:[%s713 + $0x2c] sm:$0xf]
    %v726 = vld [vmem:[%s713 + $0x30] sm:$0xf]
    %v727 = vld [vmem:[%s713 + $0x34] sm:$0xf]
    %v728 = vld [vmem:[%s713 + $0x38] sm:$0xf]
    %v729 = vld [vmem:[%s713 + $0x3c] sm:$0xf]
    %v735 = vunpack.c.l.b16 %v691
    %v736 = vunpack.c.l.b16 %v692
    %v737 = vunpack.c.l.b16 %v693
    %v738 = vunpack.c.l.b16 %v694
    %v739 = vunpack.c.l.b16 %v712
    %v740 = vpack.c.b16 %v736, %v735
    %v741 = vpack.c.b16 %v738, %v737
    %v742 = vpack.c.b16 %v739, %v739
    %v744 = vshrl.u32 %v740, 16
    %v746 = vshll.u32 %v740, 16
    %v748 = vrot.slane %v746, 1
    %v749 = vor.u32 %v744, %v748
    %v751 = vshll.u32 %v741, 16
    %v753 = vrot.slane %v751, 1
    %v754 = vsel %vm244, %v749, %v753
    %v755 = vshrl.u32 %v741, 16
    %v757 = vor.u32 %v755, %v753
    %v759 = vshll.u32 %v742, 16
    %v761 = vrot.slane %v759, 1
    %v762 = vsel %vm244, %v757, %v761
    %v763 = vshrl.u32 %v742, 16
    %v765 = vor.u32 %v763, %v761
    %v785 = vunpack.c.l.b16 %v714
    %v786 = vunpack.c.l.b16 %v715
    %v787 = vunpack.c.l.b16 %v716
    %v788 = vunpack.c.l.b16 %v717
    %v789 = vunpack.c.l.b16 %v718
    %v790 = vunpack.c.l.b16 %v719
    %v791 = vunpack.c.l.b16 %v720
    %v792 = vunpack.c.l.b16 %v721
    %v793 = vunpack.c.l.b16 %v722
    %v794 = vunpack.c.l.b16 %v723
    %v795 = vunpack.c.l.b16 %v724
    %v796 = vunpack.c.l.b16 %v725
    %v797 = vunpack.c.l.b16 %v726
    %v798 = vunpack.c.l.b16 %v727
    %v799 = vunpack.c.l.b16 %v728
    %v800 = vunpack.c.l.b16 %v729
    %v801 = vpack.c.b16 %v786, %v785
    %v802 = vpack.c.b16 %v788, %v787
    %v803 = vpack.c.b16 %v790, %v789
    %v804 = vpack.c.b16 %v792, %v791
    %v805 = vpack.c.b16 %v794, %v793
    %v806 = vpack.c.b16 %v796, %v795
    %v807 = vpack.c.b16 %v798, %v797
    %v808 = vpack.c.b16 %v800, %v799
    %817 = vmatprep.subr.bf16.mxu0 0
    %818 = vmatpush1.bf16.msra.mxu0 %v801
    %819 = vmatprep.subr.bf16.mxu0 0
    %820 = vmatpush1.bf16.msra.mxu0 %v802
    %821 = vmatprep.subr.bf16.mxu0 0
    %822 = vmatpush1.bf16.msra.mxu0 %v803
    %823 = vmatprep.subr.bf16.mxu0 0
    %824 = vmatpush1.bf16.msra.mxu0 %v804
    %825 = vmatprep.subr.bf16.mxu0 0
    %826 = vmatpush1.bf16.msra.mxu0 %v805
    %827 = vmatprep.subr.bf16.mxu0 0
    %828 = vmatpush1.bf16.msra.mxu0 %v806
    %829 = vmatprep.subr.bf16.mxu0 0
    %830 = vmatpush1.bf16.msra.mxu0 %v807
    %831 = vmatprep.subr.bf16.mxu0 0
    %832 = vmatpush1.bf16.msra.mxu0 %v808
    %833 = vmatprep.subr.bf16.mxu0 0
    %834 = vmatpush1.bf16.msra.mxu0 0
    %835 = vmatprep.subr.bf16.mxu0 0
    %836 = vmatpush1.bf16.msra.mxu0 0
    %837 = vmatprep.subr.bf16.mxu0 0
    %838 = vmatpush1.bf16.msra.mxu0 0
    %839 = vmatprep.subr.bf16.mxu0 0
    %840 = vmatpush1.bf16.msra.mxu0 0
    %841 = vmatprep.subr.bf16.mxu0 0
    %842 = vmatpush1.bf16.msra.mxu0 0
    %843 = vmatprep.subr.bf16.mxu0 0
    %844 = vmatpush1.bf16.msra.mxu0 0
    %845 = vmatprep.subr.bf16.mxu0 0
    %846 = vmatpush1.bf16.msra.mxu0 0
    %847 = vmatprep.subr.bf16.mxu0 0
    %848 = vmatpush1.bf16.msra.mxu0 0
    %849 = vmatprep.mubr.bf16.mxu0 0
    %850 = vmatmul.mubr.bf16.gmra.mrb[0].mxu0 %v754
    %v851 = vpop.f32.mrb[0].mxu0
    %v852 = vadd.f32 0.0, %v851
    %v853 = vpop.f32.mrb[0].mxu0
    %v854 = vpop.f32.mrb[0].mxu0
    %v855 = vadd.f32 0.0, %v854
    %v856 = vpop.f32.mrb[0].mxu0
    %857 = vmatprep.mubr.bf16.mxu0 0
    %858 = vmatmul.mubr.bf16.gmra.mrb[0].mxu0 %v762
    %v859 = vpop.f32.mrb[0].mxu0
    %v860 = vadd.f32 0.0, %v859
    %v861 = vpop.f32.mrb[0].mxu0
    %v862 = vpop.f32.mrb[0].mxu0
    %v863 = vadd.f32 0.0, %v862
    %v864 = vpop.f32.mrb[0].mxu0
    %865 = vmatprep.mubr.bf16.mxu0 0
    %866 = vmatmul.mubr.bf16.gmra.mrb[0].mxu0 %v765
    %v867 = vpop.f32.mrb[0].mxu0
    %v868 = vadd.f32 0.0, %v867
    %v869 = vpop.f32.mrb[0].mxu0
    %v870 = vpop.f32.mrb[0].mxu0
    %v871 = vpop.f32.mrb[0].mxu0
    %872 = vdwg.mxu0
    %v874 = vunpack.c.l.b16 %v695
    %v875 = vpack.c.b16 %v874, %v874
    %v895 = vunpack.c.l.b16 %v696
    %v896 = vunpack.c.l.b16 %v697
    %v897 = vunpack.c.l.b16 %v698
    %v898 = vunpack.c.l.b16 %v699
    %v899 = vunpack.c.l.b16 %v700
    %v900 = vunpack.c.l.b16 %v701
    %v901 = vunpack.c.l.b16 %v702
    %v902 = vunpack.c.l.b16 %v703
    %v903 = vunpack.c.l.b16 %v704
    %v904 = vunpack.c.l.b16 %v705
    %v905 = vunpack.c.l.b16 %v706
    %v906 = vunpack.c.l.b16 %v707
    %v907 = vunpack.c.l.b16 %v708
    %v908 = vunpack.c.l.b16 %v709
    %v909 = vunpack.c.l.b16 %v710
    %v910 = vunpack.c.l.b16 %v711
    %v911 = vpack.c.b16 %v896, %v895
    %v912 = vpack.c.b16 %v898, %v897
    %v913 = vpack.c.b16 %v900, %v899
    %v914 = vpack.c.b16 %v902, %v901
    %v915 = vpack.c.b16 %v904, %v903
    %v916 = vpack.c.b16 %v906, %v905
    %v917 = vpack.c.b16 %v908, %v907
    %v918 = vpack.c.b16 %v910, %v909
    %927 = vmatprep.subr.bf16.mxu0 0
    %928 = vmatpush1.bf16.msra.mxu0 %v911
    %929 = vmatprep.subr.bf16.mxu0 0
    %930 = vmatpush1.bf16.msra.mxu0 %v912
    %931 = vmatprep.subr.bf16.mxu0 0
    %932 = vmatpush1.bf16.msra.mxu0 %v913
    %933 = vmatprep.subr.bf16.mxu0 0
    %934 = vmatpush1.bf16.msra.mxu0 %v914
    %935 = vmatprep.subr.bf16.mxu0 0
    %936 = vmatpush1.bf16.msra.mxu0 %v915
    %937 = vmatprep.subr.bf16.mxu0 0
    %938 = vmatpush1.bf16.msra.mxu0 %v916
    %939 = vmatprep.subr.bf16.mxu0 0
    %940 = vmatpush1.bf16.msra.mxu0 %v917
    %941 = vmatprep.subr.bf16.mxu0 0
    %942 = vmatpush1.bf16.msra.mxu0 %v918
    %943 = vmatprep.subr.bf16.mxu0 0
    %944 = vmatpush1.bf16.msra.mxu0 0
    %945 = vmatprep.subr.bf16.mxu0 0
    %946 = vmatpush1.bf16.msra.mxu0 0
    %947 = vmatprep.subr.bf16.mxu0 0
    %948 = vmatpush1.bf16.msra.mxu0 0
    %949 = vmatprep.subr.bf16.mxu0 0
    %950 = vmatpush1.bf16.msra.mxu0 0
    %951 = vmatprep.subr.bf16.mxu0 0
    %952 = vmatpush1.bf16.msra.mxu0 0
    %953 = vmatprep.subr.bf16.mxu0 0
    %954 = vmatpush1.bf16.msra.mxu0 0
    %955 = vmatprep.subr.bf16.mxu0 0
    %956 = vmatpush1.bf16.msra.mxu0 0
    %957 = vmatprep.subr.bf16.mxu0 0
    %958 = vmatpush1.bf16.msra.mxu0 0
    %959 = vmatprep.mubr.bf16.mxu0 0
    %960 = vmatmul.mubr.bf16.gmra.mrb[0].mxu0 %v740
    %v961 = vpop.f32.mrb[0].mxu0
    %v962 = vadd.f32 %v852, %v961
    %v963 = vpop.f32.mrb[0].mxu0
    %v964 = vpop.f32.mrb[0].mxu0
    %v965 = vadd.f32 %v855, %v964
    %v966 = vpop.f32.mrb[0].mxu0
    %967 = vmatprep.mubr.bf16.mxu0 0
    %968 = vmatmul.mubr.bf16.gmra.mrb[0].mxu0 %v741
    %v969 = vpop.f32.mrb[0].mxu0
    %v970 = vadd.f32 %v860, %v969
    %v971 = vpop.f32.mrb[0].mxu0
    %v972 = vpop.f32.mrb[0].mxu0
    %v973 = vadd.f32 %v863, %v972
    %v974 = vpop.f32.mrb[0].mxu0
    %975 = vmatprep.mubr.bf16.mxu0 0
    %976 = vmatmul.mubr.bf16.gmra.mrb[0].mxu0 %v875
    %v977 = vpop.f32.mrb[0].mxu0
    %v978 = vadd.f32 %v868, %v977
    %v979 = vpop.f32.mrb[0].mxu0
    %v980 = vpop.f32.mrb[0].mxu0
    %v981 = vpop.f32.mrb[0].mxu0
    %982 = vdwg.mxu0
    %v983 = vld [vmem:[#allocation3] sm:$0xe]
    %s984 = scalar_lea.vmem [#allocation10], 128
    %v985 = vld [vmem:[%s984] sm:$0xf]
    %v986 = vld [vmem:[%s984 + $0x4] sm:$0xf]
    %v987 = vld [vmem:[%s984 + $0x8] sm:$0xf]
    %v988 = vld [vmem:[%s984 + $0xc] sm:$0xf]
    %v989 = vld [vmem:[%s984 + $0x10] sm:$0xf]
    %v990 = vld [vmem:[%s984 + $0x14] sm:$0xf]
    %v991 = vld [vmem:[%s984 + $0x18] sm:$0xf]
    %v992 = vld [vmem:[%s984 + $0x1c] sm:$0xf]
    %v993 = vld [vmem:[%s984 + $0x20] sm:$0xf]
    %v994 = vld [vmem:[%s984 + $0x24] sm:$0xf]
    %v995 = vld [vmem:[%s984 + $0x28] sm:$0xf]
    %v996 = vld [vmem:[%s984 + $0x2c] sm:$0xf]
    %v997 = vld [vmem:[%s984 + $0x30] sm:$0xf]
    %v998 = vld [vmem:[%s984 + $0x34] sm:$0xf]
    %v999 = vld [vmem:[%s984 + $0x38] sm:$0xf]
    %v1000 = vld [vmem:[%s984 + $0x3c] sm:$0xf]
    %v1002 = vunpack.c.l.b16 %v983
    %v1003 = vpack.c.b16 %v736, %v1002
    %v1004 = vrot.slane %v1003, 1
    %v1005 = vrot.slane %v741, 1
    %v1006 = vsel %vm461, %v1004, %v1005
    %v1007 = vrot.slane %v742, 1
    %v1008 = vsel %vm461, %v1005, %v1007
    %v1028 = vunpack.c.l.b16 %v985
    %v1029 = vunpack.c.l.b16 %v986
    %v1030 = vunpack.c.l.b16 %v987
    %v1031 = vunpack.c.l.b16 %v988
    %v1032 = vunpack.c.l.b16 %v989
    %v1033 = vunpack.c.l.b16 %v990
    %v1034 = vunpack.c.l.b16 %v991
    %v1035 = vunpack.c.l.b16 %v992
    %v1036 = vunpack.c.l.b16 %v993
    %v1037 = vunpack.c.l.b16 %v994
    %v1038 = vunpack.c.l.b16 %v995
    %v1039 = vunpack.c.l.b16 %v996
    %v1040 = vunpack.c.l.b16 %v997
    %v1041 = vunpack.c.l.b16 %v998
    %v1042 = vunpack.c.l.b16 %v999
    %v1043 = vunpack.c.l.b16 %v1000
    %v1044 = vpack.c.b16 %v1029, %v1028
    %v1045 = vpack.c.b16 %v1031, %v1030
    %v1046 = vpack.c.b16 %v1033, %v1032
    %v1047 = vpack.c.b16 %v1035, %v1034
    %v1048 = vpack.c.b16 %v1037, %v1036
    %v1049 = vpack.c.b16 %v1039, %v1038
    %v1050 = vpack.c.b16 %v1041, %v1040
    %v1051 = vpack.c.b16 %v1043, %v1042
    %1060 = vmatprep.subr.bf16.mxu0 0
    %1061 = vmatpush1.bf16.msra.mxu0 %v1044
    %1062 = vmatprep.subr.bf16.mxu0 0
    %1063 = vmatpush1.bf16.msra.mxu0 %v1045
    %1064 = vmatprep.subr.bf16.mxu0 0
    %1065 = vmatpush1.bf16.msra.mxu0 %v1046
    %1066 = vmatprep.subr.bf16.mxu0 0
    %1067 = vmatpush1.bf16.msra.mxu0 %v1047
    %1068 = vmatprep.subr.bf16.mxu0 0
    %1069 = vmatpush1.bf16.msra.mxu0 %v1048
    %1070 = vmatprep.subr.bf16.mxu0 0
    %1071 = vmatpush1.bf16.msra.mxu0 %v1049
    %1072 = vmatprep.subr.bf16.mxu0 0
    %1073 = vmatpush1.bf16.msra.mxu0 %v1050
    %1074 = vmatprep.subr.bf16.mxu0 0
    %1075 = vmatpush1.bf16.msra.mxu0 %v1051
    %1076 = vmatprep.subr.bf16.mxu0 0
    %1077 = vmatpush1.bf16.msra.mxu0 0
    %1078 = vmatprep.subr.bf16.mxu0 0
    %1079 = vmatpush1.bf16.msra.mxu0 0
    %1080 = vmatprep.subr.bf16.mxu0 0
    %1081 = vmatpush1.bf16.msra.mxu0 0
    %1082 = vmatprep.subr.bf16.mxu0 0
    %1083 = vmatpush1.bf16.msra.mxu0 0
    %1084 = vmatprep.subr.bf16.mxu0 0
    %1085 = vmatpush1.bf16.msra.mxu0 0
    %1086 = vmatprep.subr.bf16.mxu0 0
    %1087 = vmatpush1.bf16.msra.mxu0 0
    %1088 = vmatprep.subr.bf16.mxu0 0
    %1089 = vmatpush1.bf16.msra.mxu0 0
    %1090 = vmatprep.subr.bf16.mxu0 0
    %1091 = vmatpush1.bf16.msra.mxu0 0
    %1092 = vmatprep.mubr.bf16.mxu0 0
    %1093 = vmatmul.mubr.bf16.gmra.mrb[0].mxu0 %v1006
    %v1094 = vpop.f32.mrb[0].mxu0
    %v1095 = vadd.f32 0.0, %v1094
    %v1096 = vpop.f32.mrb[0].mxu0
    %v1097 = vpop.f32.mrb[0].mxu0
    %v1098 = vadd.f32 0.0, %v1097
    %v1099 = vpop.f32.mrb[0].mxu0
    %1100 = vmatprep.mubr.bf16.mxu0 0
    %1101 = vmatmul.mubr.bf16.gmra.mrb[0].mxu0 %v1008
    %v1102 = vpop.f32.mrb[0].mxu0
    %v1103 = vadd.f32 0.0, %v1102
    %v1104 = vpop.f32.mrb[0].mxu0
    %v1105 = vpop.f32.mrb[0].mxu0
    %v1106 = vadd.f32 0.0, %v1105
    %v1107 = vpop.f32.mrb[0].mxu0
    %1108 = vmatprep.mubr.bf16.mxu0 0
    %1109 = vmatmul.mubr.bf16.gmra.mrb[0].mxu0 %v1007
    %v1110 = vpop.f32.mrb[0].mxu0
    %v1111 = vadd.f32 0.0, %v1110
    %v1112 = vpop.f32.mrb[0].mxu0
    %v1113 = vpop.f32.mrb[0].mxu0
    %v1114 = vpop.f32.mrb[0].mxu0
    %1115 = vdwg.mxu0
    %v1116 = vadd.f32 %v962, %v1095
    %v1117 = vadd.f32 %v965, %v1098
    %v1118 = vadd.f32 %v970, %v1103
    %v1119 = vadd.f32 %v973, %v1106
    %v1120 = vadd.f32 %v978, %v1111
    %v1121 = vld [vmem:[%s6] sm:$0x1]
    %v1123 = vlaneseq
    %v1124 = vshrl.u32 %v1123, 7
    %v1125 = vsub.s32 0, %v1124
    %v1126 = vrot.slane %v1121, %v1125
    %v1128 = vmul.f32 %v1116, %v1126
    %v1129 = vmul.f32 %v1117, %v1126
    %v1130 = vmul.f32 %v1118, %v1126
    %v1131 = vmul.f32 %v1119, %v1126
    %v1132 = vmul.f32 %v1120, %v1126
    %v1133 = vld [vmem:[%s7] sm:$0x1]
    %v1135 = vlaneseq
    %v1136 = vshrl.u32 %v1135, 7
    %v1137 = vsub.s32 0, %v1136
    %v1138 = vrot.slane %v1133, %v1137
    %v1140 = vadd.f32 %v1128, %v1138
    %v1141 = vadd.f32 %v1129, %v1138
    %v1142 = vadd.f32 %v1130, %v1138
    %v1143 = vadd.f32 %v1131, %v1138
    %v1144 = vadd.f32 %v1132, %v1138
    %v1145 = vadd.f32 %v1140, %v1141
    %v1146 = vrot.slane %v1145, 4
    %v1147 = vadd.f32 %v1145, %v1146
    %v1148 = vrot.slane %v1147, 2
    %v1149 = vadd.f32 %v1147, %v1148
    %v1150 = vrot.slane %v1149, 1
    %v1151 = vadd.f32 %v1149, %v1150
    %v1152 = vld [vmem:[%s8] sm:$0x3]
    %v1153 = vmul.f32 %v1151, %v1152
    %vm1154 = vcmask 1041408
    %v1155 = vsel %vm1154, %v1153, 0.0
    %1156 = vadd.xlane.f32.xlu0 %v1155
    %v1157 = vpop.xlane.xlu0 %1156
    %v1158 = vld [vmem:[%s9] sm:$0x3]
    %v1159 = vadd.f32 %v1157, %v1158
    %v1160 = vmax.f32 %v1159, 0.0
    %v1161 = vld [vmem:[%s10] sm:$0x3]
    %1163 = vset.pattern.permute.xlu0 0
    %1164 = vperm.xlu0 %1163, %v1160
    %v1165 = vpop.permute.xlu0 %1164
    %v1167 = vmul.f32 %v1165, %v1161
    %v1168 = vsel %vm1154, %v1167, 0.0
    %v1169 = vrot.slane %v1168, 4
    %v1170 = vadd.f32 %v1168, %v1169
    %v1171 = vrot.slane %v1170, 2
    %v1172 = vadd.f32 %v1170, %v1171
    %v1173 = vrot.slane %v1172, 1
    %v1174 = vadd.f32 %v1172, %v1173
    %v1175 = vld [vmem:[%s11] sm:$0x1]
    %v1176 = vadd.f32 %v1174, %v1175
    %v1177 = vxor.u32 %v1176, 2147483648
    %v1178 = vmul.f32 %v1177, 1.442695
    %v1179 = vpow.pop %v1178
    %v1180 = vadd.f32 %v1179, 1.0
    %v1181 = vrcp.pop %v1180
    %v1182 = vmul.f32 1.0, %v1181
    %v1183 = vlaneseq
    %v1184 = vshrl.u32 %v1183, 7
    %v1185 = vsub.s32 0, %v1184
    %v1186 = vrot.slane %v1182, %v1185
    %v1187 = vmul.f32 %v1140, %v1186
    %v1188 = vmul.f32 %v1141, %v1186
    %v1189 = vld [vmem:[#allocation4] sm:$0xff]
    %v1190 = vld [vmem:[#allocation4 + $0x8] sm:$0xff]
    %v1191 = vadd.f32 %v1187, %v1189
    %v1192 = vadd.f32 %v1188, %v1190
    %v1193 = vmax.f32 %v1191, 0.0
    %v1194 = vmax.f32 %v1192, 0.0
    %v1195 = vpack.c.bf16 %v1194, %v1193
    %v1197 = vunpack.c.l.b16 %v1195
    %v1198 = vunpack.c.h.b16 %v1195
    %v1199 = vpack.c.b16 %v1197, %v1197
    %v1200 = vpack.c.b16 %v1198, %v1198
    %1203 = vst [vmem:[#allocation11] sm:$0xf] %v1199
    %1204 = vst [vmem:[#allocation11 + $0x4] sm:$0xf] %v1200
    %vm1208 = vcmask 1045504
    %v1209 = vrot.slane %v1142, 2
    %v1210 = vrot.slane %v1143, 2
    %v1211 = vsel %vm1208, %v1209, %v1210
    %v1212 = vrot.slane %v1144, 2
    %v1213 = vsel %vm1208, %v1210, %v1212
    %v1216 = vadd.f32 %v1211, %v1213
    %v1217 = vrot.slane %v1216, 4
    %v1218 = vadd.f32 %v1216, %v1217
    %v1219 = vrot.slane %v1218, 2
    %v1220 = vadd.f32 %v1218, %v1219
    %v1221 = vrot.slane %v1220, 1
    %v1222 = vadd.f32 %v1220, %v1221
    %v1223 = vld [vmem:[%s8] sm:$0x3]
    %v1224 = vmul.f32 %v1222, %v1223
    %v1225 = vsel %vm1154, %v1224, 0.0
    %1226 = vadd.xlane.f32.xlu0 %v1225
    %v1227 = vpop.xlane.xlu0 %1226
    %v1228 = vld [vmem:[%s9] sm:$0x3]
    %v1229 = vadd.f32 %v1227, %v1228
    %v1230 = vmax.f32 %v1229, 0.0
    %v1231 = vld [vmem:[%s10] sm:$0x3]
    %1233 = vset.pattern.permute.xlu0 0
    %1234 = vperm.xlu0 %1233, %v1230
    %v1235 = vpop.permute.xlu0 %1234
    %v1237 = vmul.f32 %v1235, %v1231
    %v1238 = vsel %vm1154, %v1237, 0.0
    %v1239 = vrot.slane %v1238, 4
    %v1240 = vadd.f32 %v1238, %v1239
    %v1241 = vrot.slane %v1240, 2
    %v1242 = vadd.f32 %v1240, %v1241
    %v1243 = vrot.slane %v1242, 1
    %v1244 = vadd.f32 %v1242, %v1243
    %v1245 = vld [vmem:[%s11] sm:$0x1]
    %v1246 = vadd.f32 %v1244, %v1245
    %v1247 = vxor.u32 %v1246, 2147483648
    %v1248 = vmul.f32 %v1247, 1.442695
    %v1249 = vpow.pop %v1248
    %v1250 = vadd.f32 %v1249, 1.0
    %v1251 = vrcp.pop %v1250
    %v1252 = vmul.f32 1.0, %v1251
    %v1253 = vlaneseq
    %v1254 = vshrl.u32 %v1253, 7
    %v1255 = vsub.s32 0, %v1254
    %v1256 = vrot.slane %v1252, %v1255
    %v1257 = vmul.f32 %v1142, %v1256
    %v1258 = vmul.f32 %v1143, %v1256
    %v1259 = vmul.f32 %v1144, %v1256
    %v1260 = vld [vmem:[#allocation4 + $0x12] sm:$0xff]
    %v1261 = vld [vmem:[#allocation4 + $0x1a] sm:$0xff]
    %v1264 = vrot.slane %v1260, 6
    %v1265 = vrot.slane %v1261, 6
    %v1266 = vsel %vm1154, %v1264, %v1265
    %v1270 = vadd.f32 %v1257, %v1264
    %v1271 = vadd.f32 %v1258, %v1266
    %v1272 = vadd.f32 %v1259, %v1265
    %v1273 = vmax.f32 %v1270, 0.0
    %v1274 = vmax.f32 %v1271, 0.0
    %v1275 = vmax.f32 %v1272, 0.0
    %v1276 = vpack.c.bf16 %v1274, %v1273
    %v1277 = vpack.c.bf16 %v1275, %v1275
    %v1280 = vunpack.c.l.b16 %v1276
    %v1281 = vunpack.c.h.b16 %v1276
    %v1282 = vunpack.c.l.b16 %v1277
    %v1283 = vpack.c.b16 %v1280, %v1280
    %v1284 = vpack.c.b16 %v1281, %v1281
    %v1285 = vpack.c.b16 %v1282, %v1282
    %vm1286 = vcmask 1042432
    %vm1287 = vcmask 1046532
    %vm1288 = vmor %vm1286, %vm1287
    %v1289 = vrot.slane %v1283, 5
    %v1290 = vrot.slane %v1289, 4
    %v1291 = vrot.slane %v1284, 5
    %v1292 = vsel %vm1288, %v1290, %v1291
    %v1293 = vrot.slane %v1291, 4
    %v1294 = vrot.slane %v1285, 5
    %v1295 = vsel %vm1288, %v1293, %v1294
    %s1298 = scalar_lea.vmem [#allocation11], 8
    %1299 = vst [vmem:[%s1298] sm:$0xf] %v1292
    %1300 = vst [vmem:[%s1298 + $0x4] sm:$0xf] %v1295
    // Predicated region
    $region62: #{tpu_custom_call.1} parent=1 // pred_check
      _
    $region63: #{tpu_custom_call.1} parent=1 // pred_check_branch
      %1302 = sbr.rel (0) target = $region65
    $region64: #{tpu_custom_call.1} parent=1 // pred_region
      %s1304 = ssub.s32 256, 256
      %1305 = vsyncadd [#allocation7], %s1304
      %s1306 = sshll.u32 [#allocation11], 4
      %s1307 = int_to_ptr.vmem [resolvable:$true] %s1306
      %1312 = dma.vmem_to_hbm [thread:$0]  %s1307, 256, %s12, [#allocation7], 64, 64, 4
    $region65: #{tpu_custom_call.1} parent=1 // pred_fallthru
      _
    // Predicated region
    $region66: #{tpu_custom_call.1} parent=1 // pred_check
      _
    $region67: #{tpu_custom_call.1} parent=1 // pred_check_branch
      %1314 = sbr.rel (0) target = $region69
    $region68: #{tpu_custom_call.1} parent=1 // pred_region
      %1315 = dma.done [#allocation7], 256
    $region69: #{tpu_custom_call.1} parent=1 // pred_fallthru
      _
    %1316 = vsyncpa [#allocation6], 1
    %1317 = vsyncpa [#allocation9], 1
    %1318 = vsyncpa [#allocation7], 1

</llo_original>
